<compile_context>
chip_gen: v6e
topology: v6e:2x2x1
jax: 0.10.0
libtpu: 0.0.40
codegen_flags: <defaults>
</compile_context>

<pallas_src>
import functools

import jax
import jax.numpy as jnp
from jax.experimental import pallas as pl
from jax.experimental.pallas import tpu as pltpu

EPS = 1e-5
TK = 208  # Cin chunk: 624 = 3 * 208, multiple of 8


def _fused_bn_relu_conv_bn_relu_kernel(x_ref, w_ref, p1_ref, p2_ref, o_ref, acc_ref):
    # x_ref : (TK, P)        f32   -- input chunk, channels on sublanes, pixels on lanes
    # w_ref : (1, COUT, TK)  bf16  -- pre-sliced 1x1 conv weight chunk
    # p1_ref: (TK, 2)        f32   -- [gamma1 | beta1] for this channel chunk
    # p2_ref: (COUT, 2)      f32   -- [gamma2 | beta2]
    # o_ref : (COUT, P)      f32
    # acc_ref: (COUT, P)     f32   -- conv accumulator (VMEM scratch)
    k = pl.program_id(0)

    x = x_ref[...]
    inv_p = 1.0 / x.shape[1]

    # ----- BatchNorm2d(624): per-channel batch stats (exact under Cin chunking) -----
    mean1 = jnp.sum(x, axis=1, keepdims=True) * inv_p
    ex2_1 = jnp.sum(x * x, axis=1, keepdims=True) * inv_p
    var1 = jnp.maximum(ex2_1 - mean1 * mean1, 0.0)          # guard tiny cancellation
    scale1 = p1_ref[:, 0:1] * jax.lax.rsqrt(var1 + EPS)     # (TK, 1)
    bias1 = p1_ref[:, 1:2] - mean1 * scale1                 # (TK, 1)

    # ----- BN1 affine + ReLU + bf16 cast fused (single expression, no f32 h store) -----
    h = jnp.maximum(x * scale1 + bias1, 0.0).astype(jnp.bfloat16)   # (TK, P) bf16

    # ----- Conv2d 1x1 partial product on the MXU, f32 accumulation -----
    partial = jnp.dot(w_ref[0], h, preferred_element_type=jnp.float32)  # (COUT, P)

    @pl.when(k == 0)
    def _():
        acc_ref[...] = partial

    @pl.when(k > 0)
    def _():
        acc_ref[...] = acc_ref[...] + partial

    # ----- Final step: BatchNorm2d(192) (centered, two-pass) + ReLU + writeback -----
    @pl.when(k == pl.num_programs(0) - 1)
    def _():
        y = acc_ref[...]
        mean2 = jnp.sum(y, axis=1, keepdims=True) * inv_p
        yc = y - mean2
        var2 = jnp.sum(yc * yc, axis=1, keepdims=True) * inv_p
        scale2 = p2_ref[:, 0:1] * jax.lax.rsqrt(var2 + EPS)
        o_ref[...] = jnp.maximum(yc * scale2 + p2_ref[:, 1:2], 0.0)


def prepare_params(w_oi, gamma1, beta1, gamma2, beta2, *, tk=TK):
    """One-time host-side prep (hoisted out of the per-call path)."""
    cout, cin = w_oi.shape
    assert cin % tk == 0
    kchunks = cin // tk
    # (COUT, CIN) -> (KCHUNKS, COUT, TK) bf16: each grid step gets a full-trailing-dims block.
    w_prep = (jnp.asarray(w_oi, jnp.float32)
              .reshape(cout, kchunks, tk)
              .transpose(1, 0, 2)
              .astype(jnp.bfloat16))
    p1 = jnp.stack([gamma1, beta1], axis=1).astype(jnp.float32)   # (CIN, 2)
    p2 = jnp.stack([gamma2, beta2], axis=1).astype(jnp.float32)   # (COUT, 2)
    return w_prep, p1, p2


@functools.partial(jax.jit, static_argnames=("tk",))
def fused_module(x_nchw, w_prep, p1, p2, *, tk=TK):
    """x_nchw: (N, Cin, H, W) f32. w_prep/p1/p2 from prepare_params."""
    n, cin, h, w = x_nchw.shape
    kchunks, cout, _ = w_prep.shape
    p = n * h * w
    assert cin % tk == 0 and kchunks == cin // tk

    # Glue: native layout -- for N=1 this is a pure reshape (no transpose, no copy).
    if n == 1:
        x2d = x_nchw.reshape(cin, p)
    else:
        x2d = jnp.moveaxis(x_nchw, 1, 0).reshape(cin, p)

    out2d = pl.pallas_call(
        _fused_bn_relu_conv_bn_relu_kernel,
        out_shape=jax.ShapeDtypeStruct((cout, p), jnp.float32),
        grid_spec=pltpu.PrefetchScalarGridSpec(
            num_scalar_prefetch=0,
            grid=(cin // tk,),
            in_specs=[
                pl.BlockSpec((tk, p), lambda k: (k, 0)),        # x chunk
                pl.BlockSpec((1, cout, tk), lambda k: (k, 0, 0)),  # weight chunk
                pl.BlockSpec((tk, 2), lambda k: (k, 0)),        # gamma1/beta1 chunk
                pl.BlockSpec((cout, 2), lambda k: (0, 0)),      # gamma2/beta2
            ],
            out_specs=pl.BlockSpec((cout, p), lambda k: (0, 0)),
            scratch_shapes=[pltpu.VMEM((cout, p), jnp.float32)],
        ),
        compiler_params=pltpu.CompilerParams(
            dimension_semantics=("arbitrary",)),
    )(x2d, w_prep, p1, p2)

    # Glue: (Cout, P) -> NCHW -- again a pure reshape for N=1.
    if n == 1:
        return out2d.reshape(n, cout, h, w)
    return jnp.moveaxis(out2d.reshape(cout, n, h, w), 0, 1)


def _reference(x_nchw, w_oi, gamma1, beta1, gamma2, beta2, conv_dtype=jnp.float32):
    """Pure-JAX reference with identical (training-mode BN) semantics."""
    def bn(x, g, b):
        mean = jnp.mean(x, axis=(0, 2, 3), keepdims=True)
        var = jnp.mean((x - mean) ** 2, axis=(0, 2, 3), keepdims=True)
        return (x - mean) * jax.lax.rsqrt(var + EPS) * g.reshape(1, -1, 1, 1) \
            + b.reshape(1, -1, 1, 1)
    h = jnp.maximum(bn(x_nchw, gamma1, beta1), 0.0)
    y = jnp.einsum('nchw,oc->nohw', h.astype(conv_dtype), w_oi.astype(conv_dtype),
                   preferred_element_type=jnp.float32)
    return jnp.maximum(bn(y, gamma2, beta2), 0.0)


if __name__ == "__main__":
    key = jax.random.PRNGKey(0)
    k_x, k_w, k_g1, k_b1, k_g2, k_b2 = jax.random.split(key, 6)

    N, CIN, H, W = 1, 624, 28, 28   # shapes implied by the PyTorch module
    COUT = 192

    x = jax.random.normal(k_x, (N, CIN, H, W), dtype=jnp.float32)
    w = jax.random.normal(k_w, (COUT, CIN), dtype=jnp.float32) * 0.02  # 1x1 conv weight
    gamma1 = 1.0 + 0.1 * jax.random.normal(k_g1, (CIN,), dtype=jnp.float32)
    beta1 = 0.1 * jax.random.normal(k_b1, (CIN,), dtype=jnp.float32)
    gamma2 = 1.0 + 0.1 * jax.random.normal(k_g2, (COUT,), dtype=jnp.float32)
    beta2 = 0.1 * jax.random.normal(k_b2, (COUT,), dtype=jnp.float32)

    # One-time parameter prep (weight layout + bf16 cast + gamma/beta packing), hoisted.
    w_prep, p1, p2 = prepare_params(w, gamma1, beta1, gamma2, beta2)

    out = jax.block_until_ready(fused_module(x, w_prep, p1, p2))
    assert out.shape == (N, COUT, H, W), out.shape

    # Tight check vs a reference using the same bf16-matmul precision as the kernel.
    ref_bf16 = jax.block_until_ready(
        _reference(x, w, gamma1, beta1, gamma2, beta2, conv_dtype=jnp.bfloat16))
    assert jnp.allclose(out, ref_bf16, atol=2e-3, rtol=2e-3), \
        float(jnp.max(jnp.abs(out - ref_bf16)))

    # Sanity check vs the full-f32 (PyTorch train-mode forward) reference;
    # tolerance relaxed only for the bf16 MXU matmul rounding.
    ref_f32 = jax.block_until_ready(_reference(x, w, gamma1, beta1, gamma2, beta2))
    assert jnp.allclose(out, ref_f32, atol=5e-2, rtol=5e-2), \
        float(jnp.max(jnp.abs(out - ref_f32)))

    print("KERNEL_OK")
</pallas_src>

<mosaic_0001>
module attributes {stable_mosaic.version = 11 : i64} {
  func.func @_fused_bn_relu_conv_bn_relu_kernel(%arg0: i32, %arg1: memref<208x784xf32, #tpu.memory_space<vmem>>, %arg2: memref<1x192x208xbf16, #tpu.memory_space<vmem>>, %arg3: memref<208x2xf32, #tpu.memory_space<vmem>>, %arg4: memref<192x2xf32, #tpu.memory_space<vmem>>, %arg5: memref<192x784xf32, #tpu.memory_space<vmem>>, %arg6: memref<192x784xf32, #tpu.memory_space<vmem>>) attributes {dimension_semantics = [#tpu.dimension_semantics<arbitrary>], iteration_bounds = array<i64: 3>, scalar_prefetch = 0 : i64, scratch_operands = 1 : i64, tpu.core_type = #tpu.core_type<tc>, window_params = [{transform_indices = @transform_0, window_bounds = array<i64: 208, 784>}, {transform_indices = @transform_1, window_bounds = array<i64: 1, 192, 208>}, {transform_indices = @transform_2, window_bounds = array<i64: 208, 2>}, {pipeline_mode = #tpu.pipeline_mode<synchronous>, transform_indices = @transform_3, window_bounds = array<i64: 192, 2>}, {pipeline_mode = #tpu.pipeline_mode<synchronous>, transform_indices = @transform_4, window_bounds = array<i64: 192, 784>}]} {
    %c0 = arith.constant 0 : index
    %c0_0 = arith.constant 0 : index
    %0 = vector.load %arg1[%c0, %c0_0] : memref<208x784xf32, #tpu.memory_space<vmem>>, vector<208x784xf32>
    %cst = arith.constant dense<0.000000e+00> : vector<208xf32>
    %1 = vector.multi_reduction <add>, %0, %cst [1] : vector<208x784xf32> to vector<208xf32>
    %2 = vector.shape_cast %1 : vector<208xf32> to vector<208x1xf32>
    %cst_1 = arith.constant 0.00127551018 : f32
    %3 = vector.broadcast %cst_1 : f32 to vector<208x1xf32>
    %4 = arith.mulf %2, %3 : vector<208x1xf32>
    %5 = arith.mulf %0, %0 : vector<208x784xf32>
    %cst_2 = arith.constant dense<0.000000e+00> : vector<208xf32>
    %6 = vector.multi_reduction <add>, %5, %cst_2 [1] : vector<208x784xf32> to vector<208xf32>
    %7 = vector.shape_cast %6 : vector<208xf32> to vector<208x1xf32>
    %cst_3 = arith.constant 0.00127551018 : f32
    %8 = vector.broadcast %cst_3 : f32 to vector<208x1xf32>
    %9 = arith.mulf %7, %8 : vector<208x1xf32>
    %10 = arith.mulf %4, %4 : vector<208x1xf32>
    %11 = arith.subf %9, %10 : vector<208x1xf32>
    %cst_4 = arith.constant 0.000000e+00 : f32
    %12 = vector.broadcast %cst_4 : f32 to vector<208x1xf32>
    %13 = arith.maximumf %11, %12 : vector<208x1xf32>
    %c0_5 = arith.constant 0 : index
    %c0_6 = arith.constant 0 : index
    %14 = vector.load %arg3[%c0_5, %c0_6] : memref<208x2xf32, #tpu.memory_space<vmem>>, vector<208x1xf32>
    %cst_7 = arith.constant 9.99999974E-6 : f32
    %15 = vector.broadcast %cst_7 : f32 to vector<208x1xf32>
    %16 = arith.addf %13, %15 : vector<208x1xf32>
    %17 = math.rsqrt %16 : vector<208x1xf32>
    %18 = arith.mulf %14, %17 : vector<208x1xf32>
    %c0_8 = arith.constant 0 : index
    %c1 = arith.constant 1 : index
    %19 = vector.load %arg3[%c0_8, %c1] : memref<208x2xf32, #tpu.memory_space<vmem>>, vector<208x1xf32>
    %20 = arith.mulf %4, %18 : vector<208x1xf32>
    %21 = arith.subf %19, %20 : vector<208x1xf32>
    %22 = vector.broadcast %18 : vector<208x1xf32> to vector<208x784xf32>
    %23 = arith.mulf %0, %22 : vector<208x784xf32>
    %24 = vector.broadcast %21 : vector<208x1xf32> to vector<208x784xf32>
    %25 = arith.addf %23, %24 : vector<208x784xf32>
    %cst_9 = arith.constant 0.000000e+00 : f32
    %26 = vector.broadcast %cst_9 : f32 to vector<208x784xf32>
    %27 = arith.maximumf %25, %26 : vector<208x784xf32>
    %28 = arith.truncf %27 : vector<208x784xf32> to vector<208x784xbf16>
    %c0_10 = arith.constant 0 : index
    %c0_11 = arith.constant 0 : index
    %c0_12 = arith.constant 0 : index
    %29 = vector.load %arg2[%c0_10, %c0_11, %c0_12] : memref<1x192x208xbf16, #tpu.memory_space<vmem>>, vector<1x192x208xbf16>
    %30 = vector.shape_cast %29 : vector<1x192x208xbf16> to vector<192x208xbf16>
    %cst_13 = arith.constant dense<0.000000e+00> : vector<192x784xf32>
    %31 = tpu.matmul %30, %28, %cst_13 {dimension_numbers = #tpu.dot_dimension_numbers<[1], [0], [0], [1], [0, 0, 1, 1], [], []>} : vector<192x208xbf16>, vector<208x784xbf16>, vector<192x784xf32> -> vector<192x784xf32>
    %c0_i32 = arith.constant 0 : i32
    %32 = arith.cmpi eq, %arg0, %c0_i32 : i32
    %33 = arith.extui %32 : i1 to i32
    %c0_i32_14 = arith.constant 0 : i32
    %34 = arith.cmpi ne, %33, %c0_i32_14 : i32
    scf.if %34 {
      %c0_18 = arith.constant 0 : index
      %c0_19 = arith.constant 0 : index
      %41 = vector.load %arg6[%c0_18, %c0_19] : memref<192x784xf32, #tpu.memory_space<vmem>>, vector<192x784xf32>
      tpu.vector_store %arg6[%c0_18, %c0_19], %31 {strides = array<i32>} : memref<192x784xf32, #tpu.memory_space<vmem>>, vector<192x784xf32>,
    } else {
    }
    %c0_i32_15 = arith.constant 0 : i32
    %35 = arith.cmpi sgt, %arg0, %c0_i32_15 : i32
    %36 = arith.extui %35 : i1 to i32
    %c0_i32_16 = arith.constant 0 : i32
    %37 = arith.cmpi ne, %36, %c0_i32_16 : i32
    scf.if %37 {
      %c0_18 = arith.constant 0 : index
      %c0_19 = arith.constant 0 : index
      %41 = vector.load %arg6[%c0_18, %c0_19] : memref<192x784xf32, #tpu.memory_space<vmem>>, vector<192x784xf32>
      %42 = arith.addf %41, %31 : vector<192x784xf32>
      %c0_20 = arith.constant 0 : index
      %c0_21 = arith.constant 0 : index
      %43 = vector.load %arg6[%c0_20, %c0_21] : memref<192x784xf32, #tpu.memory_space<vmem>>, vector<192x784xf32>
      tpu.vector_store %arg6[%c0_20, %c0_21], %42 {strides = array<i32>} : memref<192x784xf32, #tpu.memory_space<vmem>>, vector<192x784xf32>,
    } else {
    }
    %c2_i32 = arith.constant 2 : i32
    %38 = arith.cmpi eq, %arg0, %c2_i32 : i32
    %39 = arith.extui %38 : i1 to i32
    %c0_i32_17 = arith.constant 0 : i32
    %40 = arith.cmpi ne, %39, %c0_i32_17 : i32
    scf.if %40 {
      %c0_18 = arith.constant 0 : index
      %c0_19 = arith.constant 0 : index
      %41 = vector.load %arg6[%c0_18, %c0_19] : memref<192x784xf32, #tpu.memory_space<vmem>>, vector<192x784xf32>
      %cst_20 = arith.constant dense<0.000000e+00> : vector<192xf32>
      %42 = vector.multi_reduction <add>, %41, %cst_20 [1] : vector<192x784xf32> to vector<192xf32>
      %43 = vector.shape_cast %42 : vector<192xf32> to vector<192x1xf32>
      %cst_21 = arith.constant 0.00127551018 : f32
      %44 = vector.broadcast %cst_21 : f32 to vector<192x1xf32>
      %45 = arith.mulf %43, %44 : vector<192x1xf32>
      %46 = vector.broadcast %45 : vector<192x1xf32> to vector<192x784xf32>
      %47 = arith.subf %41, %46 : vector<192x784xf32>
      %48 = arith.mulf %47, %47 : vector<192x784xf32>
      %cst_22 = arith.constant dense<0.000000e+00> : vector<192xf32>
      %49 = vector.multi_reduction <add>, %48, %cst_22 [1] : vector<192x784xf32> to vector<192xf32>
      %50 = vector.shape_cast %49 : vector<192xf32> to vector<192x1xf32>
      %cst_23 = arith.constant 0.00127551018 : f32
      %51 = vector.broadcast %cst_23 : f32 to vector<192x1xf32>
      %52 = arith.mulf %50, %51 : vector<192x1xf32>
      %c0_24 = arith.constant 0 : index
      %c0_25 = arith.constant 0 : index
      %53 = vector.load %arg4[%c0_24, %c0_25] : memref<192x2xf32, #tpu.memory_space<vmem>>, vector<192x1xf32>
      %cst_26 = arith.constant 9.99999974E-6 : f32
      %54 = vector.broadcast %cst_26 : f32 to vector<192x1xf32>
      %55 = arith.addf %52, %54 : vector<192x1xf32>
      %56 = math.rsqrt %55 : vector<192x1xf32>
      %57 = arith.mulf %53, %56 : vector<192x1xf32>
      %58 = vector.broadcast %57 : vector<192x1xf32> to vector<192x784xf32>
      %59 = arith.mulf %47, %58 : vector<192x784xf32>
      %c0_27 = arith.constant 0 : index
      %c1_28 = arith.constant 1 : index
      %60 = vector.load %arg4[%c0_27, %c1_28] : memref<192x2xf32, #tpu.memory_space<vmem>>, vector<192x1xf32>
      %61 = vector.broadcast %60 : vector<192x1xf32> to vector<192x784xf32>
      %62 = arith.addf %59, %61 : vector<192x784xf32>
      %cst_29 = arith.constant 0.000000e+00 : f32
      %63 = vector.broadcast %cst_29 : f32 to vector<192x784xf32>
      %64 = arith.maximumf %62, %63 : vector<192x784xf32>
      %c0_30 = arith.constant 0 : index
      %c0_31 = arith.constant 0 : index
      %65 = vector.load %arg5[%c0_30, %c0_31] : memref<192x784xf32, #tpu.memory_space<vmem>>, vector<192x784xf32>
      tpu.vector_store %arg5[%c0_30, %c0_31], %64 {strides = array<i32>} : memref<192x784xf32, #tpu.memory_space<vmem>>, vector<192x784xf32>,
    } else {
    }
    return
  }
  func.func @transform_0(%arg0: i32) -> (i32, i32) {
    %c0_i32 = arith.constant 0 : i32
    %c0_i32_0 = arith.constant 0 : i32
    return %arg0, %c0_i32 : i32, i32
  }
  func.func @transform_1(%arg0: i32) -> (i32, i32, i32) {
    %c0_i32 = arith.constant 0 : i32
    %c0_i32_0 = arith.constant 0 : i32
    %c0_i32_1 = arith.constant 0 : i32
    return %arg0, %c0_i32, %c0_i32_0 : i32, i32, i32
  }
  func.func @transform_2(%arg0: i32) -> (i32, i32) {
    %c0_i32 = arith.constant 0 : i32
    %c0_i32_0 = arith.constant 0 : i32
    return %arg0, %c0_i32 : i32, i32
  }
  func.func @transform_3(%arg0: i32) -> (i32, i32) {
    %c0_i32 = arith.constant 0 : i32
    %c0_i32_0 = arith.constant 0 : i32
    %c0_i32_1 = arith.constant 0 : i32
    return %c0_i32, %c0_i32_0 : i32, i32
  }
  func.func @transform_4(%arg0: i32) -> (i32, i32) {
    %c0_i32 = arith.constant 0 : i32
    %c0_i32_0 = arith.constant 0 : i32
    %c0_i32_1 = arith.constant 0 : i32
    return %c0_i32, %c0_i32_0 : i32, i32
  }
}

</mosaic_0001>

<llo_original>
// kernel: fused_module.1
$region0: #{fused_module.1}
  #allocation0 [shape = 'u32[]', space=smem, size = 0x4, offset = 0x4, fixed_abs, tag = 'smem constant byte address 0x4 - core index']
  #allocation1 [shape = 'u32[144,128]{1,0:T(1,128)}', space=vmem, size = 0x12000, scoped, tag = 'internal scratch']
  #allocation2 [shape = 'f32[192,784]{1,0:T(8,128)}', space=vmem, size = 0xa8000, scoped, tag = 'scratch operand']
  %s0 = inlined_call_operand.vmem [shape: f32[624,784], index: 0, kind: input, shape index: {}]
  %s1 = inlined_call_operand.vmem [shape: bf16[3,192,208], index: 1, kind: input, shape index: {}]
  %s2 = inlined_call_operand.vmem [shape: f32[624,2], index: 2, kind: input, shape index: {}]
  %s3 = inlined_call_operand.vmem [shape: f32[192,2], index: 3, kind: input, shape index: {}]
  %s4 = inlined_call_operand.vmem [shape: f32[192,784], index: 4, kind: output, shape index: {}]
  %s5 = sld [smem:[#allocation0]]
  $region61: #{fused_module.1} parent=0
    _
  %s7 = ssub.s32 1, %s5
  %s8 = scalar_select 0, %s7, %s5
  loop: start=0, step=1, limit=5
  $region2: #{fused_module.1} parent=0 // loop_pre_header
    _
  $region3: #{fused_module.1} parent=0 // loop_header
    %s10 = sphi 0, %s14
    %p11 = scmp.ge.s32.totalorder %s10, 5
    %s20 = sphi 0, %s22
    %s23 = sphi 0, %s20
    %s24 = sphi 0, %s23
    %s40 = sphi 0, %s24
    %s46 = sphi 0, %s48
    %s49 = sphi 0, %s46
    %s50 = sphi 0, %s49
    %s66 = sphi 0, %s50
    %s72 = sphi 0, %s74
    %s75 = sphi 0, %s72
    %s76 = sphi 0, %s75
    %s92 = sphi 0, %s76
    %s96 = sphi 0, %s96
    %s98 = sphi 0, %s96
    %s99 = sphi 0, %s98
    %s113 = sphi 0, %s99
    %s117 = sphi 0, %s117
    %s119 = sphi 0, %s117
    %s120 = sphi 0, %s119
    %s134 = sphi 0, %s120
  $region4: #{fused_module.1} parent=0 // loop_header_branch
    %13 = sbr.rel (%p11) target = $region8
  $region5: #{fused_module.1} parent=0 // loop_body
    %s15 = ssub.s32 %s10, 1
    %s16 = ssub.s32 %s10, 2
    %s17 = sadd.s32 %s10, 1
    %s18 = ssub.s32 %s10, %s17
    %p19 = scmp.eq.s32.totalorder %s18, 0
    %s21 = sadd.s32 %s20, 1
    %s22 = scalar_select %p19, %s20, %s21
    %p25 = pneg %p19
    %p26 = scmp.eq.s32.totalorder %s10, 2
    %p27 = por %p25, %p26
    %p28 = scmp.ne.s32.totalorder %s20, %s23
    %p29 = scmp.eq.s32.totalorder %s10, 0
    %p30 = por %p28, %p29
    %p31 = scmp.ne.s32.totalorder %s20, %s23
    %p32 = scmp.eq.s32.totalorder %s15, 2
    %p33 = por %p31, %p32
    %p34 = scmp.ne.s32.totalorder %s23, %s24
    %p35 = scmp.eq.s32.totalorder %s15, 0
    %p36 = por %p34, %p35
    %p37 = scmp.ne.s32.totalorder %s23, %s24
    %p38 = scmp.eq.s32.totalorder %s16, 2
    %p39 = por %p37, %p38
    %p41 = scmp.ne.s32.totalorder %s24, %s40
    %p42 = scmp.eq.s32.totalorder %s16, 0
    %p43 = por %p41, %p42
    %s44 = ssub.s32 %s10, %s17
    %p45 = scmp.eq.s32.totalorder %s44, 0
    %s47 = sadd.s32 %s46, 1
    %s48 = scalar_select %p45, %s46, %s47
    %p51 = pneg %p45
    %p52 = scmp.eq.s32.totalorder %s10, 2
    %p53 = por %p51, %p52
    %p54 = scmp.ne.s32.totalorder %s46, %s49
    %p55 = scmp.eq.s32.totalorder %s10, 0
    %p56 = por %p54, %p55
    %p57 = scmp.ne.s32.totalorder %s46, %s49
    %p58 = scmp.eq.s32.totalorder %s15, 2
    %p59 = por %p57, %p58
    %p60 = scmp.ne.s32.totalorder %s49, %s50
    %p61 = scmp.eq.s32.totalorder %s15, 0
    %p62 = por %p60, %p61
    %p63 = scmp.ne.s32.totalorder %s49, %s50
    %p64 = scmp.eq.s32.totalorder %s16, 2
    %p65 = por %p63, %p64
    %p67 = scmp.ne.s32.totalorder %s50, %s66
    %p68 = scmp.eq.s32.totalorder %s16, 0
    %p69 = por %p67, %p68
    %s70 = ssub.s32 %s10, %s17
    %p71 = scmp.eq.s32.totalorder %s70, 0
    %s73 = sadd.s32 %s72, 1
    %s74 = scalar_select %p71, %s72, %s73
    %p77 = pneg %p71
    %p78 = scmp.eq.s32.totalorder %s10, 2
    %p79 = por %p77, %p78
    %p80 = scmp.ne.s32.totalorder %s72, %s75
    %p81 = scmp.eq.s32.totalorder %s10, 0
    %p82 = por %p80, %p81
    %p83 = scmp.ne.s32.totalorder %s72, %s75
    %p84 = scmp.eq.s32.totalorder %s15, 2
    %p85 = por %p83, %p84
    %p86 = scmp.ne.s32.totalorder %s75, %s76
    %p87 = scmp.eq.s32.totalorder %s15, 0
    %p88 = por %p86, %p87
    %p89 = scmp.ne.s32.totalorder %s75, %s76
    %p90 = scmp.eq.s32.totalorder %s16, 2
    %p91 = por %p89, %p90
    %p93 = scmp.ne.s32.totalorder %s76, %s92
    %p94 = scmp.eq.s32.totalorder %s16, 0
    %p95 = por %p93, %p94
    %s97 = sadd.s32 %s96, 1
    %p100 = scmp.eq.s32.totalorder %s10, 2
    %p101 = scmp.ne.s32.totalorder %s96, %s98
    %p102 = scmp.eq.s32.totalorder %s10, 0
    %p103 = por %p101, %p102
    %p104 = scmp.ne.s32.totalorder %s96, %s98
    %p105 = scmp.eq.s32.totalorder %s15, 2
    %p106 = por %p104, %p105
    %p107 = scmp.ne.s32.totalorder %s98, %s99
    %p108 = scmp.eq.s32.totalorder %s15, 0
    %p109 = por %p107, %p108
    %p110 = scmp.ne.s32.totalorder %s98, %s99
    %p111 = scmp.eq.s32.totalorder %s16, 2
    %p112 = por %p110, %p111
    %p114 = scmp.ne.s32.totalorder %s99, %s113
    %p115 = scmp.eq.s32.totalorder %s16, 0
    %p116 = por %p114, %p115
    %s118 = sadd.s32 %s117, 1
    %p121 = scmp.eq.s32.totalorder %s10, 2
    %p122 = scmp.ne.s32.totalorder %s117, %s119
    %p123 = scmp.eq.s32.totalorder %s10, 0
    %p124 = por %p122, %p123
    %p125 = scmp.ne.s32.totalorder %s117, %s119
    %p126 = scmp.eq.s32.totalorder %s15, 2
    %p127 = por %p125, %p126
    %p128 = scmp.ne.s32.totalorder %s119, %s120
    %p129 = scmp.eq.s32.totalorder %s15, 0
    %p130 = por %p128, %p129
    %p131 = scmp.ne.s32.totalorder %s119, %s120
    %p132 = scmp.eq.s32.totalorder %s16, 2
    %p133 = por %p131, %p132
    %p135 = scmp.ne.s32.totalorder %s120, %s134
    %p136 = scmp.eq.s32.totalorder %s16, 0
    %p137 = por %p135, %p136
    %p138 = scmp.le.s32.totalorder 1, %s10
    %p139 = scmp.lt.s32.totalorder %s10, 4
    %p140 = pnand %p138, %p139
    %p141 = pneg %p140
    // Predicated region
    $region9: #{fused_module.1} parent=5 // pred_check
      _
    $region10: #{fused_module.1} parent=5 // pred_check_branch
      %143 = sbr.rel (%p140) target = $region12
    $region11: #{fused_module.1} parent=5 // pred_region
      %s144 = ssub.s32 %s10, 1
      // Predicated region
      $region13: #{fused_module.1} parent=11 // pred_check
        %p145 = pneg %p109
      $region14: #{fused_module.1} parent=11 // pred_check_branch
        %147 = sbr.rel (%p145) target = $region16
      $region15: #{fused_module.1} parent=11 // pred_region
        _
      $region16: #{fused_module.1} parent=11 // pred_fallthru
        _
    $region12: #{fused_module.1} parent=5 // pred_fallthru
      _
    %p148 = scmp.lt.s32.totalorder %s10, 3
    // Predicated region
    $region17: #{fused_module.1} parent=5 // pred_check
      %p149 = pneg %p148
    $region18: #{fused_module.1} parent=5 // pred_check_branch
      %151 = sbr.rel (%p149) target = $region20
    $region19: #{fused_module.1} parent=5 // pred_region
      // Predicated region
      $region21: #{fused_module.1} parent=19 // pred_check
        %p152 = pneg %p30
      $region22: #{fused_module.1} parent=19 // pred_check_branch
        %154 = sbr.rel (%p152) target = $region24
      $region23: #{fused_module.1} parent=19 // pred_region
        %s155 = smul.u32 26, %s10
        %p156 = scmp.lt.s32.totalorder %s155, 77
        %s157 = scalar_select %p156, %s155, 77
        %s158 = smul.addr %s157, 7
        %s159 = smul.addr %s158, 8
        %s160 = scalar_lea.vmem %s0, %s159
        %s161 = smul.u32 26, %s10
      $region24: #{fused_module.1} parent=19 // pred_fallthru
        _
      // Predicated region
      $region25: #{fused_module.1} parent=19 // pred_check
        %p162 = pneg %p56
      $region26: #{fused_module.1} parent=19 // pred_check_branch
        %164 = sbr.rel (%p162) target = $region28
      $region27: #{fused_module.1} parent=19 // pred_region
        %p165 = scmp.lt.s32.totalorder %s10, 2
        %s166 = scalar_select %p165, %s10, 2
        %s167 = smul.addr %s166, 48
        %s168 = smul.addr %s167, 4
        %s169 = scalar_lea.vmem %s1, %s168
      $region28: #{fused_module.1} parent=19 // pred_fallthru
        _
      // Predicated region
      $region29: #{fused_module.1} parent=19 // pred_check
        %p170 = pneg %p82
      $region30: #{fused_module.1} parent=19 // pred_check_branch
        %172 = sbr.rel (%p170) target = $region32
      $region31: #{fused_module.1} parent=19 // pred_region
        %s173 = smul.u32 26, %s10
        %p174 = scmp.lt.s32.totalorder %s173, 77
        %s175 = scalar_select %p174, %s173, 77
        %s176 = smul.addr %s175, 8
        %s177 = scalar_lea.vmem %s2, %s176
        %s178 = smul.u32 26, %s10
      $region32: #{fused_module.1} parent=19 // pred_fallthru
        _
    $region20: #{fused_module.1} parent=5 // pred_fallthru
      _
    %p179 = scmp.le.s32.totalorder 1, %s10
    %p180 = scmp.lt.s32.totalorder %s10, 4
    %p181 = pnand %p179, %p180
    %p182 = pneg %p181
    // Predicated region
    $region33: #{fused_module.1} parent=5 // pred_check
      _
    $region34: #{fused_module.1} parent=5 // pred_check_branch
      %184 = sbr.rel (%p181) target = $region36
    $region35: #{fused_module.1} parent=5 // pred_region
      %s185 = ssub.s32 %s10, 1
      %s186 = smul.u32 26, %s15
      %p187 = scmp.lt.s32.totalorder %s186, 77
      %s188 = scalar_select %p187, %s186, 77
      %s189 = smul.addr %s188, 7
      %s190 = smul.addr %s189, 8
      %s191 = scalar_lea.vmem %s0, %s190
      %p192 = pneg %p36
      %p193 = pneg %p33
      %p194 = scmp.lt.s32.totalorder %s15, 2
      %s195 = scalar_select %p194, %s15, 2
      %s196 = smul.addr %s195, 48
      %s197 = smul.addr %s196, 4
      %s198 = scalar_lea.vmem %s1, %s197
      %p199 = pneg %p62
      %p200 = pneg %p59
      %s201 = smul.u32 26, %s15
      %p202 = scmp.lt.s32.totalorder %s201, 77
      %s203 = scalar_select %p202, %s201, 77
      %s204 = smul.addr %s203, 8
      %s205 = scalar_lea.vmem %s2, %s204
      %p206 = pneg %p88
      %p207 = pneg %p85
      %p208 = pneg %p109
      %p209 = pneg %p106
      %p210 = pneg %p130
      %p211 = pneg %p127
      %s212 = smul.u32 26, %s15
      %p213 = scmp.lt.s32.totalorder %s212, 77
      %s214 = scalar_select %p213, %s212, 77
      %s215 = smul.addr %s214, 7
      %s216 = smul.addr %s215, 8
      %s217 = scalar_lea.vmem %s0, %s216
      %s218 = smul.u32 26, %s15
      %p219 = scmp.lt.s32.totalorder %s15, 2
      %s220 = scalar_select %p219, %s15, 2
      %s221 = smul.addr %s220, 48
      %s222 = smul.addr %s221, 4
      %s223 = scalar_lea.vmem %s1, %s222
      %s224 = smul.u32 26, %s15
      %p225 = scmp.lt.s32.totalorder %s224, 77
      %s226 = scalar_select %p225, %s224, 77
      %s227 = smul.addr %s226, 8
      %s228 = scalar_lea.vmem %s2, %s227
      %s229 = smul.u32 26, %s15
      %v231 = vld [vmem:[%s217] sm:$0xff]
      %v232 = vld [vmem:[%s217 + $0x8] sm:$0xff]
      %v233 = vld [vmem:[%s217 + $0x10] sm:$0xff]
      %v234 = vld [vmem:[%s217 + $0x18] sm:$0xff]
      %v235 = vld [vmem:[%s217 + $0x20] sm:$0xff]
      %v236 = vld [vmem:[%s217 + $0x28] sm:$0xff]
      %v237 = vld [vmem:[%s217 + $0x30] sm:$0xff]
      %v238 = vld [vmem:[%s217 + $0x38] sm:$0xff]
      %v239 = vld [vmem:[%s217 + $0x40] sm:$0xff]
      %v240 = vld [vmem:[%s217 + $0x48] sm:$0xff]
      %v241 = vld [vmem:[%s217 + $0x50] sm:$0xff]
      %v242 = vld [vmem:[%s217 + $0x58] sm:$0xff]
      %v243 = vld [vmem:[%s217 + $0x60] sm:$0xff]
      %v244 = vld [vmem:[%s217 + $0x68] sm:$0xff]
      %v245 = vld [vmem:[%s217 + $0x70] sm:$0xff]
      %v246 = vld [vmem:[%s217 + $0x78] sm:$0xff]
      %v247 = vld [vmem:[%s217 + $0x80] sm:$0xff]
      %v248 = vld [vmem:[%s217 + $0x88] sm:$0xff]
      %v249 = vld [vmem:[%s217 + $0x90] sm:$0xff]
      %v250 = vld [vmem:[%s217 + $0x98] sm:$0xff]
      %v251 = vld [vmem:[%s217 + $0xa0] sm:$0xff]
      %v252 = vld [vmem:[%s217 + $0xa8] sm:$0xff]
      %v253 = vld [vmem:[%s217 + $0xb0] sm:$0xff]
      %v254 = vld [vmem:[%s217 + $0xb8] sm:$0xff]
      %v255 = vld [vmem:[%s217 + $0xc0] sm:$0xff]
      %v256 = vld [vmem:[%s217 + $0xc8] sm:$0xff]
      %v257 = vld [vmem:[%s217 + $0xd0] sm:$0xff]
      %v258 = vld [vmem:[%s217 + $0xd8] sm:$0xff]
      %v259 = vld [vmem:[%s217 + $0xe0] sm:$0xff]
      %v260 = vld [vmem:[%s217 + $0xe8] sm:$0xff]
      %v261 = vld [vmem:[%s217 + $0xf0] sm:$0xff]
      %v262 = vld [vmem:[%s217 + $0xf8] sm:$0xff]
      %v263 = vld [vmem:[%s217 + $0x100] sm:$0xff]
      %v264 = vld [vmem:[%s217 + $0x108] sm:$0xff]
      %v265 = vld [vmem:[%s217 + $0x110] sm:$0xff]
      %v266 = vld [vmem:[%s217 + $0x118] sm:$0xff]
      %v267 = vld [vmem:[%s217 + $0x120] sm:$0xff]
      %v268 = vld [vmem:[%s217 + $0x128] sm:$0xff]
      %v269 = vld [vmem:[%s217 + $0x130] sm:$0xff]
      %v270 = vld [vmem:[%s217 + $0x138] sm:$0xff]
      %v271 = vld [vmem:[%s217 + $0x140] sm:$0xff]
      %v272 = vld [vmem:[%s217 + $0x148] sm:$0xff]
      %v273 = vld [vmem:[%s217 + $0x150] sm:$0xff]
      %v274 = vld [vmem:[%s217 + $0x158] sm:$0xff]
      %v275 = vld [vmem:[%s217 + $0x160] sm:$0xff]
      %v276 = vld [vmem:[%s217 + $0x168] sm:$0xff]
      %v277 = vld [vmem:[%s217 + $0x170] sm:$0xff]
      %v278 = vld [vmem:[%s217 + $0x178] sm:$0xff]
      %v279 = vld [vmem:[%s217 + $0x180] sm:$0xff]
      %v280 = vld [vmem:[%s217 + $0x188] sm:$0xff]
      %v281 = vld [vmem:[%s217 + $0x190] sm:$0xff]
      %v282 = vld [vmem:[%s217 + $0x198] sm:$0xff]
      %v283 = vld [vmem:[%s217 + $0x1a0] sm:$0xff]
      %v284 = vld [vmem:[%s217 + $0x1a8] sm:$0xff]
      %v285 = vld [vmem:[%s217 + $0x1b0] sm:$0xff]
      %v286 = vld [vmem:[%s217 + $0x1b8] sm:$0xff]
      %v287 = vld [vmem:[%s217 + $0x1c0] sm:$0xff]
      %v288 = vld [vmem:[%s217 + $0x1c8] sm:$0xff]
      %v289 = vld [vmem:[%s217 + $0x1d0] sm:$0xff]
      %v290 = vld [vmem:[%s217 + $0x1d8] sm:$0xff]
      %v291 = vld [vmem:[%s217 + $0x1e0] sm:$0xff]
      %v292 = vld [vmem:[%s217 + $0x1e8] sm:$0xff]
      %v293 = vld [vmem:[%s217 + $0x1f0] sm:$0xff]
      %v294 = vld [vmem:[%s217 + $0x1f8] sm:$0xff]
      %v295 = vld [vmem:[%s217 + $0x200] sm:$0xff]
      %v296 = vld [vmem:[%s217 + $0x208] sm:$0xff]
      %v297 = vld [vmem:[%s217 + $0x210] sm:$0xff]
      %v298 = vld [vmem:[%s217 + $0x218] sm:$0xff]
      %v299 = vld [vmem:[%s217 + $0x220] sm:$0xff]
      %v300 = vld [vmem:[%s217 + $0x228] sm:$0xff]
      %v301 = vld [vmem:[%s217 + $0x230] sm:$0xff]
      %v302 = vld [vmem:[%s217 + $0x238] sm:$0xff]
      %v303 = vld [vmem:[%s217 + $0x240] sm:$0xff]
      %v304 = vld [vmem:[%s217 + $0x248] sm:$0xff]
      %v305 = vld [vmem:[%s217 + $0x250] sm:$0xff]
      %v306 = vld [vmem:[%s217 + $0x258] sm:$0xff]
      %v307 = vld [vmem:[%s217 + $0x260] sm:$0xff]
      %v308 = vld [vmem:[%s217 + $0x268] sm:$0xff]
      %v309 = vld [vmem:[%s217 + $0x270] sm:$0xff]
      %v310 = vld [vmem:[%s217 + $0x278] sm:$0xff]
      %v311 = vld [vmem:[%s217 + $0x280] sm:$0xff]
      %v312 = vld [vmem:[%s217 + $0x288] sm:$0xff]
      %v313 = vld [vmem:[%s217 + $0x290] sm:$0xff]
      %v314 = vld [vmem:[%s217 + $0x298] sm:$0xff]
      %v315 = vld [vmem:[%s217 + $0x2a0] sm:$0xff]
      %v316 = vld [vmem:[%s217 + $0x2a8] sm:$0xff]
      %v317 = vld [vmem:[%s217 + $0x2b0] sm:$0xff]
      %v318 = vld [vmem:[%s217 + $0x2b8] sm:$0xff]
      %v319 = vld [vmem:[%s217 + $0x2c0] sm:$0xff]
      %v320 = vld [vmem:[%s217 + $0x2c8] sm:$0xff]
      %v321 = vld [vmem:[%s217 + $0x2d0] sm:$0xff]
      %v322 = vld [vmem:[%s217 + $0x2d8] sm:$0xff]
      %v323 = vld [vmem:[%s217 + $0x2e0] sm:$0xff]
      %v324 = vld [vmem:[%s217 + $0x2e8] sm:$0xff]
      %v325 = vld [vmem:[%s217 + $0x2f0] sm:$0xff]
      %v326 = vld [vmem:[%s217 + $0x2f8] sm:$0xff]
      %v327 = vld [vmem:[%s217 + $0x300] sm:$0xff]
      %v328 = vld [vmem:[%s217 + $0x308] sm:$0xff]
      %v329 = vld [vmem:[%s217 + $0x310] sm:$0xff]
      %v330 = vld [vmem:[%s217 + $0x318] sm:$0xff]
      %v331 = vld [vmem:[%s217 + $0x320] sm:$0xff]
      %v332 = vld [vmem:[%s217 + $0x328] sm:$0xff]
      %v333 = vld [vmem:[%s217 + $0x330] sm:$0xff]
      %v334 = vld [vmem:[%s217 + $0x338] sm:$0xff]
      %v335 = vld [vmem:[%s217 + $0x340] sm:$0xff]
      %v336 = vld [vmem:[%s217 + $0x348] sm:$0xff]
      %v337 = vld [vmem:[%s217 + $0x350] sm:$0xff]
      %v338 = vld [vmem:[%s217 + $0x358] sm:$0xff]
      %v339 = vld [vmem:[%s217 + $0x360] sm:$0xff]
      %v340 = vld [vmem:[%s217 + $0x368] sm:$0xff]
      %v341 = vld [vmem:[%s217 + $0x370] sm:$0xff]
      %v342 = vld [vmem:[%s217 + $0x378] sm:$0xff]
      %v343 = vld [vmem:[%s217 + $0x380] sm:$0xff]
      %v344 = vld [vmem:[%s217 + $0x388] sm:$0xff]
      %v345 = vld [vmem:[%s217 + $0x390] sm:$0xff]
      %v346 = vld [vmem:[%s217 + $0x398] sm:$0xff]
      %v347 = vld [vmem:[%s217 + $0x3a0] sm:$0xff]
      %v348 = vld [vmem:[%s217 + $0x3a8] sm:$0xff]
      %v349 = vld [vmem:[%s217 + $0x3b0] sm:$0xff]
      %v350 = vld [vmem:[%s217 + $0x3b8] sm:$0xff]
      %v351 = vld [vmem:[%s217 + $0x3c0] sm:$0xff]
      %v352 = vld [vmem:[%s217 + $0x3c8] sm:$0xff]
      %v353 = vld [vmem:[%s217 + $0x3d0] sm:$0xff]
      %v354 = vld [vmem:[%s217 + $0x3d8] sm:$0xff]
      %v355 = vld [vmem:[%s217 + $0x3e0] sm:$0xff]
      %v356 = vld [vmem:[%s217 + $0x3e8] sm:$0xff]
      %v357 = vld [vmem:[%s217 + $0x3f0] sm:$0xff]
      %v358 = vld [vmem:[%s217 + $0x3f8] sm:$0xff]
      %v359 = vld [vmem:[%s217 + $0x400] sm:$0xff]
      %v360 = vld [vmem:[%s217 + $0x408] sm:$0xff]
      %v361 = vld [vmem:[%s217 + $0x410] sm:$0xff]
      %v362 = vld [vmem:[%s217 + $0x418] sm:$0xff]
      %v363 = vld [vmem:[%s217 + $0x420] sm:$0xff]
      %v364 = vld [vmem:[%s217 + $0x428] sm:$0xff]
      %v365 = vld [vmem:[%s217 + $0x430] sm:$0xff]
      %v366 = vld [vmem:[%s217 + $0x438] sm:$0xff]
      %v367 = vld [vmem:[%s217 + $0x440] sm:$0xff]
      %v368 = vld [vmem:[%s217 + $0x448] sm:$0xff]
      %v369 = vld [vmem:[%s217 + $0x450] sm:$0xff]
      %v370 = vld [vmem:[%s217 + $0x458] sm:$0xff]
      %v371 = vld [vmem:[%s217 + $0x460] sm:$0xff]
      %v372 = vld [vmem:[%s217 + $0x468] sm:$0xff]
      %v373 = vld [vmem:[%s217 + $0x470] sm:$0xff]
      %v374 = vld [vmem:[%s217 + $0x478] sm:$0xff]
      %v375 = vld [vmem:[%s217 + $0x480] sm:$0xff]
      %v376 = vld [vmem:[%s217 + $0x488] sm:$0xff]
      %v377 = vld [vmem:[%s217 + $0x490] sm:$0xff]
      %v378 = vld [vmem:[%s217 + $0x498] sm:$0xff]
      %v379 = vld [vmem:[%s217 + $0x4a0] sm:$0xff]
      %v380 = vld [vmem:[%s217 + $0x4a8] sm:$0xff]
      %v381 = vld [vmem:[%s217 + $0x4b0] sm:$0xff]
      %v382 = vld [vmem:[%s217 + $0x4b8] sm:$0xff]
      %v383 = vld [vmem:[%s217 + $0x4c0] sm:$0xff]
      %v384 = vld [vmem:[%s217 + $0x4c8] sm:$0xff]
      %v385 = vld [vmem:[%s217 + $0x4d0] sm:$0xff]
      %v386 = vld [vmem:[%s217 + $0x4d8] sm:$0xff]
      %v387 = vld [vmem:[%s217 + $0x4e0] sm:$0xff]
      %v388 = vld [vmem:[%s217 + $0x4e8] sm:$0xff]
      %v389 = vld [vmem:[%s217 + $0x4f0] sm:$0xff]
      %v390 = vld [vmem:[%s217 + $0x4f8] sm:$0xff]
      %v391 = vld [vmem:[%s217 + $0x500] sm:$0xff]
      %v392 = vld [vmem:[%s217 + $0x508] sm:$0xff]
      %v393 = vld [vmem:[%s217 + $0x510] sm:$0xff]
      %v394 = vld [vmem:[%s217 + $0x518] sm:$0xff]
      %v395 = vld [vmem:[%s217 + $0x520] sm:$0xff]
      %v396 = vld [vmem:[%s217 + $0x528] sm:$0xff]
      %v397 = vld [vmem:[%s217 + $0x530] sm:$0xff]
      %v398 = vld [vmem:[%s217 + $0x538] sm:$0xff]
      %v399 = vld [vmem:[%s217 + $0x540] sm:$0xff]
      %v400 = vld [vmem:[%s217 + $0x548] sm:$0xff]
      %v401 = vld [vmem:[%s217 + $0x550] sm:$0xff]
      %v402 = vld [vmem:[%s217 + $0x558] sm:$0xff]
      %v403 = vld [vmem:[%s217 + $0x560] sm:$0xff]
      %v404 = vld [vmem:[%s217 + $0x568] sm:$0xff]
      %v405 = vld [vmem:[%s217 + $0x570] sm:$0xff]
      %v406 = vld [vmem:[%s217 + $0x578] sm:$0xff]
      %v407 = vld [vmem:[%s217 + $0x580] sm:$0xff]
      %v408 = vld [vmem:[%s217 + $0x588] sm:$0xff]
      %v409 = vld [vmem:[%s217 + $0x590] sm:$0xff]
      %v410 = vld [vmem:[%s217 + $0x598] sm:$0xff]
      %v411 = vld [vmem:[%s217 + $0x5a0] sm:$0xff]
      %v412 = vld [vmem:[%s217 + $0x5a8] sm:$0xff]
      %v413 = vadd.f32 %v231, %v232
      %v414 = vadd.f32 %v413, %v233
      %v415 = vadd.f32 %v414, %v234
      %v416 = vadd.f32 %v415, %v235
      %v417 = vadd.f32 %v416, %v236
      %vm418 = vcmask 130048
      %v419 = vsel %vm418, %v237, 0.0
      %v420 = vadd.f32 %v417, %v419
      %421 = vadd.xlane.f32.xlu0 %v420
      %v422 = vpop.xlane.xlu0 %421
      %v423 = vadd.f32 %v238, %v239
      %v424 = vadd.f32 %v423, %v240
      %v425 = vadd.f32 %v424, %v241
      %v426 = vadd.f32 %v425, %v242
      %v427 = vadd.f32 %v426, %v243
      %v428 = vsel %vm418, %v244, 0.0
      %v429 = vadd.f32 %v427, %v428
      %430 = vadd.xlane.f32.xlu0 %v429
      %v431 = vpop.xlane.xlu0 %430
      %v432 = vadd.f32 %v245, %v246
      %v433 = vadd.f32 %v432, %v247
      %v434 = vadd.f32 %v433, %v248
      %v435 = vadd.f32 %v434, %v249
      %v436 = vadd.f32 %v435, %v250
      %v437 = vsel %vm418, %v251, 0.0
      %v438 = vadd.f32 %v436, %v437
      %439 = vadd.xlane.f32.xlu0 %v438
      %v440 = vpop.xlane.xlu0 %439
      %v441 = vadd.f32 %v252, %v253
      %v442 = vadd.f32 %v441, %v254
      %v443 = vadd.f32 %v442, %v255
      %v444 = vadd.f32 %v443, %v256
      %v445 = vadd.f32 %v444, %v257
      %v446 = vsel %vm418, %v258, 0.0
      %v447 = vadd.f32 %v445, %v446
      %448 = vadd.xlane.f32.xlu0 %v447
      %v449 = vpop.xlane.xlu0 %448
      %v450 = vadd.f32 %v259, %v260
      %v451 = vadd.f32 %v450, %v261
      %v452 = vadd.f32 %v451, %v262
      %v453 = vadd.f32 %v452, %v263
      %v454 = vadd.f32 %v453, %v264
      %v455 = vsel %vm418, %v265, 0.0
      %v456 = vadd.f32 %v454, %v455
      %457 = vadd.xlane.f32.xlu0 %v456
      %v458 = vpop.xlane.xlu0 %457
      %v459 = vadd.f32 %v266, %v267
      %v460 = vadd.f32 %v459, %v268
      %v461 = vadd.f32 %v460, %v269
      %v462 = vadd.f32 %v461, %v270
      %v463 = vadd.f32 %v462, %v271
      %v464 = vsel %vm418, %v272, 0.0
      %v465 = vadd.f32 %v463, %v464
      %466 = vadd.xlane.f32.xlu0 %v465
      %v467 = vpop.xlane.xlu0 %466
      %v468 = vadd.f32 %v273, %v274
      %v469 = vadd.f32 %v468, %v275
      %v470 = vadd.f32 %v469, %v276
      %v471 = vadd.f32 %v470, %v277
      %v472 = vadd.f32 %v471, %v278
      %v473 = vsel %vm418, %v279, 0.0
      %v474 = vadd.f32 %v472, %v473
      %475 = vadd.xlane.f32.xlu0 %v474
      %v476 = vpop.xlane.xlu0 %475
      %v477 = vadd.f32 %v280, %v281
      %v478 = vadd.f32 %v477, %v282
      %v479 = vadd.f32 %v478, %v283
      %v480 = vadd.f32 %v479, %v284
      %v481 = vadd.f32 %v480, %v285
      %v482 = vsel %vm418, %v286, 0.0
      %v483 = vadd.f32 %v481, %v482
      %484 = vadd.xlane.f32.xlu0 %v483
      %v485 = vpop.xlane.xlu0 %484
      %v486 = vadd.f32 %v287, %v288
      %v487 = vadd.f32 %v486, %v289
      %v488 = vadd.f32 %v487, %v290
      %v489 = vadd.f32 %v488, %v291
      %v490 = vadd.f32 %v489, %v292
      %v491 = vsel %vm418, %v293, 0.0
      %v492 = vadd.f32 %v490, %v491
      %493 = vadd.xlane.f32.xlu0 %v492
      %v494 = vpop.xlane.xlu0 %493
      %v495 = vadd.f32 %v294, %v295
      %v496 = vadd.f32 %v495, %v296
      %v497 = vadd.f32 %v496, %v297
      %v498 = vadd.f32 %v497, %v298
      %v499 = vadd.f32 %v498, %v299
      %v500 = vsel %vm418, %v300, 0.0
      %v501 = vadd.f32 %v499, %v500
      %502 = vadd.xlane.f32.xlu0 %v501
      %v503 = vpop.xlane.xlu0 %502
      %v504 = vadd.f32 %v301, %v302
      %v505 = vadd.f32 %v504, %v303
      %v506 = vadd.f32 %v505, %v304
      %v507 = vadd.f32 %v506, %v305
      %v508 = vadd.f32 %v507, %v306
      %v509 = vsel %vm418, %v307, 0.0
      %v510 = vadd.f32 %v508, %v509
      %511 = vadd.xlane.f32.xlu0 %v510
      %v512 = vpop.xlane.xlu0 %511
      %v513 = vadd.f32 %v308, %v309
      %v514 = vadd.f32 %v513, %v310
      %v515 = vadd.f32 %v514, %v311
      %v516 = vadd.f32 %v515, %v312
      %v517 = vadd.f32 %v516, %v313
      %v518 = vsel %vm418, %v314, 0.0
      %v519 = vadd.f32 %v517, %v518
      %520 = vadd.xlane.f32.xlu0 %v519
      %v521 = vpop.xlane.xlu0 %520
      %v522 = vadd.f32 %v315, %v316
      %v523 = vadd.f32 %v522, %v317
      %v524 = vadd.f32 %v523, %v318
      %v525 = vadd.f32 %v524, %v319
      %v526 = vadd.f32 %v525, %v320
      %v527 = vsel %vm418, %v321, 0.0
      %v528 = vadd.f32 %v526, %v527
      %529 = vadd.xlane.f32.xlu0 %v528
      %v530 = vpop.xlane.xlu0 %529
      %v531 = vadd.f32 %v322, %v323
      %v532 = vadd.f32 %v531, %v324
      %v533 = vadd.f32 %v532, %v325
      %v534 = vadd.f32 %v533, %v326
      %v535 = vadd.f32 %v534, %v327
      %v536 = vsel %vm418, %v328, 0.0
      %v537 = vadd.f32 %v535, %v536
      %538 = vadd.xlane.f32.xlu0 %v537
      %v539 = vpop.xlane.xlu0 %538
      %v540 = vadd.f32 %v329, %v330
      %v541 = vadd.f32 %v540, %v331
      %v542 = vadd.f32 %v541, %v332
      %v543 = vadd.f32 %v542, %v333
      %v544 = vadd.f32 %v543, %v334
      %v545 = vsel %vm418, %v335, 0.0
      %v546 = vadd.f32 %v544, %v545
      %547 = vadd.xlane.f32.xlu0 %v546
      %v548 = vpop.xlane.xlu0 %547
      %v549 = vadd.f32 %v336, %v337
      %v550 = vadd.f32 %v549, %v338
      %v551 = vadd.f32 %v550, %v339
      %v552 = vadd.f32 %v551, %v340
      %v553 = vadd.f32 %v552, %v341
      %v554 = vsel %vm418, %v342, 0.0
      %v555 = vadd.f32 %v553, %v554
      %556 = vadd.xlane.f32.xlu0 %v555
      %v557 = vpop.xlane.xlu0 %556
      %v558 = vadd.f32 %v343, %v344
      %v559 = vadd.f32 %v558, %v345
      %v560 = vadd.f32 %v559, %v346
      %v561 = vadd.f32 %v560, %v347
      %v562 = vadd.f32 %v561, %v348
      %v563 = vsel %vm418, %v349, 0.0
      %v564 = vadd.f32 %v562, %v563
      %565 = vadd.xlane.f32.xlu0 %v564
      %v566 = vpop.xlane.xlu0 %565
      %v567 = vadd.f32 %v350, %v351
      %v568 = vadd.f32 %v567, %v352
      %v569 = vadd.f32 %v568, %v353
      %v570 = vadd.f32 %v569, %v354
      %v571 = vadd.f32 %v570, %v355
      %v572 = vsel %vm418, %v356, 0.0
      %v573 = vadd.f32 %v571, %v572
      %574 = vadd.xlane.f32.xlu0 %v573
      %v575 = vpop.xlane.xlu0 %574
      %v576 = vadd.f32 %v357, %v358
      %v577 = vadd.f32 %v576, %v359
      %v578 = vadd.f32 %v577, %v360
      %v579 = vadd.f32 %v578, %v361
      %v580 = vadd.f32 %v579, %v362
      %v581 = vsel %vm418, %v363, 0.0
      %v582 = vadd.f32 %v580, %v581
      %583 = vadd.xlane.f32.xlu0 %v582
      %v584 = vpop.xlane.xlu0 %583
      %v585 = vadd.f32 %v364, %v365
      %v586 = vadd.f32 %v585, %v366
      %v587 = vadd.f32 %v586, %v367
      %v588 = vadd.f32 %v587, %v368
      %v589 = vadd.f32 %v588, %v369
      %v590 = vsel %vm418, %v370, 0.0
      %v591 = vadd.f32 %v589, %v590
      %592 = vadd.xlane.f32.xlu0 %v591
      %v593 = vpop.xlane.xlu0 %592
      %v594 = vadd.f32 %v371, %v372
      %v595 = vadd.f32 %v594, %v373
      %v596 = vadd.f32 %v595, %v374
      %v597 = vadd.f32 %v596, %v375
      %v598 = vadd.f32 %v597, %v376
      %v599 = vsel %vm418, %v377, 0.0
      %v600 = vadd.f32 %v598, %v599
      %601 = vadd.xlane.f32.xlu0 %v600
      %v602 = vpop.xlane.xlu0 %601
      %v603 = vadd.f32 %v378, %v379
      %v604 = vadd.f32 %v603, %v380
      %v605 = vadd.f32 %v604, %v381
      %v606 = vadd.f32 %v605, %v382
      %v607 = vadd.f32 %v606, %v383
      %v608 = vsel %vm418, %v384, 0.0
      %v609 = vadd.f32 %v607, %v608
      %610 = vadd.xlane.f32.xlu0 %v609
      %v611 = vpop.xlane.xlu0 %610
      %v612 = vadd.f32 %v385, %v386
      %v613 = vadd.f32 %v612, %v387
      %v614 = vadd.f32 %v613, %v388
      %v615 = vadd.f32 %v614, %v389
      %v616 = vadd.f32 %v615, %v390
      %v617 = vsel %vm418, %v391, 0.0
      %v618 = vadd.f32 %v616, %v617
      %619 = vadd.xlane.f32.xlu0 %v618
      %v620 = vpop.xlane.xlu0 %619
      %v621 = vadd.f32 %v392, %v393
      %v622 = vadd.f32 %v621, %v394
      %v623 = vadd.f32 %v622, %v395
      %v624 = vadd.f32 %v623, %v396
      %v625 = vadd.f32 %v624, %v397
      %v626 = vsel %vm418, %v398, 0.0
      %v627 = vadd.f32 %v625, %v626
      %628 = vadd.xlane.f32.xlu0 %v627
      %v629 = vpop.xlane.xlu0 %628
      %v630 = vadd.f32 %v399, %v400
      %v631 = vadd.f32 %v630, %v401
      %v632 = vadd.f32 %v631, %v402
      %v633 = vadd.f32 %v632, %v403
      %v634 = vadd.f32 %v633, %v404
      %v635 = vsel %vm418, %v405, 0.0
      %v636 = vadd.f32 %v634, %v635
      %637 = vadd.xlane.f32.xlu0 %v636
      %v638 = vpop.xlane.xlu0 %637
      %v639 = vadd.f32 %v406, %v407
      %v640 = vadd.f32 %v639, %v408
      %v641 = vadd.f32 %v640, %v409
      %v642 = vadd.f32 %v641, %v410
      %v643 = vadd.f32 %v642, %v411
      %v644 = vsel %vm418, %v412, 0.0
      %v645 = vadd.f32 %v643, %v644
      %646 = vadd.xlane.f32.xlu0 %v645
      %v647 = vpop.xlane.xlu0 %646
      %v648 = vmul.f32 %v422, 0.0012755102
      %v649 = vmul.f32 %v431, 0.0012755102
      %v650 = vmul.f32 %v440, 0.0012755102
      %v651 = vmul.f32 %v449, 0.0012755102
      %v652 = vmul.f32 %v458, 0.0012755102
      %v653 = vmul.f32 %v467, 0.0012755102
      %v654 = vmul.f32 %v476, 0.0012755102
      %v655 = vmul.f32 %v485, 0.0012755102
      %v656 = vmul.f32 %v494, 0.0012755102
      %v657 = vmul.f32 %v503, 0.0012755102
      %v658 = vmul.f32 %v512, 0.0012755102
      %v659 = vmul.f32 %v521, 0.0012755102
      %v660 = vmul.f32 %v530, 0.0012755102
      %v661 = vmul.f32 %v539, 0.0012755102
      %v662 = vmul.f32 %v548, 0.0012755102
      %v663 = vmul.f32 %v557, 0.0012755102
      %v664 = vmul.f32 %v566, 0.0012755102
      %v665 = vmul.f32 %v575, 0.0012755102
      %v666 = vmul.f32 %v584, 0.0012755102
      %v667 = vmul.f32 %v593, 0.0012755102
      %v668 = vmul.f32 %v602, 0.0012755102
      %v669 = vmul.f32 %v611, 0.0012755102
      %v670 = vmul.f32 %v620, 0.0012755102
      %v671 = vmul.f32 %v629, 0.0012755102
      %v672 = vmul.f32 %v638, 0.0012755102
      %v673 = vmul.f32 %v647, 0.0012755102
      %v674 = vmul.f32 %v231, %v231
      %v675 = vmul.f32 %v232, %v232
      %v676 = vmul.f32 %v233, %v233
      %v677 = vmul.f32 %v234, %v234
      %v678 = vmul.f32 %v235, %v235
      %v679 = vmul.f32 %v236, %v236
      %v680 = vmul.f32 %v237, %v237
      %v681 = vmul.f32 %v238, %v238
      %v682 = vmul.f32 %v239, %v239
      %v683 = vmul.f32 %v240, %v240
      %v684 = vmul.f32 %v241, %v241
      %v685 = vmul.f32 %v242, %v242
      %v686 = vmul.f32 %v243, %v243
      %v687 = vmul.f32 %v244, %v244
      %v688 = vmul.f32 %v245, %v245
      %v689 = vmul.f32 %v246, %v246
      %v690 = vmul.f32 %v247, %v247
      %v691 = vmul.f32 %v248, %v248
      %v692 = vmul.f32 %v249, %v249
      %v693 = vmul.f32 %v250, %v250
      %v694 = vmul.f32 %v251, %v251
      %v695 = vmul.f32 %v252, %v252
      %v696 = vmul.f32 %v253, %v253
      %v697 = vmul.f32 %v254, %v254
      %v698 = vmul.f32 %v255, %v255
      %v699 = vmul.f32 %v256, %v256
      %v700 = vmul.f32 %v257, %v257
      %v701 = vmul.f32 %v258, %v258
      %v702 = vmul.f32 %v259, %v259
      %v703 = vmul.f32 %v260, %v260
      %v704 = vmul.f32 %v261, %v261
      %v705 = vmul.f32 %v262, %v262
      %v706 = vmul.f32 %v263, %v263
      %v707 = vmul.f32 %v264, %v264
      %v708 = vmul.f32 %v265, %v265
      %v709 = vmul.f32 %v266, %v266
      %v710 = vmul.f32 %v267, %v267
      %v711 = vmul.f32 %v268, %v268
      %v712 = vmul.f32 %v269, %v269
      %v713 = vmul.f32 %v270, %v270
      %v714 = vmul.f32 %v271, %v271
      %v715 = vmul.f32 %v272, %v272
      %v716 = vmul.f32 %v273, %v273
      %v717 = vmul.f32 %v274, %v274
      %v718 = vmul.f32 %v275, %v275
      %v719 = vmul.f32 %v276, %v276
      %v720 = vmul.f32 %v277, %v277
      %v721 = vmul.f32 %v278, %v278
      %v722 = vmul.f32 %v279, %v279
      %v723 = vmul.f32 %v280, %v280
      %v724 = vmul.f32 %v281, %v281
      %v725 = vmul.f32 %v282, %v282
      %v726 = vmul.f32 %v283, %v283
      %v727 = vmul.f32 %v284, %v284
      %v728 = vmul.f32 %v285, %v285
      %v729 = vmul.f32 %v286, %v286
      %v730 = vmul.f32 %v287, %v287
      %v731 = vmul.f32 %v288, %v288
      %v732 = vmul.f32 %v289, %v289
      %v733 = vmul.f32 %v290, %v290
      %v734 = vmul.f32 %v291, %v291
      %v735 = vmul.f32 %v292, %v292
      %v736 = vmul.f32 %v293, %v293
      %v737 = vmul.f32 %v294, %v294
      %v738 = vmul.f32 %v295, %v295
      %v739 = vmul.f32 %v296, %v296
      %v740 = vmul.f32 %v297, %v297
      %v741 = vmul.f32 %v298, %v298
      %v742 = vmul.f32 %v299, %v299
      %v743 = vmul.f32 %v300, %v300
      %v744 = vmul.f32 %v301, %v301
      %v745 = vmul.f32 %v302, %v302
      %v746 = vmul.f32 %v303, %v303
      %v747 = vmul.f32 %v304, %v304
      %v748 = vmul.f32 %v305, %v305
      %v749 = vmul.f32 %v306, %v306
      %v750 = vmul.f32 %v307, %v307
      %v751 = vmul.f32 %v308, %v308
      %v752 = vmul.f32 %v309, %v309
      %v753 = vmul.f32 %v310, %v310
      %v754 = vmul.f32 %v311, %v311
      %v755 = vmul.f32 %v312, %v312
      %v756 = vmul.f32 %v313, %v313
      %v757 = vmul.f32 %v314, %v314
      %v758 = vmul.f32 %v315, %v315
      %v759 = vmul.f32 %v316, %v316
      %v760 = vmul.f32 %v317, %v317
      %v761 = vmul.f32 %v318, %v318
      %v762 = vmul.f32 %v319, %v319
      %v763 = vmul.f32 %v320, %v320
      %v764 = vmul.f32 %v321, %v321
      %v765 = vmul.f32 %v322, %v322
      %v766 = vmul.f32 %v323, %v323
      %v767 = vmul.f32 %v324, %v324
      %v768 = vmul.f32 %v325, %v325
      %v769 = vmul.f32 %v326, %v326
      %v770 = vmul.f32 %v327, %v327
      %v771 = vmul.f32 %v328, %v328
      %v772 = vmul.f32 %v329, %v329
      %v773 = vmul.f32 %v330, %v330
      %v774 = vmul.f32 %v331, %v331
      %v775 = vmul.f32 %v332, %v332
      %v776 = vmul.f32 %v333, %v333
      %v777 = vmul.f32 %v334, %v334
      %v778 = vmul.f32 %v335, %v335
      %v779 = vmul.f32 %v336, %v336
      %v780 = vmul.f32 %v337, %v337
      %v781 = vmul.f32 %v338, %v338
      %v782 = vmul.f32 %v339, %v339
      %v783 = vmul.f32 %v340, %v340
      %v784 = vmul.f32 %v341, %v341
      %v785 = vmul.f32 %v342, %v342
      %v786 = vmul.f32 %v343, %v343
      %v787 = vmul.f32 %v344, %v344
      %v788 = vmul.f32 %v345, %v345
      %v789 = vmul.f32 %v346, %v346
      %v790 = vmul.f32 %v347, %v347
      %v791 = vmul.f32 %v348, %v348
      %v792 = vmul.f32 %v349, %v349
      %v793 = vmul.f32 %v350, %v350
      %v794 = vmul.f32 %v351, %v351
      %v795 = vmul.f32 %v352, %v352
      %v796 = vmul.f32 %v353, %v353
      %v797 = vmul.f32 %v354, %v354
      %v798 = vmul.f32 %v355, %v355
      %v799 = vmul.f32 %v356, %v356
      %v800 = vmul.f32 %v357, %v357
      %v801 = vmul.f32 %v358, %v358
      %v802 = vmul.f32 %v359, %v359
      %v803 = vmul.f32 %v360, %v360
      %v804 = vmul.f32 %v361, %v361
      %v805 = vmul.f32 %v362, %v362
      %v806 = vmul.f32 %v363, %v363
      %v807 = vmul.f32 %v364, %v364
      %v808 = vmul.f32 %v365, %v365
      %v809 = vmul.f32 %v366, %v366
      %v810 = vmul.f32 %v367, %v367
      %v811 = vmul.f32 %v368, %v368
      %v812 = vmul.f32 %v369, %v369
      %v813 = vmul.f32 %v370, %v370
      %v814 = vmul.f32 %v371, %v371
      %v815 = vmul.f32 %v372, %v372
      %v816 = vmul.f32 %v373, %v373
      %v817 = vmul.f32 %v374, %v374
      %v818 = vmul.f32 %v375, %v375
      %v819 = vmul.f32 %v376, %v376
      %v820 = vmul.f32 %v377, %v377
      %v821 = vmul.f32 %v378, %v378
      %v822 = vmul.f32 %v379, %v379
      %v823 = vmul.f32 %v380, %v380
      %v824 = vmul.f32 %v381, %v381
      %v825 = vmul.f32 %v382, %v382
      %v826 = vmul.f32 %v383, %v383
      %v827 = vmul.f32 %v384, %v384
      %v828 = vmul.f32 %v385, %v385
      %v829 = vmul.f32 %v386, %v386
      %v830 = vmul.f32 %v387, %v387
      %v831 = vmul.f32 %v388, %v388
      %v832 = vmul.f32 %v389, %v389
      %v833 = vmul.f32 %v390, %v390
      %v834 = vmul.f32 %v391, %v391
      %v835 = vmul.f32 %v392, %v392
      %v836 = vmul.f32 %v393, %v393
      %v837 = vmul.f32 %v394, %v394
      %v838 = vmul.f32 %v395, %v395
      %v839 = vmul.f32 %v396, %v396
      %v840 = vmul.f32 %v397, %v397
      %v841 = vmul.f32 %v398, %v398
      %v842 = vmul.f32 %v399, %v399
      %v843 = vmul.f32 %v400, %v400
      %v844 = vmul.f32 %v401, %v401
      %v845 = vmul.f32 %v402, %v402
      %v846 = vmul.f32 %v403, %v403
      %v847 = vmul.f32 %v404, %v404
      %v848 = vmul.f32 %v405, %v405
      %v849 = vmul.f32 %v406, %v406
      %v850 = vmul.f32 %v407, %v407
      %v851 = vmul.f32 %v408, %v408
      %v852 = vmul.f32 %v409, %v409
      %v853 = vmul.f32 %v410, %v410
      %v854 = vmul.f32 %v411, %v411
      %v855 = vmul.f32 %v412, %v412
      %v856 = vadd.f32 %v674, %v675
      %v857 = vadd.f32 %v856, %v676
      %v858 = vadd.f32 %v857, %v677
      %v859 = vadd.f32 %v858, %v678
      %v860 = vadd.f32 %v859, %v679
      %v861 = vsel %vm418, %v680, 0.0
      %v862 = vadd.f32 %v860, %v861
      %863 = vadd.xlane.f32.xlu0 %v862
      %v864 = vpop.xlane.xlu0 %863
      %v865 = vadd.f32 %v681, %v682
      %v866 = vadd.f32 %v865, %v683
      %v867 = vadd.f32 %v866, %v684
      %v868 = vadd.f32 %v867, %v685
      %v869 = vadd.f32 %v868, %v686
      %v870 = vsel %vm418, %v687, 0.0
      %v871 = vadd.f32 %v869, %v870
      %872 = vadd.xlane.f32.xlu0 %v871
      %v873 = vpop.xlane.xlu0 %872
      %v874 = vadd.f32 %v688, %v689
      %v875 = vadd.f32 %v874, %v690
      %v876 = vadd.f32 %v875, %v691
      %v877 = vadd.f32 %v876, %v692
      %v878 = vadd.f32 %v877, %v693
      %v879 = vsel %vm418, %v694, 0.0
      %v880 = vadd.f32 %v878, %v879
      %881 = vadd.xlane.f32.xlu0 %v880
      %v882 = vpop.xlane.xlu0 %881
      %v883 = vadd.f32 %v695, %v696
      %v884 = vadd.f32 %v883, %v697
      %v885 = vadd.f32 %v884, %v698
      %v886 = vadd.f32 %v885, %v699
      %v887 = vadd.f32 %v886, %v700
      %v888 = vsel %vm418, %v701, 0.0
      %v889 = vadd.f32 %v887, %v888
      %890 = vadd.xlane.f32.xlu0 %v889
      %v891 = vpop.xlane.xlu0 %890
      %v892 = vadd.f32 %v702, %v703
      %v893 = vadd.f32 %v892, %v704
      %v894 = vadd.f32 %v893, %v705
      %v895 = vadd.f32 %v894, %v706
      %v896 = vadd.f32 %v895, %v707
      %v897 = vsel %vm418, %v708, 0.0
      %v898 = vadd.f32 %v896, %v897
      %899 = vadd.xlane.f32.xlu0 %v898
      %v900 = vpop.xlane.xlu0 %899
      %v901 = vadd.f32 %v709, %v710
      %v902 = vadd.f32 %v901, %v711
      %v903 = vadd.f32 %v902, %v712
      %v904 = vadd.f32 %v903, %v713
      %v905 = vadd.f32 %v904, %v714
      %v906 = vsel %vm418, %v715, 0.0
      %v907 = vadd.f32 %v905, %v906
      %908 = vadd.xlane.f32.xlu0 %v907
      %v909 = vpop.xlane.xlu0 %908
      %v910 = vadd.f32 %v716, %v717
      %v911 = vadd.f32 %v910, %v718
      %v912 = vadd.f32 %v911, %v719
      %v913 = vadd.f32 %v912, %v720
      %v914 = vadd.f32 %v913, %v721
      %v915 = vsel %vm418, %v722, 0.0
      %v916 = vadd.f32 %v914, %v915
      %917 = vadd.xlane.f32.xlu0 %v916
      %v918 = vpop.xlane.xlu0 %917
      %v919 = vadd.f32 %v723, %v724
      %v920 = vadd.f32 %v919, %v725
      %v921 = vadd.f32 %v920, %v726
      %v922 = vadd.f32 %v921, %v727
      %v923 = vadd.f32 %v922, %v728
      %v924 = vsel %vm418, %v729, 0.0
      %v925 = vadd.f32 %v923, %v924
      %926 = vadd.xlane.f32.xlu0 %v925
      %v927 = vpop.xlane.xlu0 %926
      %v928 = vadd.f32 %v730, %v731
      %v929 = vadd.f32 %v928, %v732
      %v930 = vadd.f32 %v929, %v733
      %v931 = vadd.f32 %v930, %v734
      %v932 = vadd.f32 %v931, %v735
      %v933 = vsel %vm418, %v736, 0.0
      %v934 = vadd.f32 %v932, %v933
      %935 = vadd.xlane.f32.xlu0 %v934
      %v936 = vpop.xlane.xlu0 %935
      %v937 = vadd.f32 %v737, %v738
      %v938 = vadd.f32 %v937, %v739
      %v939 = vadd.f32 %v938, %v740
      %v940 = vadd.f32 %v939, %v741
      %v941 = vadd.f32 %v940, %v742
      %v942 = vsel %vm418, %v743, 0.0
      %v943 = vadd.f32 %v941, %v942
      %944 = vadd.xlane.f32.xlu0 %v943
      %v945 = vpop.xlane.xlu0 %944
      %v946 = vadd.f32 %v744, %v745
      %v947 = vadd.f32 %v946, %v746
      %v948 = vadd.f32 %v947, %v747
      %v949 = vadd.f32 %v948, %v748
      %v950 = vadd.f32 %v949, %v749
      %v951 = vsel %vm418, %v750, 0.0
      %v952 = vadd.f32 %v950, %v951
      %953 = vadd.xlane.f32.xlu0 %v952
      %v954 = vpop.xlane.xlu0 %953
      %v955 = vadd.f32 %v751, %v752
      %v956 = vadd.f32 %v955, %v753
      %v957 = vadd.f32 %v956, %v754
      %v958 = vadd.f32 %v957, %v755
      %v959 = vadd.f32 %v958, %v756
      %v960 = vsel %vm418, %v757, 0.0
      %v961 = vadd.f32 %v959, %v960
      %962 = vadd.xlane.f32.xlu0 %v961
      %v963 = vpop.xlane.xlu0 %962
      %v964 = vadd.f32 %v758, %v759
      %v965 = vadd.f32 %v964, %v760
      %v966 = vadd.f32 %v965, %v761
      %v967 = vadd.f32 %v966, %v762
      %v968 = vadd.f32 %v967, %v763
      %v969 = vsel %vm418, %v764, 0.0
      %v970 = vadd.f32 %v968, %v969
      %971 = vadd.xlane.f32.xlu0 %v970
      %v972 = vpop.xlane.xlu0 %971
      %v973 = vadd.f32 %v765, %v766
      %v974 = vadd.f32 %v973, %v767
      %v975 = vadd.f32 %v974, %v768
      %v976 = vadd.f32 %v975, %v769
      %v977 = vadd.f32 %v976, %v770
      %v978 = vsel %vm418, %v771, 0.0
      %v979 = vadd.f32 %v977, %v978
      %980 = vadd.xlane.f32.xlu0 %v979
      %v981 = vpop.xlane.xlu0 %980
      %v982 = vadd.f32 %v772, %v773
      %v983 = vadd.f32 %v982, %v774
      %v984 = vadd.f32 %v983, %v775
      %v985 = vadd.f32 %v984, %v776
      %v986 = vadd.f32 %v985, %v777
      %v987 = vsel %vm418, %v778, 0.0
      %v988 = vadd.f32 %v986, %v987
      %989 = vadd.xlane.f32.xlu0 %v988
      %v990 = vpop.xlane.xlu0 %989
      %v991 = vadd.f32 %v779, %v780
      %v992 = vadd.f32 %v991, %v781
      %v993 = vadd.f32 %v992, %v782
      %v994 = vadd.f32 %v993, %v783
      %v995 = vadd.f32 %v994, %v784
      %v996 = vsel %vm418, %v785, 0.0
      %v997 = vadd.f32 %v995, %v996
      %998 = vadd.xlane.f32.xlu0 %v997
      %v999 = vpop.xlane.xlu0 %998
      %v1000 = vadd.f32 %v786, %v787
      %v1001 = vadd.f32 %v1000, %v788
      %v1002 = vadd.f32 %v1001, %v789
      %v1003 = vadd.f32 %v1002, %v790
      %v1004 = vadd.f32 %v1003, %v791
      %v1005 = vsel %vm418, %v792, 0.0
      %v1006 = vadd.f32 %v1004, %v1005
      %1007 = vadd.xlane.f32.xlu0 %v1006
      %v1008 = vpop.xlane.xlu0 %1007
      %v1009 = vadd.f32 %v793, %v794
      %v1010 = vadd.f32 %v1009, %v795
      %v1011 = vadd.f32 %v1010, %v796
      %v1012 = vadd.f32 %v1011, %v797
      %v1013 = vadd.f32 %v1012, %v798
      %v1014 = vsel %vm418, %v799, 0.0
      %v1015 = vadd.f32 %v1013, %v1014
      %1016 = vadd.xlane.f32.xlu0 %v1015
      %v1017 = vpop.xlane.xlu0 %1016
      %v1018 = vadd.f32 %v800, %v801
      %v1019 = vadd.f32 %v1018, %v802
      %v1020 = vadd.f32 %v1019, %v803
      %v1021 = vadd.f32 %v1020, %v804
      %v1022 = vadd.f32 %v1021, %v805
      %v1023 = vsel %vm418, %v806, 0.0
      %v1024 = vadd.f32 %v1022, %v1023
      %1025 = vadd.xlane.f32.xlu0 %v1024
      %v1026 = vpop.xlane.xlu0 %1025
      %v1027 = vadd.f32 %v807, %v808
      %v1028 = vadd.f32 %v1027, %v809
      %v1029 = vadd.f32 %v1028, %v810
      %v1030 = vadd.f32 %v1029, %v811
      %v1031 = vadd.f32 %v1030, %v812
      %v1032 = vsel %vm418, %v813, 0.0
      %v1033 = vadd.f32 %v1031, %v1032
      %1034 = vadd.xlane.f32.xlu0 %v1033
      %v1035 = vpop.xlane.xlu0 %1034
      %v1036 = vadd.f32 %v814, %v815
      %v1037 = vadd.f32 %v1036, %v816
      %v1038 = vadd.f32 %v1037, %v817
      %v1039 = vadd.f32 %v1038, %v818
      %v1040 = vadd.f32 %v1039, %v819
      %v1041 = vsel %vm418, %v820, 0.0
      %v1042 = vadd.f32 %v1040, %v1041
      %1043 = vadd.xlane.f32.xlu0 %v1042
      %v1044 = vpop.xlane.xlu0 %1043
      %v1045 = vadd.f32 %v821, %v822
      %v1046 = vadd.f32 %v1045, %v823
      %v1047 = vadd.f32 %v1046, %v824
      %v1048 = vadd.f32 %v1047, %v825
      %v1049 = vadd.f32 %v1048, %v826
      %v1050 = vsel %vm418, %v827, 0.0
      %v1051 = vadd.f32 %v1049, %v1050
      %1052 = vadd.xlane.f32.xlu0 %v1051
      %v1053 = vpop.xlane.xlu0 %1052
      %v1054 = vadd.f32 %v828, %v829
      %v1055 = vadd.f32 %v1054, %v830
      %v1056 = vadd.f32 %v1055, %v831
      %v1057 = vadd.f32 %v1056, %v832
      %v1058 = vadd.f32 %v1057, %v833
      %v1059 = vsel %vm418, %v834, 0.0
      %v1060 = vadd.f32 %v1058, %v1059
      %1061 = vadd.xlane.f32.xlu0 %v1060
      %v1062 = vpop.xlane.xlu0 %1061
      %v1063 = vadd.f32 %v835, %v836
      %v1064 = vadd.f32 %v1063, %v837
      %v1065 = vadd.f32 %v1064, %v838
      %v1066 = vadd.f32 %v1065, %v839
      %v1067 = vadd.f32 %v1066, %v840
      %v1068 = vsel %vm418, %v841, 0.0
      %v1069 = vadd.f32 %v1067, %v1068
      %1070 = vadd.xlane.f32.xlu0 %v1069
      %v1071 = vpop.xlane.xlu0 %1070
      %v1072 = vadd.f32 %v842, %v843
      %v1073 = vadd.f32 %v1072, %v844
      %v1074 = vadd.f32 %v1073, %v845
      %v1075 = vadd.f32 %v1074, %v846
      %v1076 = vadd.f32 %v1075, %v847
      %v1077 = vsel %vm418, %v848, 0.0
      %v1078 = vadd.f32 %v1076, %v1077
      %1079 = vadd.xlane.f32.xlu0 %v1078
      %v1080 = vpop.xlane.xlu0 %1079
      %v1081 = vadd.f32 %v849, %v850
      %v1082 = vadd.f32 %v1081, %v851
      %v1083 = vadd.f32 %v1082, %v852
      %v1084 = vadd.f32 %v1083, %v853
      %v1085 = vadd.f32 %v1084, %v854
      %v1086 = vsel %vm418, %v855, 0.0
      %v1087 = vadd.f32 %v1085, %v1086
      %1088 = vadd.xlane.f32.xlu0 %v1087
      %v1089 = vpop.xlane.xlu0 %1088
      %v1090 = vmul.f32 %v864, 0.0012755102
      %v1091 = vmul.f32 %v873, 0.0012755102
      %v1092 = vmul.f32 %v882, 0.0012755102
      %v1093 = vmul.f32 %v891, 0.0012755102
      %v1094 = vmul.f32 %v900, 0.0012755102
      %v1095 = vmul.f32 %v909, 0.0012755102
      %v1096 = vmul.f32 %v918, 0.0012755102
      %v1097 = vmul.f32 %v927, 0.0012755102
      %v1098 = vmul.f32 %v936, 0.0012755102
      %v1099 = vmul.f32 %v945, 0.0012755102
      %v1100 = vmul.f32 %v954, 0.0012755102
      %v1101 = vmul.f32 %v963, 0.0012755102
      %v1102 = vmul.f32 %v972, 0.0012755102
      %v1103 = vmul.f32 %v981, 0.0012755102
      %v1104 = vmul.f32 %v990, 0.0012755102
      %v1105 = vmul.f32 %v999, 0.0012755102
      %v1106 = vmul.f32 %v1008, 0.0012755102
      %v1107 = vmul.f32 %v1017, 0.0012755102
      %v1108 = vmul.f32 %v1026, 0.0012755102
      %v1109 = vmul.f32 %v1035, 0.0012755102
      %v1110 = vmul.f32 %v1044, 0.0012755102
      %v1111 = vmul.f32 %v1053, 0.0012755102
      %v1112 = vmul.f32 %v1062, 0.0012755102
      %v1113 = vmul.f32 %v1071, 0.0012755102
      %v1114 = vmul.f32 %v1080, 0.0012755102
      %v1115 = vmul.f32 %v1089, 0.0012755102
      %v1116 = vmul.f32 %v648, %v648
      %v1117 = vmul.f32 %v649, %v649
      %v1118 = vmul.f32 %v650, %v650
      %v1119 = vmul.f32 %v651, %v651
      %v1120 = vmul.f32 %v652, %v652
      %v1121 = vmul.f32 %v653, %v653
      %v1122 = vmul.f32 %v654, %v654
      %v1123 = vmul.f32 %v655, %v655
      %v1124 = vmul.f32 %v656, %v656
      %v1125 = vmul.f32 %v657, %v657
      %v1126 = vmul.f32 %v658, %v658
      %v1127 = vmul.f32 %v659, %v659
      %v1128 = vmul.f32 %v660, %v660
      %v1129 = vmul.f32 %v661, %v661
      %v1130 = vmul.f32 %v662, %v662
      %v1131 = vmul.f32 %v663, %v663
      %v1132 = vmul.f32 %v664, %v664
      %v1133 = vmul.f32 %v665, %v665
      %v1134 = vmul.f32 %v666, %v666
      %v1135 = vmul.f32 %v667, %v667
      %v1136 = vmul.f32 %v668, %v668
      %v1137 = vmul.f32 %v669, %v669
      %v1138 = vmul.f32 %v670, %v670
      %v1139 = vmul.f32 %v671, %v671
      %v1140 = vmul.f32 %v672, %v672
      %v1141 = vmul.f32 %v673, %v673
      %v1142 = vsub.f32 %v1090, %v1116
      %v1143 = vsub.f32 %v1091, %v1117
      %v1144 = vsub.f32 %v1092, %v1118
      %v1145 = vsub.f32 %v1093, %v1119
      %v1146 = vsub.f32 %v1094, %v1120
      %v1147 = vsub.f32 %v1095, %v1121
      %v1148 = vsub.f32 %v1096, %v1122
      %v1149 = vsub.f32 %v1097, %v1123
      %v1150 = vsub.f32 %v1098, %v1124
      %v1151 = vsub.f32 %v1099, %v1125
      %v1152 = vsub.f32 %v1100, %v1126
      %v1153 = vsub.f32 %v1101, %v1127
      %v1154 = vsub.f32 %v1102, %v1128
      %v1155 = vsub.f32 %v1103, %v1129
      %v1156 = vsub.f32 %v1104, %v1130
      %v1157 = vsub.f32 %v1105, %v1131
      %v1158 = vsub.f32 %v1106, %v1132
      %v1159 = vsub.f32 %v1107, %v1133
      %v1160 = vsub.f32 %v1108, %v1134
      %v1161 = vsub.f32 %v1109, %v1135
      %v1162 = vsub.f32 %v1110, %v1136
      %v1163 = vsub.f32 %v1111, %v1137
      %v1164 = vsub.f32 %v1112, %v1138
      %v1165 = vsub.f32 %v1113, %v1139
      %v1166 = vsub.f32 %v1114, %v1140
      %v1167 = vsub.f32 %v1115, %v1141
      %v1168 = vmax.f32 %v1142, 0.0
      %v1169 = vmax.f32 %v1143, 0.0
      %v1170 = vmax.f32 %v1144, 0.0
      %v1171 = vmax.f32 %v1145, 0.0
      %v1172 = vmax.f32 %v1146, 0.0
      %v1173 = vmax.f32 %v1147, 0.0
      %v1174 = vmax.f32 %v1148, 0.0
      %v1175 = vmax.f32 %v1149, 0.0
      %v1176 = vmax.f32 %v1150, 0.0
      %v1177 = vmax.f32 %v1151, 0.0
      %v1178 = vmax.f32 %v1152, 0.0
      %v1179 = vmax.f32 %v1153, 0.0
      %v1180 = vmax.f32 %v1154, 0.0
      %v1181 = vmax.f32 %v1155, 0.0
      %v1182 = vmax.f32 %v1156, 0.0
      %v1183 = vmax.f32 %v1157, 0.0
      %v1184 = vmax.f32 %v1158, 0.0
      %v1185 = vmax.f32 %v1159, 0.0
      %v1186 = vmax.f32 %v1160, 0.0
      %v1187 = vmax.f32 %v1161, 0.0
      %v1188 = vmax.f32 %v1162, 0.0
      %v1189 = vmax.f32 %v1163, 0.0
      %v1190 = vmax.f32 %v1164, 0.0
      %v1191 = vmax.f32 %v1165, 0.0
      %v1192 = vmax.f32 %v1166, 0.0
      %v1193 = vmax.f32 %v1167, 0.0
      %v1194 = vld [vmem:[%s228] sm:$0xff]
      %v1195 = vld [vmem:[%s228 + $0x8] sm:$0xff]
      %v1196 = vld [vmem:[%s228 + $0x10] sm:$0xff]
      %v1197 = vld [vmem:[%s228 + $0x18] sm:$0xff]
      %v1198 = vld [vmem:[%s228 + $0x20] sm:$0xff]
      %v1199 = vld [vmem:[%s228 + $0x28] sm:$0xff]
      %v1200 = vld [vmem:[%s228 + $0x30] sm:$0xff]
      %v1201 = vld [vmem:[%s228 + $0x38] sm:$0xff]
      %v1202 = vld [vmem:[%s228 + $0x40] sm:$0xff]
      %v1203 = vld [vmem:[%s228 + $0x48] sm:$0xff]
      %v1204 = vld [vmem:[%s228 + $0x50] sm:$0xff]
      %v1205 = vld [vmem:[%s228 + $0x58] sm:$0xff]
      %v1206 = vld [vmem:[%s228 + $0x60] sm:$0xff]
      %v1207 = vld [vmem:[%s228 + $0x68] sm:$0xff]
      %v1208 = vld [vmem:[%s228 + $0x70] sm:$0xff]
      %v1209 = vld [vmem:[%s228 + $0x78] sm:$0xff]
      %v1210 = vld [vmem:[%s228 + $0x80] sm:$0xff]
      %v1211 = vld [vmem:[%s228 + $0x88] sm:$0xff]
      %v1212 = vld [vmem:[%s228 + $0x90] sm:$0xff]
      %v1213 = vld [vmem:[%s228 + $0x98] sm:$0xff]
      %v1214 = vld [vmem:[%s228 + $0xa0] sm:$0xff]
      %v1215 = vld [vmem:[%s228 + $0xa8] sm:$0xff]
      %v1216 = vld [vmem:[%s228 + $0xb0] sm:$0xff]
      %v1217 = vld [vmem:[%s228 + $0xb8] sm:$0xff]
      %v1218 = vld [vmem:[%s228 + $0xc0] sm:$0xff]
      %v1219 = vld [vmem:[%s228 + $0xc8] sm:$0xff]
      %v1220 = vadd.f32 %v1168, 1e-05
      %v1221 = vadd.f32 %v1169, 1e-05
      %v1222 = vadd.f32 %v1170, 1e-05
      %v1223 = vadd.f32 %v1171, 1e-05
      %v1224 = vadd.f32 %v1172, 1e-05
      %v1225 = vadd.f32 %v1173, 1e-05
      %v1226 = vadd.f32 %v1174, 1e-05
      %v1227 = vadd.f32 %v1175, 1e-05
      %v1228 = vadd.f32 %v1176, 1e-05
      %v1229 = vadd.f32 %v1177, 1e-05
      %v1230 = vadd.f32 %v1178, 1e-05
      %v1231 = vadd.f32 %v1179, 1e-05
      %v1232 = vadd.f32 %v1180, 1e-05
      %v1233 = vadd.f32 %v1181, 1e-05
      %v1234 = vadd.f32 %v1182, 1e-05
      %v1235 = vadd.f32 %v1183, 1e-05
      %v1236 = vadd.f32 %v1184, 1e-05
      %v1237 = vadd.f32 %v1185, 1e-05
      %v1238 = vadd.f32 %v1186, 1e-05
      %v1239 = vadd.f32 %v1187, 1e-05
      %v1240 = vadd.f32 %v1188, 1e-05
      %v1241 = vadd.f32 %v1189, 1e-05
      %v1242 = vadd.f32 %v1190, 1e-05
      %v1243 = vadd.f32 %v1191, 1e-05
      %v1244 = vadd.f32 %v1192, 1e-05
      %v1245 = vadd.f32 %v1193, 1e-05
      %v1246 = vrsqrt.pop %v1220
      %v1247 = vrsqrt.pop %v1221
      %v1248 = vrsqrt.pop %v1222
      %v1249 = vrsqrt.pop %v1223
      %v1250 = vrsqrt.pop %v1224
      %v1251 = vrsqrt.pop %v1225
      %v1252 = vrsqrt.pop %v1226
      %v1253 = vrsqrt.pop %v1227
      %v1254 = vrsqrt.pop %v1228
      %v1255 = vrsqrt.pop %v1229
      %v1256 = vrsqrt.pop %v1230
      %v1257 = vrsqrt.pop %v1231
      %v1258 = vrsqrt.pop %v1232
      %v1259 = vrsqrt.pop %v1233
      %v1260 = vrsqrt.pop %v1234
      %v1261 = vrsqrt.pop %v1235
      %v1262 = vrsqrt.pop %v1236
      %v1263 = vrsqrt.pop %v1237
      %v1264 = vrsqrt.pop %v1238
      %v1265 = vrsqrt.pop %v1239
      %v1266 = vrsqrt.pop %v1240
      %v1267 = vrsqrt.pop %v1241
      %v1268 = vrsqrt.pop %v1242
      %v1269 = vrsqrt.pop %v1243
      %v1270 = vrsqrt.pop %v1244
      %v1271 = vrsqrt.pop %v1245
      %v1272 = vmul.f32 %v1194, %v1246
      %v1273 = vmul.f32 %v1195, %v1247
      %v1274 = vmul.f32 %v1196, %v1248
      %v1275 = vmul.f32 %v1197, %v1249
      %v1276 = vmul.f32 %v1198, %v1250
      %v1277 = vmul.f32 %v1199, %v1251
      %v1278 = vmul.f32 %v1200, %v1252
      %v1279 = vmul.f32 %v1201, %v1253
      %v1280 = vmul.f32 %v1202, %v1254
      %v1281 = vmul.f32 %v1203, %v1255
      %v1282 = vmul.f32 %v1204, %v1256
      %v1283 = vmul.f32 %v1205, %v1257
      %v1284 = vmul.f32 %v1206, %v1258
      %v1285 = vmul.f32 %v1207, %v1259
      %v1286 = vmul.f32 %v1208, %v1260
      %v1287 = vmul.f32 %v1209, %v1261
      %v1288 = vmul.f32 %v1210, %v1262
      %v1289 = vmul.f32 %v1211, %v1263
      %v1290 = vmul.f32 %v1212, %v1264
      %v1291 = vmul.f32 %v1213, %v1265
      %v1292 = vmul.f32 %v1214, %v1266
      %v1293 = vmul.f32 %v1215, %v1267
      %v1294 = vmul.f32 %v1216, %v1268
      %v1295 = vmul.f32 %v1217, %v1269
      %v1296 = vmul.f32 %v1218, %v1270
      %v1297 = vmul.f32 %v1219, %v1271
      %v1298 = vmul.f32 %v648, %v1272
      %v1299 = vmul.f32 %v649, %v1273
      %v1300 = vmul.f32 %v650, %v1274
      %v1301 = vmul.f32 %v651, %v1275
      %v1302 = vmul.f32 %v652, %v1276
      %v1303 = vmul.f32 %v653, %v1277
      %v1304 = vmul.f32 %v654, %v1278
      %v1305 = vmul.f32 %v655, %v1279
      %v1306 = vmul.f32 %v656, %v1280
      %v1307 = vmul.f32 %v657, %v1281
      %v1308 = vmul.f32 %v658, %v1282
      %v1309 = vmul.f32 %v659, %v1283
      %v1310 = vmul.f32 %v660, %v1284
      %v1311 = vmul.f32 %v661, %v1285
      %v1312 = vmul.f32 %v662, %v1286
      %v1313 = vmul.f32 %v663, %v1287
      %v1314 = vmul.f32 %v664, %v1288
      %v1315 = vmul.f32 %v665, %v1289
      %v1316 = vmul.f32 %v666, %v1290
      %v1317 = vmul.f32 %v667, %v1291
      %v1318 = vmul.f32 %v668, %v1292
      %v1319 = vmul.f32 %v669, %v1293
      %v1320 = vmul.f32 %v670, %v1294
      %v1321 = vmul.f32 %v671, %v1295
      %v1322 = vmul.f32 %v672, %v1296
      %v1323 = vmul.f32 %v673, %v1297
      %1350 = vrot.lane.b32.xlu0 %v1298, 1
      %v1351 = vpop.permute.xlu0 %1350
      %1352 = vrot.lane.b32.xlu0 %v1299, 1
      %v1353 = vpop.permute.xlu0 %1352
      %1354 = vrot.lane.b32.xlu0 %v1300, 1
      %v1355 = vpop.permute.xlu0 %1354
      %1356 = vrot.lane.b32.xlu0 %v1301, 1
      %v1357 = vpop.permute.xlu0 %1356
      %1358 = vrot.lane.b32.xlu0 %v1302, 1
      %v1359 = vpop.permute.xlu0 %1358
      %1360 = vrot.lane.b32.xlu0 %v1303, 1
      %v1361 = vpop.permute.xlu0 %1360
      %1362 = vrot.lane.b32.xlu0 %v1304, 1
      %v1363 = vpop.permute.xlu0 %1362
      %1364 = vrot.lane.b32.xlu0 %v1305, 1
      %v1365 = vpop.permute.xlu0 %1364
      %1366 = vrot.lane.b32.xlu0 %v1306, 1
      %v1367 = vpop.permute.xlu0 %1366
      %1368 = vrot.lane.b32.xlu0 %v1307, 1
      %v1369 = vpop.permute.xlu0 %1368
      %1370 = vrot.lane.b32.xlu0 %v1308, 1
      %v1371 = vpop.permute.xlu0 %1370
      %1372 = vrot.lane.b32.xlu0 %v1309, 1
      %v1373 = vpop.permute.xlu0 %1372
      %1374 = vrot.lane.b32.xlu0 %v1310, 1
      %v1375 = vpop.permute.xlu0 %1374
      %1376 = vrot.lane.b32.xlu0 %v1311, 1
      %v1377 = vpop.permute.xlu0 %1376
      %1378 = vrot.lane.b32.xlu0 %v1312, 1
      %v1379 = vpop.permute.xlu0 %1378
      %1380 = vrot.lane.b32.xlu0 %v1313, 1
      %v1381 = vpop.permute.xlu0 %1380
      %1382 = vrot.lane.b32.xlu0 %v1314, 1
      %v1383 = vpop.permute.xlu0 %1382
      %1384 = vrot.lane.b32.xlu0 %v1315, 1
      %v1385 = vpop.permute.xlu0 %1384
      %1386 = vrot.lane.b32.xlu0 %v1316, 1
      %v1387 = vpop.permute.xlu0 %1386
      %1388 = vrot.lane.b32.xlu0 %v1317, 1
      %v1389 = vpop.permute.xlu0 %1388
      %1390 = vrot.lane.b32.xlu0 %v1318, 1
      %v1391 = vpop.permute.xlu0 %1390
      %1392 = vrot.lane.b32.xlu0 %v1319, 1
      %v1393 = vpop.permute.xlu0 %1392
      %1394 = vrot.lane.b32.xlu0 %v1320, 1
      %v1395 = vpop.permute.xlu0 %1394
      %1396 = vrot.lane.b32.xlu0 %v1321, 1
      %v1397 = vpop.permute.xlu0 %1396
      %1398 = vrot.lane.b32.xlu0 %v1322, 1
      %v1399 = vpop.permute.xlu0 %1398
      %1400 = vrot.lane.b32.xlu0 %v1323, 1
      %v1401 = vpop.permute.xlu0 %1400
      %v1428 = vsub.f32 %v1194, %v1351
      %v1429 = vsub.f32 %v1195, %v1353
      %v1430 = vsub.f32 %v1196, %v1355
      %v1431 = vsub.f32 %v1197, %v1357
      %v1432 = vsub.f32 %v1198, %v1359
      %v1433 = vsub.f32 %v1199, %v1361
      %v1434 = vsub.f32 %v1200, %v1363
      %v1435 = vsub.f32 %v1201, %v1365
      %v1436 = vsub.f32 %v1202, %v1367
      %v1437 = vsub.f32 %v1203, %v1369
      %v1438 = vsub.f32 %v1204, %v1371
      %v1439 = vsub.f32 %v1205, %v1373
      %v1440 = vsub.f32 %v1206, %v1375
      %v1441 = vsub.f32 %v1207, %v1377
      %v1442 = vsub.f32 %v1208, %v1379
      %v1443 = vsub.f32 %v1209, %v1381
      %v1444 = vsub.f32 %v1210, %v1383
      %v1445 = vsub.f32 %v1211, %v1385
      %v1446 = vsub.f32 %v1212, %v1387
      %v1447 = vsub.f32 %v1213, %v1389
      %v1448 = vsub.f32 %v1214, %v1391
      %v1449 = vsub.f32 %v1215, %v1393
      %v1450 = vsub.f32 %v1216, %v1395
      %v1451 = vsub.f32 %v1217, %v1397
      %v1452 = vsub.f32 %v1218, %v1399
      %v1453 = vsub.f32 %v1219, %v1401
      %1455 = vset.pattern.permute.xlu0 0
      %1456 = vperm.xlu0 %1455, %v1272
      %v1457 = vpop.permute.xlu0 %1456
      %1460 = vset.pattern.permute.xlu0 0
      %1461 = vperm.xlu0 %1460, %v1273
      %v1462 = vpop.permute.xlu0 %1461
      %1465 = vset.pattern.permute.xlu0 0
      %1466 = vperm.xlu0 %1465, %v1274
      %v1467 = vpop.permute.xlu0 %1466
      %1470 = vset.pattern.permute.xlu0 0
      %1471 = vperm.xlu0 %1470, %v1275
      %v1472 = vpop.permute.xlu0 %1471
      %1475 = vset.pattern.permute.xlu0 0
      %1476 = vperm.xlu0 %1475, %v1276
      %v1477 = vpop.permute.xlu0 %1476
      %1480 = vset.pattern.permute.xlu0 0
      %1481 = vperm.xlu0 %1480, %v1277
      %v1482 = vpop.permute.xlu0 %1481
      %1485 = vset.pattern.permute.xlu0 0
      %1486 = vperm.xlu0 %1485, %v1278
      %v1487 = vpop.permute.xlu0 %1486
      %1490 = vset.pattern.permute.xlu0 0
      %1491 = vperm.xlu0 %1490, %v1279
      %v1492 = vpop.permute.xlu0 %1491
      %1495 = vset.pattern.permute.xlu0 0
      %1496 = vperm.xlu0 %1495, %v1280
      %v1497 = vpop.permute.xlu0 %1496
      %1500 = vset.pattern.permute.xlu0 0
      %1501 = vperm.xlu0 %1500, %v1281
      %v1502 = vpop.permute.xlu0 %1501
      %1505 = vset.pattern.permute.xlu0 0
      %1506 = vperm.xlu0 %1505, %v1282
      %v1507 = vpop.permute.xlu0 %1506
      %1510 = vset.pattern.permute.xlu0 0
      %1511 = vperm.xlu0 %1510, %v1283
      %v1512 = vpop.permute.xlu0 %1511
      %1515 = vset.pattern.permute.xlu0 0
      %1516 = vperm.xlu0 %1515, %v1284
      %v1517 = vpop.permute.xlu0 %1516
      %1520 = vset.pattern.permute.xlu0 0
      %1521 = vperm.xlu0 %1520, %v1285
      %v1522 = vpop.permute.xlu0 %1521
      %1525 = vset.pattern.permute.xlu0 0
      %1526 = vperm.xlu0 %1525, %v1286
      %v1527 = vpop.permute.xlu0 %1526
      %1530 = vset.pattern.permute.xlu0 0
      %1531 = vperm.xlu0 %1530, %v1287
      %v1532 = vpop.permute.xlu0 %1531
      %1535 = vset.pattern.permute.xlu0 0
      %1536 = vperm.xlu0 %1535, %v1288
      %v1537 = vpop.permute.xlu0 %1536
      %1540 = vset.pattern.permute.xlu0 0
      %1541 = vperm.xlu0 %1540, %v1289
      %v1542 = vpop.permute.xlu0 %1541
      %1545 = vset.pattern.permute.xlu0 0
      %1546 = vperm.xlu0 %1545, %v1290
      %v1547 = vpop.permute.xlu0 %1546
      %1550 = vset.pattern.permute.xlu0 0
      %1551 = vperm.xlu0 %1550, %v1291
      %v1552 = vpop.permute.xlu0 %1551
      %1555 = vset.pattern.permute.xlu0 0
      %1556 = vperm.xlu0 %1555, %v1292
      %v1557 = vpop.permute.xlu0 %1556
      %1560 = vset.pattern.permute.xlu0 0
      %1561 = vperm.xlu0 %1560, %v1293
      %v1562 = vpop.permute.xlu0 %1561
      %1565 = vset.pattern.permute.xlu0 0
      %1566 = vperm.xlu0 %1565, %v1294
      %v1567 = vpop.permute.xlu0 %1566
      %1570 = vset.pattern.permute.xlu0 0
      %1571 = vperm.xlu0 %1570, %v1295
      %v1572 = vpop.permute.xlu0 %1571
      %1575 = vset.pattern.permute.xlu0 0
      %1576 = vperm.xlu0 %1575, %v1296
      %v1577 = vpop.permute.xlu0 %1576
      %1580 = vset.pattern.permute.xlu0 0
      %1581 = vperm.xlu0 %1580, %v1297
      %v1582 = vpop.permute.xlu0 %1581
      %v1584 = vmul.f32 %v231, %v1457
      %v1585 = vmul.f32 %v232, %v1457
      %v1586 = vmul.f32 %v233, %v1457
      %v1587 = vmul.f32 %v234, %v1457
      %v1588 = vmul.f32 %v235, %v1457
      %v1589 = vmul.f32 %v236, %v1457
      %v1590 = vmul.f32 %v237, %v1457
      %v1591 = vmul.f32 %v238, %v1462
      %v1592 = vmul.f32 %v239, %v1462
      %v1593 = vmul.f32 %v240, %v1462
      %v1594 = vmul.f32 %v241, %v1462
      %v1595 = vmul.f32 %v242, %v1462
      %v1596 = vmul.f32 %v243, %v1462
      %v1597 = vmul.f32 %v244, %v1462
      %v1598 = vmul.f32 %v245, %v1467
      %v1599 = vmul.f32 %v246, %v1467
      %v1600 = vmul.f32 %v247, %v1467
      %v1601 = vmul.f32 %v248, %v1467
      %v1602 = vmul.f32 %v249, %v1467
      %v1603 = vmul.f32 %v250, %v1467
      %v1604 = vmul.f32 %v251, %v1467
      %v1605 = vmul.f32 %v252, %v1472
      %v1606 = vmul.f32 %v253, %v1472
      %v1607 = vmul.f32 %v254, %v1472
      %v1608 = vmul.f32 %v255, %v1472
      %v1609 = vmul.f32 %v256, %v1472
      %v1610 = vmul.f32 %v257, %v1472
      %v1611 = vmul.f32 %v258, %v1472
      %v1612 = vmul.f32 %v259, %v1477
      %v1613 = vmul.f32 %v260, %v1477
      %v1614 = vmul.f32 %v261, %v1477
      %v1615 = vmul.f32 %v262, %v1477
      %v1616 = vmul.f32 %v263, %v1477
      %v1617 = vmul.f32 %v264, %v1477
      %v1618 = vmul.f32 %v265, %v1477
      %v1619 = vmul.f32 %v266, %v1482
      %v1620 = vmul.f32 %v267, %v1482
      %v1621 = vmul.f32 %v268, %v1482
      %v1622 = vmul.f32 %v269, %v1482
      %v1623 = vmul.f32 %v270, %v1482
      %v1624 = vmul.f32 %v271, %v1482
      %v1625 = vmul.f32 %v272, %v1482
      %v1626 = vmul.f32 %v273, %v1487
      %v1627 = vmul.f32 %v274, %v1487
      %v1628 = vmul.f32 %v275, %v1487
      %v1629 = vmul.f32 %v276, %v1487
      %v1630 = vmul.f32 %v277, %v1487
      %v1631 = vmul.f32 %v278, %v1487
      %v1632 = vmul.f32 %v279, %v1487
      %v1633 = vmul.f32 %v280, %v1492
      %v1634 = vmul.f32 %v281, %v1492
      %v1635 = vmul.f32 %v282, %v1492
      %v1636 = vmul.f32 %v283, %v1492
      %v1637 = vmul.f32 %v284, %v1492
      %v1638 = vmul.f32 %v285, %v1492
      %v1639 = vmul.f32 %v286, %v1492
      %v1640 = vmul.f32 %v287, %v1497
      %v1641 = vmul.f32 %v288, %v1497
      %v1642 = vmul.f32 %v289, %v1497
      %v1643 = vmul.f32 %v290, %v1497
      %v1644 = vmul.f32 %v291, %v1497
      %v1645 = vmul.f32 %v292, %v1497
      %v1646 = vmul.f32 %v293, %v1497
      %v1647 = vmul.f32 %v294, %v1502
      %v1648 = vmul.f32 %v295, %v1502
      %v1649 = vmul.f32 %v296, %v1502
      %v1650 = vmul.f32 %v297, %v1502
      %v1651 = vmul.f32 %v298, %v1502
      %v1652 = vmul.f32 %v299, %v1502
      %v1653 = vmul.f32 %v300, %v1502
      %v1654 = vmul.f32 %v301, %v1507
      %v1655 = vmul.f32 %v302, %v1507
      %v1656 = vmul.f32 %v303, %v1507
      %v1657 = vmul.f32 %v304, %v1507
      %v1658 = vmul.f32 %v305, %v1507
      %v1659 = vmul.f32 %v306, %v1507
      %v1660 = vmul.f32 %v307, %v1507
      %v1661 = vmul.f32 %v308, %v1512
      %v1662 = vmul.f32 %v309, %v1512
      %v1663 = vmul.f32 %v310, %v1512
      %v1664 = vmul.f32 %v311, %v1512
      %v1665 = vmul.f32 %v312, %v1512
      %v1666 = vmul.f32 %v313, %v1512
      %v1667 = vmul.f32 %v314, %v1512
      %v1668 = vmul.f32 %v315, %v1517
      %v1669 = vmul.f32 %v316, %v1517
      %v1670 = vmul.f32 %v317, %v1517
      %v1671 = vmul.f32 %v318, %v1517
      %v1672 = vmul.f32 %v319, %v1517
      %v1673 = vmul.f32 %v320, %v1517
      %v1674 = vmul.f32 %v321, %v1517
      %v1675 = vmul.f32 %v322, %v1522
      %v1676 = vmul.f32 %v323, %v1522
      %v1677 = vmul.f32 %v324, %v1522
      %v1678 = vmul.f32 %v325, %v1522
      %v1679 = vmul.f32 %v326, %v1522
      %v1680 = vmul.f32 %v327, %v1522
      %v1681 = vmul.f32 %v328, %v1522
      %v1682 = vmul.f32 %v329, %v1527
      %v1683 = vmul.f32 %v330, %v1527
      %v1684 = vmul.f32 %v331, %v1527
      %v1685 = vmul.f32 %v332, %v1527
      %v1686 = vmul.f32 %v333, %v1527
      %v1687 = vmul.f32 %v334, %v1527
      %v1688 = vmul.f32 %v335, %v1527
      %v1689 = vmul.f32 %v336, %v1532
      %v1690 = vmul.f32 %v337, %v1532
      %v1691 = vmul.f32 %v338, %v1532
      %v1692 = vmul.f32 %v339, %v1532
      %v1693 = vmul.f32 %v340, %v1532
      %v1694 = vmul.f32 %v341, %v1532
      %v1695 = vmul.f32 %v342, %v1532
      %v1696 = vmul.f32 %v343, %v1537
      %v1697 = vmul.f32 %v344, %v1537
      %v1698 = vmul.f32 %v345, %v1537
      %v1699 = vmul.f32 %v346, %v1537
      %v1700 = vmul.f32 %v347, %v1537
      %v1701 = vmul.f32 %v348, %v1537
      %v1702 = vmul.f32 %v349, %v1537
      %v1703 = vmul.f32 %v350, %v1542
      %v1704 = vmul.f32 %v351, %v1542
      %v1705 = vmul.f32 %v352, %v1542
      %v1706 = vmul.f32 %v353, %v1542
      %v1707 = vmul.f32 %v354, %v1542
      %v1708 = vmul.f32 %v355, %v1542
      %v1709 = vmul.f32 %v356, %v1542
      %v1710 = vmul.f32 %v357, %v1547
      %v1711 = vmul.f32 %v358, %v1547
      %v1712 = vmul.f32 %v359, %v1547
      %v1713 = vmul.f32 %v360, %v1547
      %v1714 = vmul.f32 %v361, %v1547
      %v1715 = vmul.f32 %v362, %v1547
      %v1716 = vmul.f32 %v363, %v1547
      %v1717 = vmul.f32 %v364, %v1552
      %v1718 = vmul.f32 %v365, %v1552
      %v1719 = vmul.f32 %v366, %v1552
      %v1720 = vmul.f32 %v367, %v1552
      %v1721 = vmul.f32 %v368, %v1552
      %v1722 = vmul.f32 %v369, %v1552
      %v1723 = vmul.f32 %v370, %v1552
      %v1724 = vmul.f32 %v371, %v1557
      %v1725 = vmul.f32 %v372, %v1557
      %v1726 = vmul.f32 %v373, %v1557
      %v1727 = vmul.f32 %v374, %v1557
      %v1728 = vmul.f32 %v375, %v1557
      %v1729 = vmul.f32 %v376, %v1557
      %v1730 = vmul.f32 %v377, %v1557
      %v1731 = vmul.f32 %v378, %v1562
      %v1732 = vmul.f32 %v379, %v1562
      %v1733 = vmul.f32 %v380, %v1562
      %v1734 = vmul.f32 %v381, %v1562
      %v1735 = vmul.f32 %v382, %v1562
      %v1736 = vmul.f32 %v383, %v1562
      %v1737 = vmul.f32 %v384, %v1562
      %v1738 = vmul.f32 %v385, %v1567
      %v1739 = vmul.f32 %v386, %v1567
      %v1740 = vmul.f32 %v387, %v1567
      %v1741 = vmul.f32 %v388, %v1567
      %v1742 = vmul.f32 %v389, %v1567
      %v1743 = vmul.f32 %v390, %v1567
      %v1744 = vmul.f32 %v391, %v1567
      %v1745 = vmul.f32 %v392, %v1572
      %v1746 = vmul.f32 %v393, %v1572
      %v1747 = vmul.f32 %v394, %v1572
      %v1748 = vmul.f32 %v395, %v1572
      %v1749 = vmul.f32 %v396, %v1572
      %v1750 = vmul.f32 %v397, %v1572
      %v1751 = vmul.f32 %v398, %v1572
      %v1752 = vmul.f32 %v399, %v1577
      %v1753 = vmul.f32 %v400, %v1577
      %v1754 = vmul.f32 %v401, %v1577
      %v1755 = vmul.f32 %v402, %v1577
      %v1756 = vmul.f32 %v403, %v1577
      %v1757 = vmul.f32 %v404, %v1577
      %v1758 = vmul.f32 %v405, %v1577
      %v1759 = vmul.f32 %v406, %v1582
      %v1760 = vmul.f32 %v407, %v1582
      %v1761 = vmul.f32 %v408, %v1582
      %v1762 = vmul.f32 %v409, %v1582
      %v1763 = vmul.f32 %v410, %v1582
      %v1764 = vmul.f32 %v411, %v1582
      %v1765 = vmul.f32 %v412, %v1582
      %1767 = vset.pattern.permute.xlu0 1
      %1768 = vperm.xlu0 %1767, %v1428
      %v1769 = vpop.permute.xlu0 %1768
      %1772 = vset.pattern.permute.xlu0 1
      %1773 = vperm.xlu0 %1772, %v1429
      %v1774 = vpop.permute.xlu0 %1773
      %1777 = vset.pattern.permute.xlu0 1
      %1778 = vperm.xlu0 %1777, %v1430
      %v1779 = vpop.permute.xlu0 %1778
      %1782 = vset.pattern.permute.xlu0 1
      %1783 = vperm.xlu0 %1782, %v1431
      %v1784 = vpop.permute.xlu0 %1783
      %1787 = vset.pattern.permute.xlu0 1
      %1788 = vperm.xlu0 %1787, %v1432
      %v1789 = vpop.permute.xlu0 %1788
      %1792 = vset.pattern.permute.xlu0 1
      %1793 = vperm.xlu0 %1792, %v1433
      %v1794 = vpop.permute.xlu0 %1793
      %1797 = vset.pattern.permute.xlu0 1
      %1798 = vperm.xlu0 %1797, %v1434
      %v1799 = vpop.permute.xlu0 %1798
      %1802 = vset.pattern.permute.xlu0 1
      %1803 = vperm.xlu0 %1802, %v1435
      %v1804 = vpop.permute.xlu0 %1803
      %1807 = vset.pattern.permute.xlu0 1
      %1808 = vperm.xlu0 %1807, %v1436
      %v1809 = vpop.permute.xlu0 %1808
      %1812 = vset.pattern.permute.xlu0 1
      %1813 = vperm.xlu0 %1812, %v1437
      %v1814 = vpop.permute.xlu0 %1813
      %1817 = vset.pattern.permute.xlu0 1
      %1818 = vperm.xlu0 %1817, %v1438
      %v1819 = vpop.permute.xlu0 %1818
      %1822 = vset.pattern.permute.xlu0 1
      %1823 = vperm.xlu0 %1822, %v1439
      %v1824 = vpop.permute.xlu0 %1823
      %1827 = vset.pattern.permute.xlu0 1
      %1828 = vperm.xlu0 %1827, %v1440
      %v1829 = vpop.permute.xlu0 %1828
      %1832 = vset.pattern.permute.xlu0 1
      %1833 = vperm.xlu0 %1832, %v1441
      %v1834 = vpop.permute.xlu0 %1833
      %1837 = vset.pattern.permute.xlu0 1
      %1838 = vperm.xlu0 %1837, %v1442
      %v1839 = vpop.permute.xlu0 %1838
      %1842 = vset.pattern.permute.xlu0 1
      %1843 = vperm.xlu0 %1842, %v1443
      %v1844 = vpop.permute.xlu0 %1843
      %1847 = vset.pattern.permute.xlu0 1
      %1848 = vperm.xlu0 %1847, %v1444
      %v1849 = vpop.permute.xlu0 %1848
      %1852 = vset.pattern.permute.xlu0 1
      %1853 = vperm.xlu0 %1852, %v1445
      %v1854 = vpop.permute.xlu0 %1853
      %1857 = vset.pattern.permute.xlu0 1
      %1858 = vperm.xlu0 %1857, %v1446
      %v1859 = vpop.permute.xlu0 %1858
      %1862 = vset.pattern.permute.xlu0 1
      %1863 = vperm.xlu0 %1862, %v1447
      %v1864 = vpop.permute.xlu0 %1863
      %1867 = vset.pattern.permute.xlu0 1
      %1868 = vperm.xlu0 %1867, %v1448
      %v1869 = vpop.permute.xlu0 %1868
      %1872 = vset.pattern.permute.xlu0 1
      %1873 = vperm.xlu0 %1872, %v1449
      %v1874 = vpop.permute.xlu0 %1873
      %1877 = vset.pattern.permute.xlu0 1
      %1878 = vperm.xlu0 %1877, %v1450
      %v1879 = vpop.permute.xlu0 %1878
      %1882 = vset.pattern.permute.xlu0 1
      %1883 = vperm.xlu0 %1882, %v1451
      %v1884 = vpop.permute.xlu0 %1883
      %1887 = vset.pattern.permute.xlu0 1
      %1888 = vperm.xlu0 %1887, %v1452
      %v1889 = vpop.permute.xlu0 %1888
      %1892 = vset.pattern.permute.xlu0 1
      %1893 = vperm.xlu0 %1892, %v1453
      %v1894 = vpop.permute.xlu0 %1893
      %v1896 = vadd.f32 %v1584, %v1769
      %v1897 = vadd.f32 %v1585, %v1769
      %v1898 = vadd.f32 %v1586, %v1769
      %v1899 = vadd.f32 %v1587, %v1769
      %v1900 = vadd.f32 %v1588, %v1769
      %v1901 = vadd.f32 %v1589, %v1769
      %v1902 = vadd.f32 %v1590, %v1769
      %v1903 = vadd.f32 %v1591, %v1774
      %v1904 = vadd.f32 %v1592, %v1774
      %v1905 = vadd.f32 %v1593, %v1774
      %v1906 = vadd.f32 %v1594, %v1774
      %v1907 = vadd.f32 %v1595, %v1774
      %v1908 = vadd.f32 %v1596, %v1774
      %v1909 = vadd.f32 %v1597, %v1774
      %v1910 = vadd.f32 %v1598, %v1779
      %v1911 = vadd.f32 %v1599, %v1779
      %v1912 = vadd.f32 %v1600, %v1779
      %v1913 = vadd.f32 %v1601, %v1779
      %v1914 = vadd.f32 %v1602, %v1779
      %v1915 = vadd.f32 %v1603, %v1779
      %v1916 = vadd.f32 %v1604, %v1779
      %v1917 = vadd.f32 %v1605, %v1784
      %v1918 = vadd.f32 %v1606, %v1784
      %v1919 = vadd.f32 %v1607, %v1784
      %v1920 = vadd.f32 %v1608, %v1784
      %v1921 = vadd.f32 %v1609, %v1784
      %v1922 = vadd.f32 %v1610, %v1784
      %v1923 = vadd.f32 %v1611, %v1784
      %v1924 = vadd.f32 %v1612, %v1789
      %v1925 = vadd.f32 %v1613, %v1789
      %v1926 = vadd.f32 %v1614, %v1789
      %v1927 = vadd.f32 %v1615, %v1789
      %v1928 = vadd.f32 %v1616, %v1789
      %v1929 = vadd.f32 %v1617, %v1789
      %v1930 = vadd.f32 %v1618, %v1789
      %v1931 = vadd.f32 %v1619, %v1794
      %v1932 = vadd.f32 %v1620, %v1794
      %v1933 = vadd.f32 %v1621, %v1794
      %v1934 = vadd.f32 %v1622, %v1794
      %v1935 = vadd.f32 %v1623, %v1794
      %v1936 = vadd.f32 %v1624, %v1794
      %v1937 = vadd.f32 %v1625, %v1794
      %v1938 = vadd.f32 %v1626, %v1799
      %v1939 = vadd.f32 %v1627, %v1799
      %v1940 = vadd.f32 %v1628, %v1799
      %v1941 = vadd.f32 %v1629, %v1799
      %v1942 = vadd.f32 %v1630, %v1799
      %v1943 = vadd.f32 %v1631, %v1799
      %v1944 = vadd.f32 %v1632, %v1799
      %v1945 = vadd.f32 %v1633, %v1804
      %v1946 = vadd.f32 %v1634, %v1804
      %v1947 = vadd.f32 %v1635, %v1804
      %v1948 = vadd.f32 %v1636, %v1804
      %v1949 = vadd.f32 %v1637, %v1804
      %v1950 = vadd.f32 %v1638, %v1804
      %v1951 = vadd.f32 %v1639, %v1804
      %v1952 = vadd.f32 %v1640, %v1809
      %v1953 = vadd.f32 %v1641, %v1809
      %v1954 = vadd.f32 %v1642, %v1809
      %v1955 = vadd.f32 %v1643, %v1809
      %v1956 = vadd.f32 %v1644, %v1809
      %v1957 = vadd.f32 %v1645, %v1809
      %v1958 = vadd.f32 %v1646, %v1809
      %v1959 = vadd.f32 %v1647, %v1814
      %v1960 = vadd.f32 %v1648, %v1814
      %v1961 = vadd.f32 %v1649, %v1814
      %v1962 = vadd.f32 %v1650, %v1814
      %v1963 = vadd.f32 %v1651, %v1814
      %v1964 = vadd.f32 %v1652, %v1814
      %v1965 = vadd.f32 %v1653, %v1814
      %v1966 = vadd.f32 %v1654, %v1819
      %v1967 = vadd.f32 %v1655, %v1819
      %v1968 = vadd.f32 %v1656, %v1819
      %v1969 = vadd.f32 %v1657, %v1819
      %v1970 = vadd.f32 %v1658, %v1819
      %v1971 = vadd.f32 %v1659, %v1819
      %v1972 = vadd.f32 %v1660, %v1819
      %v1973 = vadd.f32 %v1661, %v1824
      %v1974 = vadd.f32 %v1662, %v1824
      %v1975 = vadd.f32 %v1663, %v1824
      %v1976 = vadd.f32 %v1664, %v1824
      %v1977 = vadd.f32 %v1665, %v1824
      %v1978 = vadd.f32 %v1666, %v1824
      %v1979 = vadd.f32 %v1667, %v1824
      %v1980 = vadd.f32 %v1668, %v1829
      %v1981 = vadd.f32 %v1669, %v1829
      %v1982 = vadd.f32 %v1670, %v1829
      %v1983 = vadd.f32 %v1671, %v1829
      %v1984 = vadd.f32 %v1672, %v1829
      %v1985 = vadd.f32 %v1673, %v1829
      %v1986 = vadd.f32 %v1674, %v1829
      %v1987 = vadd.f32 %v1675, %v1834
      %v1988 = vadd.f32 %v1676, %v1834
      %v1989 = vadd.f32 %v1677, %v1834
      %v1990 = vadd.f32 %v1678, %v1834
      %v1991 = vadd.f32 %v1679, %v1834
      %v1992 = vadd.f32 %v1680, %v1834
      %v1993 = vadd.f32 %v1681, %v1834
      %v1994 = vadd.f32 %v1682, %v1839
      %v1995 = vadd.f32 %v1683, %v1839
      %v1996 = vadd.f32 %v1684, %v1839
      %v1997 = vadd.f32 %v1685, %v1839
      %v1998 = vadd.f32 %v1686, %v1839
      %v1999 = vadd.f32 %v1687, %v1839
      %v2000 = vadd.f32 %v1688, %v1839
      %v2001 = vadd.f32 %v1689, %v1844
      %v2002 = vadd.f32 %v1690, %v1844
      %v2003 = vadd.f32 %v1691, %v1844
      %v2004 = vadd.f32 %v1692, %v1844
      %v2005 = vadd.f32 %v1693, %v1844
      %v2006 = vadd.f32 %v1694, %v1844
      %v2007 = vadd.f32 %v1695, %v1844
      %v2008 = vadd.f32 %v1696, %v1849
      %v2009 = vadd.f32 %v1697, %v1849
      %v2010 = vadd.f32 %v1698, %v1849
      %v2011 = vadd.f32 %v1699, %v1849
      %v2012 = vadd.f32 %v1700, %v1849
      %v2013 = vadd.f32 %v1701, %v1849
      %v2014 = vadd.f32 %v1702, %v1849
      %v2015 = vadd.f32 %v1703, %v1854
      %v2016 = vadd.f32 %v1704, %v1854
      %v2017 = vadd.f32 %v1705, %v1854
      %v2018 = vadd.f32 %v1706, %v1854
      %v2019 = vadd.f32 %v1707, %v1854
      %v2020 = vadd.f32 %v1708, %v1854
      %v2021 = vadd.f32 %v1709, %v1854
      %v2022 = vadd.f32 %v1710, %v1859
      %v2023 = vadd.f32 %v1711, %v1859
      %v2024 = vadd.f32 %v1712, %v1859
      %v2025 = vadd.f32 %v1713, %v1859
      %v2026 = vadd.f32 %v1714, %v1859
      %v2027 = vadd.f32 %v1715, %v1859
      %v2028 = vadd.f32 %v1716, %v1859
      %v2029 = vadd.f32 %v1717, %v1864
      %v2030 = vadd.f32 %v1718, %v1864
      %v2031 = vadd.f32 %v1719, %v1864
      %v2032 = vadd.f32 %v1720, %v1864
      %v2033 = vadd.f32 %v1721, %v1864
      %v2034 = vadd.f32 %v1722, %v1864
      %v2035 = vadd.f32 %v1723, %v1864
      %v2036 = vadd.f32 %v1724, %v1869
      %v2037 = vadd.f32 %v1725, %v1869
      %v2038 = vadd.f32 %v1726, %v1869
      %v2039 = vadd.f32 %v1727, %v1869
      %v2040 = vadd.f32 %v1728, %v1869
      %v2041 = vadd.f32 %v1729, %v1869
      %v2042 = vadd.f32 %v1730, %v1869
      %v2043 = vadd.f32 %v1731, %v1874
      %v2044 = vadd.f32 %v1732, %v1874
      %v2045 = vadd.f32 %v1733, %v1874
      %v2046 = vadd.f32 %v1734, %v1874
      %v2047 = vadd.f32 %v1735, %v1874
      %v2048 = vadd.f32 %v1736, %v1874
      %v2049 = vadd.f32 %v1737, %v1874
      %v2050 = vadd.f32 %v1738, %v1879
      %v2051 = vadd.f32 %v1739, %v1879
      %v2052 = vadd.f32 %v1740, %v1879
      %v2053 = vadd.f32 %v1741, %v1879
      %v2054 = vadd.f32 %v1742, %v1879
      %v2055 = vadd.f32 %v1743, %v1879
      %v2056 = vadd.f32 %v1744, %v1879
      %v2057 = vadd.f32 %v1745, %v1884
      %v2058 = vadd.f32 %v1746, %v1884
      %v2059 = vadd.f32 %v1747, %v1884
      %v2060 = vadd.f32 %v1748, %v1884
      %v2061 = vadd.f32 %v1749, %v1884
      %v2062 = vadd.f32 %v1750, %v1884
      %v2063 = vadd.f32 %v1751, %v1884
      %v2064 = vadd.f32 %v1752, %v1889
      %v2065 = vadd.f32 %v1753, %v1889
      %v2066 = vadd.f32 %v1754, %v1889
      %v2067 = vadd.f32 %v1755, %v1889
      %v2068 = vadd.f32 %v1756, %v1889
      %v2069 = vadd.f32 %v1757, %v1889
      %v2070 = vadd.f32 %v1758, %v1889
      %v2071 = vadd.f32 %v1759, %v1894
      %v2072 = vadd.f32 %v1760, %v1894
      %v2073 = vadd.f32 %v1761, %v1894
      %v2074 = vadd.f32 %v1762, %v1894
      %v2075 = vadd.f32 %v1763, %v1894
      %v2076 = vadd.f32 %v1764, %v1894
      %v2077 = vadd.f32 %v1765, %v1894
      %v2078 = vmax.f32 %v1896, 0.0
      %v2079 = vmax.f32 %v1897, 0.0
      %v2080 = vmax.f32 %v1898, 0.0
      %v2081 = vmax.f32 %v1899, 0.0
      %v2082 = vmax.f32 %v1900, 0.0
      %v2083 = vmax.f32 %v1901, 0.0
      %v2084 = vmax.f32 %v1902, 0.0
      %v2085 = vmax.f32 %v1903, 0.0
      %v2086 = vmax.f32 %v1904, 0.0
      %v2087 = vmax.f32 %v1905, 0.0
      %v2088 = vmax.f32 %v1906, 0.0
      %v2089 = vmax.f32 %v1907, 0.0
      %v2090 = vmax.f32 %v1908, 0.0
      %v2091 = vmax.f32 %v1909, 0.0
      %v2092 = vmax.f32 %v1910, 0.0
      %v2093 = vmax.f32 %v1911, 0.0
      %v2094 = vmax.f32 %v1912, 0.0
      %v2095 = vmax.f32 %v1913, 0.0
      %v2096 = vmax.f32 %v1914, 0.0
      %v2097 = vmax.f32 %v1915, 0.0
      %v2098 = vmax.f32 %v1916, 0.0
      %v2099 = vmax.f32 %v1917, 0.0
      %v2100 = vmax.f32 %v1918, 0.0
      %v2101 = vmax.f32 %v1919, 0.0
      %v2102 = vmax.f32 %v1920, 0.0
      %v2103 = vmax.f32 %v1921, 0.0
      %v2104 = vmax.f32 %v1922, 0.0
      %v2105 = vmax.f32 %v1923, 0.0
      %v2106 = vmax.f32 %v1924, 0.0
      %v2107 = vmax.f32 %v1925, 0.0
      %v2108 = vmax.f32 %v1926, 0.0
      %v2109 = vmax.f32 %v1927, 0.0
      %v2110 = vmax.f32 %v1928, 0.0
      %v2111 = vmax.f32 %v1929, 0.0
      %v2112 = vmax.f32 %v1930, 0.0
      %v2113 = vmax.f32 %v1931, 0.0
      %v2114 = vmax.f32 %v1932, 0.0
      %v2115 = vmax.f32 %v1933, 0.0
      %v2116 = vmax.f32 %v1934, 0.0
      %v2117 = vmax.f32 %v1935, 0.0
      %v2118 = vmax.f32 %v1936, 0.0
      %v2119 = vmax.f32 %v1937, 0.0
      %v2120 = vmax.f32 %v1938, 0.0
      %v2121 = vmax.f32 %v1939, 0.0
      %v2122 = vmax.f32 %v1940, 0.0
      %v2123 = vmax.f32 %v1941, 0.0
      %v2124 = vmax.f32 %v1942, 0.0
      %v2125 = vmax.f32 %v1943, 0.0
      %v2126 = vmax.f32 %v1944, 0.0
      %v2127 = vmax.f32 %v1945, 0.0
      %v2128 = vmax.f32 %v1946, 0.0
      %v2129 = vmax.f32 %v1947, 0.0
      %v2130 = vmax.f32 %v1948, 0.0
      %v2131 = vmax.f32 %v1949, 0.0
      %v2132 = vmax.f32 %v1950, 0.0
      %v2133 = vmax.f32 %v1951, 0.0
      %v2134 = vmax.f32 %v1952, 0.0
      %v2135 = vmax.f32 %v1953, 0.0
      %v2136 = vmax.f32 %v1954, 0.0
      %v2137 = vmax.f32 %v1955, 0.0
      %v2138 = vmax.f32 %v1956, 0.0
      %v2139 = vmax.f32 %v1957, 0.0
      %v2140 = vmax.f32 %v1958, 0.0
      %v2141 = vmax.f32 %v1959, 0.0
      %v2142 = vmax.f32 %v1960, 0.0
      %v2143 = vmax.f32 %v1961, 0.0
      %v2144 = vmax.f32 %v1962, 0.0
      %v2145 = vmax.f32 %v1963, 0.0
      %v2146 = vmax.f32 %v1964, 0.0
      %v2147 = vmax.f32 %v1965, 0.0
      %v2148 = vmax.f32 %v1966, 0.0
      %v2149 = vmax.f32 %v1967, 0.0
      %v2150 = vmax.f32 %v1968, 0.0
      %v2151 = vmax.f32 %v1969, 0.0
      %v2152 = vmax.f32 %v1970, 0.0
      %v2153 = vmax.f32 %v1971, 0.0
      %v2154 = vmax.f32 %v1972, 0.0
      %v2155 = vmax.f32 %v1973, 0.0
      %v2156 = vmax.f32 %v1974, 0.0
      %v2157 = vmax.f32 %v1975, 0.0
      %v2158 = vmax.f32 %v1976, 0.0
      %v2159 = vmax.f32 %v1977, 0.0
      %v2160 = vmax.f32 %v1978, 0.0
      %v2161 = vmax.f32 %v1979, 0.0
      %v2162 = vmax.f32 %v1980, 0.0
      %v2163 = vmax.f32 %v1981, 0.0
      %v2164 = vmax.f32 %v1982, 0.0
      %v2165 = vmax.f32 %v1983, 0.0
      %v2166 = vmax.f32 %v1984, 0.0
      %v2167 = vmax.f32 %v1985, 0.0
      %v2168 = vmax.f32 %v1986, 0.0
      %v2169 = vmax.f32 %v1987, 0.0
      %v2170 = vmax.f32 %v1988, 0.0
      %v2171 = vmax.f32 %v1989, 0.0
      %v2172 = vmax.f32 %v1990, 0.0
      %v2173 = vmax.f32 %v1991, 0.0
      %v2174 = vmax.f32 %v1992, 0.0
      %v2175 = vmax.f32 %v1993, 0.0
      %v2176 = vmax.f32 %v1994, 0.0
      %v2177 = vmax.f32 %v1995, 0.0
      %v2178 = vmax.f32 %v1996, 0.0
      %v2179 = vmax.f32 %v1997, 0.0
      %v2180 = vmax.f32 %v1998, 0.0
      %v2181 = vmax.f32 %v1999, 0.0
      %v2182 = vmax.f32 %v2000, 0.0
      %v2183 = vmax.f32 %v2001, 0.0
      %v2184 = vmax.f32 %v2002, 0.0
      %v2185 = vmax.f32 %v2003, 0.0
      %v2186 = vmax.f32 %v2004, 0.0
      %v2187 = vmax.f32 %v2005, 0.0
      %v2188 = vmax.f32 %v2006, 0.0
      %v2189 = vmax.f32 %v2007, 0.0
      %v2190 = vmax.f32 %v2008, 0.0
      %v2191 = vmax.f32 %v2009, 0.0
      %v2192 = vmax.f32 %v2010, 0.0
      %v2193 = vmax.f32 %v2011, 0.0
      %v2194 = vmax.f32 %v2012, 0.0
      %v2195 = vmax.f32 %v2013, 0.0
      %v2196 = vmax.f32 %v2014, 0.0
      %v2197 = vmax.f32 %v2015, 0.0
      %v2198 = vmax.f32 %v2016, 0.0
      %v2199 = vmax.f32 %v2017, 0.0
      %v2200 = vmax.f32 %v2018, 0.0
      %v2201 = vmax.f32 %v2019, 0.0
      %v2202 = vmax.f32 %v2020, 0.0
      %v2203 = vmax.f32 %v2021, 0.0
      %v2204 = vmax.f32 %v2022, 0.0
      %v2205 = vmax.f32 %v2023, 0.0
      %v2206 = vmax.f32 %v2024, 0.0
      %v2207 = vmax.f32 %v2025, 0.0
      %v2208 = vmax.f32 %v2026, 0.0
      %v2209 = vmax.f32 %v2027, 0.0
      %v2210 = vmax.f32 %v2028, 0.0
      %v2211 = vmax.f32 %v2029, 0.0
      %v2212 = vmax.f32 %v2030, 0.0
      %v2213 = vmax.f32 %v2031, 0.0
      %v2214 = vmax.f32 %v2032, 0.0
      %v2215 = vmax.f32 %v2033, 0.0
      %v2216 = vmax.f32 %v2034, 0.0
      %v2217 = vmax.f32 %v2035, 0.0
      %v2218 = vmax.f32 %v2036, 0.0
      %v2219 = vmax.f32 %v2037, 0.0
      %v2220 = vmax.f32 %v2038, 0.0
      %v2221 = vmax.f32 %v2039, 0.0
      %v2222 = vmax.f32 %v2040, 0.0
      %v2223 = vmax.f32 %v2041, 0.0
      %v2224 = vmax.f32 %v2042, 0.0
      %v2225 = vmax.f32 %v2043, 0.0
      %v2226 = vmax.f32 %v2044, 0.0
      %v2227 = vmax.f32 %v2045, 0.0
      %v2228 = vmax.f32 %v2046, 0.0
      %v2229 = vmax.f32 %v2047, 0.0
      %v2230 = vmax.f32 %v2048, 0.0
      %v2231 = vmax.f32 %v2049, 0.0
      %v2232 = vmax.f32 %v2050, 0.0
      %v2233 = vmax.f32 %v2051, 0.0
      %v2234 = vmax.f32 %v2052, 0.0
      %v2235 = vmax.f32 %v2053, 0.0
      %v2236 = vmax.f32 %v2054, 0.0
      %v2237 = vmax.f32 %v2055, 0.0
      %v2238 = vmax.f32 %v2056, 0.0
      %v2239 = vmax.f32 %v2057, 0.0
      %v2240 = vmax.f32 %v2058, 0.0
      %v2241 = vmax.f32 %v2059, 0.0
      %v2242 = vmax.f32 %v2060, 0.0
      %v2243 = vmax.f32 %v2061, 0.0
      %v2244 = vmax.f32 %v2062, 0.0
      %v2245 = vmax.f32 %v2063, 0.0
      %v2246 = vmax.f32 %v2064, 0.0
      %v2247 = vmax.f32 %v2065, 0.0
      %v2248 = vmax.f32 %v2066, 0.0
      %v2249 = vmax.f32 %v2067, 0.0
      %v2250 = vmax.f32 %v2068, 0.0
      %v2251 = vmax.f32 %v2069, 0.0
      %v2252 = vmax.f32 %v2070, 0.0
      %v2253 = vmax.f32 %v2071, 0.0
      %v2254 = vmax.f32 %v2072, 0.0
      %v2255 = vmax.f32 %v2073, 0.0
      %v2256 = vmax.f32 %v2074, 0.0
      %v2257 = vmax.f32 %v2075, 0.0
      %v2258 = vmax.f32 %v2076, 0.0
      %v2259 = vmax.f32 %v2077, 0.0
      %v2260 = vpack.c.bf16 %v2085, %v2078
      %v2261 = vpack.c.bf16 %v2086, %v2079
      %v2262 = vpack.c.bf16 %v2087, %v2080
      %v2263 = vpack.c.bf16 %v2088, %v2081
      %v2264 = vpack.c.bf16 %v2089, %v2082
      %v2265 = vpack.c.bf16 %v2090, %v2083
      %v2266 = vpack.c.bf16 %v2091, %v2084
      %v2267 = vpack.c.bf16 %v2099, %v2092
      %v2268 = vpack.c.bf16 %v2100, %v2093
      %v2269 = vpack.c.bf16 %v2101, %v2094
      %v2270 = vpack.c.bf16 %v2102, %v2095
      %v2271 = vpack.c.bf16 %v2103, %v2096
      %v2272 = vpack.c.bf16 %v2104, %v2097
      %v2273 = vpack.c.bf16 %v2105, %v2098
      %v2274 = vpack.c.bf16 %v2113, %v2106
      %v2275 = vpack.c.bf16 %v2114, %v2107
      %v2276 = vpack.c.bf16 %v2115, %v2108
      %v2277 = vpack.c.bf16 %v2116, %v2109
      %v2278 = vpack.c.bf16 %v2117, %v2110
      %v2279 = vpack.c.bf16 %v2118, %v2111
      %v2280 = vpack.c.bf16 %v2119, %v2112
      %v2281 = vpack.c.bf16 %v2127, %v2120
      %v2282 = vpack.c.bf16 %v2128, %v2121
      %v2283 = vpack.c.bf16 %v2129, %v2122
      %v2284 = vpack.c.bf16 %v2130, %v2123
      %v2285 = vpack.c.bf16 %v2131, %v2124
      %v2286 = vpack.c.bf16 %v2132, %v2125
      %v2287 = vpack.c.bf16 %v2133, %v2126
      %v2288 = vpack.c.bf16 %v2141, %v2134
      %v2289 = vpack.c.bf16 %v2142, %v2135
      %v2290 = vpack.c.bf16 %v2143, %v2136
      %v2291 = vpack.c.bf16 %v2144, %v2137
      %v2292 = vpack.c.bf16 %v2145, %v2138
      %v2293 = vpack.c.bf16 %v2146, %v2139
      %v2294 = vpack.c.bf16 %v2147, %v2140
      %v2295 = vpack.c.bf16 %v2155, %v2148
      %v2296 = vpack.c.bf16 %v2156, %v2149
      %v2297 = vpack.c.bf16 %v2157, %v2150
      %v2298 = vpack.c.bf16 %v2158, %v2151
      %v2299 = vpack.c.bf16 %v2159, %v2152
      %v2300 = vpack.c.bf16 %v2160, %v2153
      %v2301 = vpack.c.bf16 %v2161, %v2154
      %v2302 = vpack.c.bf16 %v2169, %v2162
      %v2303 = vpack.c.bf16 %v2170, %v2163
      %v2304 = vpack.c.bf16 %v2171, %v2164
      %v2305 = vpack.c.bf16 %v2172, %v2165
      %v2306 = vpack.c.bf16 %v2173, %v2166
      %v2307 = vpack.c.bf16 %v2174, %v2167
      %v2308 = vpack.c.bf16 %v2175, %v2168
      %v2309 = vpack.c.bf16 %v2183, %v2176
      %v2310 = vpack.c.bf16 %v2184, %v2177
      %v2311 = vpack.c.bf16 %v2185, %v2178
      %v2312 = vpack.c.bf16 %v2186, %v2179
      %v2313 = vpack.c.bf16 %v2187, %v2180
      %v2314 = vpack.c.bf16 %v2188, %v2181
      %v2315 = vpack.c.bf16 %v2189, %v2182
      %v2316 = vpack.c.bf16 %v2197, %v2190
      %v2317 = vpack.c.bf16 %v2198, %v2191
      %v2318 = vpack.c.bf16 %v2199, %v2192
      %v2319 = vpack.c.bf16 %v2200, %v2193
      %v2320 = vpack.c.bf16 %v2201, %v2194
      %v2321 = vpack.c.bf16 %v2202, %v2195
      %v2322 = vpack.c.bf16 %v2203, %v2196
      %v2323 = vpack.c.bf16 %v2211, %v2204
      %v2324 = vpack.c.bf16 %v2212, %v2205
      %v2325 = vpack.c.bf16 %v2213, %v2206
      %v2326 = vpack.c.bf16 %v2214, %v2207
      %v2327 = vpack.c.bf16 %v2215, %v2208
      %v2328 = vpack.c.bf16 %v2216, %v2209
      %v2329 = vpack.c.bf16 %v2217, %v2210
      %v2330 = vpack.c.bf16 %v2225, %v2218
      %v2331 = vpack.c.bf16 %v2226, %v2219
      %v2332 = vpack.c.bf16 %v2227, %v2220
      %v2333 = vpack.c.bf16 %v2228, %v2221
      %v2334 = vpack.c.bf16 %v2229, %v2222
      %v2335 = vpack.c.bf16 %v2230, %v2223
      %v2336 = vpack.c.bf16 %v2231, %v2224
      %v2337 = vpack.c.bf16 %v2239, %v2232
      %v2338 = vpack.c.bf16 %v2240, %v2233
      %v2339 = vpack.c.bf16 %v2241, %v2234
      %v2340 = vpack.c.bf16 %v2242, %v2235
      %v2341 = vpack.c.bf16 %v2243, %v2236
      %v2342 = vpack.c.bf16 %v2244, %v2237
      %v2343 = vpack.c.bf16 %v2245, %v2238
      %v2344 = vpack.c.bf16 %v2253, %v2246
      %v2345 = vpack.c.bf16 %v2254, %v2247
      %v2346 = vpack.c.bf16 %v2255, %v2248
      %v2347 = vpack.c.bf16 %v2256, %v2249
      %v2348 = vpack.c.bf16 %v2257, %v2250
      %v2349 = vpack.c.bf16 %v2258, %v2251
      %v2350 = vpack.c.bf16 %v2259, %v2252
      %v2351 = vld [vmem:[%s223] sm:$0xff]
      %v2352 = vld [vmem:[%s223 + $0x8] sm:$0xff]
      %v2353 = vld [vmem:[%s223 + $0x10] sm:$0xff]
      %v2354 = vld [vmem:[%s223 + $0x18] sm:$0xff]
      %v2355 = vld [vmem:[%s223 + $0x20] sm:$0xff]
      %v2356 = vld [vmem:[%s223 + $0x28] sm:$0xff]
      %v2357 = vld [vmem:[%s223 + $0x30] sm:$0xff]
      %v2358 = vld [vmem:[%s223 + $0x38] sm:$0xff]
      %v2359 = vld [vmem:[%s223 + $0x40] sm:$0xff]
      %v2360 = vld [vmem:[%s223 + $0x48] sm:$0xff]
      %v2361 = vld [vmem:[%s223 + $0x50] sm:$0xff]
      %v2362 = vld [vmem:[%s223 + $0x58] sm:$0xff]
      %v2363 = vld [vmem:[%s223 + $0x60] sm:$0xff]
      %v2364 = vld [vmem:[%s223 + $0x68] sm:$0xff]
      %v2365 = vld [vmem:[%s223 + $0x70] sm:$0xff]
      %v2366 = vld [vmem:[%s223 + $0x78] sm:$0xff]
      %v2367 = vld [vmem:[%s223 + $0x80] sm:$0xff]
      %v2368 = vld [vmem:[%s223 + $0x88] sm:$0xff]
      %v2369 = vld [vmem:[%s223 + $0x90] sm:$0xff]
      %v2370 = vld [vmem:[%s223 + $0x98] sm:$0xff]
      %v2371 = vld [vmem:[%s223 + $0xa0] sm:$0xff]
      %v2372 = vld [vmem:[%s223 + $0xa8] sm:$0xff]
      %v2373 = vld [vmem:[%s223 + $0xb0] sm:$0xff]
      %v2374 = vld [vmem:[%s223 + $0xb8] sm:$0xff]
      %v2399 = vunpack.c.l.b16 %v2351
      %v2400 = vunpack.c.h.b16 %v2351
      %v2401 = vunpack.c.l.b16 %v2352
      %v2402 = vunpack.c.h.b16 %v2352
      %v2403 = vunpack.c.l.b16 %v2353
      %v2404 = vunpack.c.h.b16 %v2353
      %v2405 = vunpack.c.l.b16 %v2354
      %v2406 = vunpack.c.h.b16 %v2354
      %v2407 = vunpack.c.l.b16 %v2355
      %v2408 = vunpack.c.h.b16 %v2355
      %v2409 = vunpack.c.l.b16 %v2356
      %v2410 = vunpack.c.h.b16 %v2356
      %v2411 = vunpack.c.l.b16 %v2357
      %v2412 = vunpack.c.h.b16 %v2357
      %v2413 = vunpack.c.l.b16 %v2358
      %v2414 = vunpack.c.h.b16 %v2358
      %v2415 = vunpack.c.l.b16 %v2359
      %v2416 = vunpack.c.h.b16 %v2359
      %v2417 = vunpack.c.l.b16 %v2360
      %v2418 = vunpack.c.h.b16 %v2360
      %v2419 = vunpack.c.l.b16 %v2361
      %v2420 = vunpack.c.h.b16 %v2361
      %v2421 = vunpack.c.l.b16 %v2362
      %v2422 = vunpack.c.h.b16 %v2362
      %v2423 = vunpack.c.l.b16 %v2363
      %v2424 = vunpack.c.h.b16 %v2363
      %v2425 = vunpack.c.l.b16 %v2364
      %v2426 = vunpack.c.h.b16 %v2364
      %v2427 = vunpack.c.l.b16 %v2365
      %v2428 = vunpack.c.h.b16 %v2365
      %v2429 = vunpack.c.l.b16 %v2366
      %v2430 = vunpack.c.h.b16 %v2366
      %v2431 = vunpack.c.l.b16 %v2367
      %v2432 = vunpack.c.h.b16 %v2367
      %v2433 = vunpack.c.l.b16 %v2368
      %v2434 = vunpack.c.h.b16 %v2368
      %v2435 = vunpack.c.l.b16 %v2369
      %v2436 = vunpack.c.h.b16 %v2369
      %v2437 = vunpack.c.l.b16 %v2370
      %v2438 = vunpack.c.h.b16 %v2370
      %v2439 = vunpack.c.l.b16 %v2371
      %v2440 = vunpack.c.h.b16 %v2371
      %v2441 = vunpack.c.l.b16 %v2372
      %v2442 = vunpack.c.h.b16 %v2372
      %v2443 = vunpack.c.l.b16 %v2373
      %v2444 = vunpack.c.h.b16 %v2373
      %v2445 = vunpack.c.l.b16 %v2374
      %v2446 = vunpack.c.h.b16 %v2374
      %v2447 = vpack.c.b16 %v2401, %v2399
      %v2448 = vpack.c.b16 %v2402, %v2400
      %v2449 = vpack.c.b16 %v2405, %v2403
      %v2450 = vpack.c.b16 %v2406, %v2404
      %v2451 = vpack.c.b16 %v2409, %v2407
      %v2452 = vpack.c.b16 %v2410, %v2408
      %v2453 = vpack.c.b16 %v2413, %v2411
      %v2454 = vpack.c.b16 %v2414, %v2412
      %v2455 = vpack.c.b16 %v2417, %v2415
      %v2456 = vpack.c.b16 %v2418, %v2416
      %v2457 = vpack.c.b16 %v2421, %v2419
      %v2458 = vpack.c.b16 %v2422, %v2420
      %v2459 = vpack.c.b16 %v2425, %v2423
      %v2460 = vpack.c.b16 %v2426, %v2424
      %v2461 = vpack.c.b16 %v2429, %v2427
      %v2462 = vpack.c.b16 %v2430, %v2428
      %v2463 = vpack.c.b16 %v2433, %v2431
      %v2464 = vpack.c.b16 %v2434, %v2432
      %v2465 = vpack.c.b16 %v2437, %v2435
      %v2466 = vpack.c.b16 %v2438, %v2436
      %v2467 = vpack.c.b16 %v2441, %v2439
      %v2468 = vpack.c.b16 %v2442, %v2440
      %v2469 = vpack.c.b16 %v2445, %v2443
      %v2470 = vpack.c.b16 %v2446, %v2444
      %vm2483 = vcmask 654336
      %v2485 = vsel %vm2483, %v2448, 0
      %v2488 = vsel %vm2483, %v2450, 0
      %v2491 = vsel %vm2483, %v2452, 0
      %v2494 = vsel %vm2483, %v2454, 0
      %v2497 = vsel %vm2483, %v2456, 0
      %v2500 = vsel %vm2483, %v2458, 0
      %v2503 = vsel %vm2483, %v2460, 0
      %v2506 = vsel %vm2483, %v2462, 0
      %v2509 = vsel %vm2483, %v2464, 0
      %v2512 = vsel %vm2483, %v2466, 0
      %v2515 = vsel %vm2483, %v2468, 0
      %v2518 = vsel %vm2483, %v2470, 0
      %2520 = vmatprep.subr.bf16.mxu0 %v2310
      %2521 = vmatpush1.bf16.msra.mxu0 %v2309
      %2522 = vmatprep.subr.bf16.mxu0 %v2303
      %2523 = vmatpush1.bf16.msra.mxu0 %v2302
      %2524 = vmatprep.subr.bf16.mxu0 %v2296
      %2525 = vmatpush1.bf16.msra.mxu0 %v2295
      %2526 = vmatprep.subr.bf16.mxu0 %v2289
      %2527 = vmatpush1.bf16.msra.mxu0 %v2288
      %2528 = vmatprep.subr.bf16.mxu0 %v2282
      %2529 = vmatpush1.bf16.msra.mxu0 %v2281
      %2530 = vmatprep.subr.bf16.mxu0 %v2275
      %2531 = vmatpush1.bf16.msra.mxu0 %v2274
      %2532 = vmatprep.subr.bf16.mxu0 %v2268
      %2533 = vmatpush1.bf16.msra.mxu0 %v2267
      %2534 = vmatprep.subr.bf16.mxu0 %v2261
      %2535 = vmatpush1.bf16.msra.mxu0 %v2260
      %2536 = vmatprep.subr.bf16.mxu0 0
      %2537 = vmatpush2.bf16.msra.mxu0 0
      %2538 = vmatprep.subr.bf16.mxu0 0
      %2539 = vmatpush2.bf16.msra.mxu0 0
      %2540 = vmatprep.subr.bf16.mxu0 0
      %2541 = vmatpush2.bf16.msra.mxu0 0
      %2542 = vmatprep.subr.bf16.mxu0 %v2345
      %2543 = vmatpush2.bf16.msra.mxu0 %v2344
      %2544 = vmatprep.subr.bf16.mxu0 %v2338
      %2545 = vmatpush2.bf16.msra.mxu0 %v2337
      %2546 = vmatprep.subr.bf16.mxu0 %v2331
      %2547 = vmatpush2.bf16.msra.mxu0 %v2330
      %2548 = vmatprep.subr.bf16.mxu0 %v2324
      %2549 = vmatpush2.bf16.msra.mxu0 %v2323
      %2550 = vmatprep.subr.bf16.mxu0 %v2317
      %2551 = vmatpush2.bf16.msra.mxu0 %v2316
      %2552 = vmatprep.mubr.bf16.mxu0 %v2485
      %2553 = vmatmul.mubr.bf16.gmra.mxu0 %v2447
      %v2554 = vpop.f32.mrf.mxu0
      %v2555 = vadd.f32 0.0, %v2554
      %v2556 = vpop.f32.mrf.mxu0
      %v2557 = vadd.f32 0.0, %v2556
      %v2558 = vpop.f32.mrf.mxu0
      %v2559 = vadd.f32 0.0, %v2558
      %v2560 = vpop.f32.mrf.mxu0
      %v2561 = vadd.f32 0.0, %v2560
      %2562 = vmatprep.mubr.bf16.mxu0 %v2488
      %2563 = vmatmul.mubr.bf16.gmra.mxu0 %v2449
      %v2564 = vpop.f32.mrf.mxu0
      %v2565 = vadd.f32 0.0, %v2564
      %v2566 = vpop.f32.mrf.mxu0
      %v2567 = vadd.f32 0.0, %v2566
      %v2568 = vpop.f32.mrf.mxu0
      %v2569 = vadd.f32 0.0, %v2568
      %v2570 = vpop.f32.mrf.mxu0
      %v2571 = vadd.f32 0.0, %v2570
      %2572 = vmatprep.mubr.bf16.mxu0 %v2491
      %2573 = vmatmul.mubr.bf16.gmra.mxu0 %v2451
      %v2574 = vpop.f32.mrf.mxu0
      %v2575 = vadd.f32 0.0, %v2574
      %v2576 = vpop.f32.mrf.mxu0
      %v2577 = vadd.f32 0.0, %v2576
      %v2578 = vpop.f32.mrf.mxu0
      %v2579 = vadd.f32 0.0, %v2578
      %v2580 = vpop.f32.mrf.mxu0
      %v2581 = vadd.f32 0.0, %v2580
      %2582 = vmatprep.mubr.bf16.mxu0 %v2494
      %2583 = vmatmul.mubr.bf16.gmra.mxu0 %v2453
      %v2584 = vpop.f32.mrf.mxu0
      %v2585 = vadd.f32 0.0, %v2584
      %v2586 = vpop.f32.mrf.mxu0
      %v2587 = vadd.f32 0.0, %v2586
      %v2588 = vpop.f32.mrf.mxu0
      %v2589 = vadd.f32 0.0, %v2588
      %v2590 = vpop.f32.mrf.mxu0
      %v2591 = vadd.f32 0.0, %v2590
      %2592 = vmatprep.mubr.bf16.mxu0 %v2497
      %2593 = vmatmul.mubr.bf16.gmra.mxu0 %v2455
      %v2594 = vpop.f32.mrf.mxu0
      %v2595 = vadd.f32 0.0, %v2594
      %v2596 = vpop.f32.mrf.mxu0
      %v2597 = vadd.f32 0.0, %v2596
      %v2598 = vpop.f32.mrf.mxu0
      %v2599 = vadd.f32 0.0, %v2598
      %v2600 = vpop.f32.mrf.mxu0
      %v2601 = vadd.f32 0.0, %v2600
      %2602 = vmatprep.mubr.bf16.mxu0 %v2500
      %2603 = vmatmul.mubr.bf16.gmra.mxu0 %v2457
      %v2604 = vpop.f32.mrf.mxu0
      %v2605 = vadd.f32 0.0, %v2604
      %v2606 = vpop.f32.mrf.mxu0
      %v2607 = vadd.f32 0.0, %v2606
      %v2608 = vpop.f32.mrf.mxu0
      %v2609 = vadd.f32 0.0, %v2608
      %v2610 = vpop.f32.mrf.mxu0
      %v2611 = vadd.f32 0.0, %v2610
      %2612 = vmatprep.mubr.bf16.mxu0 %v2503
      %2613 = vmatmul.mubr.bf16.gmra.mxu0 %v2459
      %v2614 = vpop.f32.mrf.mxu0
      %v2615 = vadd.f32 0.0, %v2614
      %v2616 = vpop.f32.mrf.mxu0
      %v2617 = vadd.f32 0.0, %v2616
      %v2618 = vpop.f32.mrf.mxu0
      %v2619 = vadd.f32 0.0, %v2618
      %v2620 = vpop.f32.mrf.mxu0
      %v2621 = vadd.f32 0.0, %v2620
      %2622 = vmatprep.mubr.bf16.mxu0 %v2506
      %2623 = vmatmul.mubr.bf16.gmra.mxu0 %v2461
      %v2624 = vpop.f32.mrf.mxu0
      %v2625 = vadd.f32 0.0, %v2624
      %v2626 = vpop.f32.mrf.mxu0
      %v2627 = vadd.f32 0.0, %v2626
      %v2628 = vpop.f32.mrf.mxu0
      %v2629 = vadd.f32 0.0, %v2628
      %v2630 = vpop.f32.mrf.mxu0
      %v2631 = vadd.f32 0.0, %v2630
      %2632 = vmatprep.mubr.bf16.mxu0 %v2509
      %2633 = vmatmul.mubr.bf16.gmra.mxu0 %v2463
      %v2634 = vpop.f32.mrf.mxu0
      %v2635 = vadd.f32 0.0, %v2634
      %v2636 = vpop.f32.mrf.mxu0
      %v2637 = vadd.f32 0.0, %v2636
      %v2638 = vpop.f32.mrf.mxu0
      %v2639 = vadd.f32 0.0, %v2638
      %v2640 = vpop.f32.mrf.mxu0
      %v2641 = vadd.f32 0.0, %v2640
      %2642 = vmatprep.mubr.bf16.mxu0 %v2512
      %2643 = vmatmul.mubr.bf16.gmra.mxu0 %v2465
      %v2644 = vpop.f32.mrf.mxu0
      %v2645 = vadd.f32 0.0, %v2644
      %v2646 = vpop.f32.mrf.mxu0
      %v2647 = vadd.f32 0.0, %v2646
      %v2648 = vpop.f32.mrf.mxu0
      %v2649 = vadd.f32 0.0, %v2648
      %v2650 = vpop.f32.mrf.mxu0
      %v2651 = vadd.f32 0.0, %v2650
      %2652 = vmatprep.mubr.bf16.mxu0 %v2515
      %2653 = vmatmul.mubr.bf16.gmra.mxu0 %v2467
      %v2654 = vpop.f32.mrf.mxu0
      %v2655 = vadd.f32 0.0, %v2654
      %v2656 = vpop.f32.mrf.mxu0
      %v2657 = vadd.f32 0.0, %v2656
      %v2658 = vpop.f32.mrf.mxu0
      %v2659 = vadd.f32 0.0, %v2658
      %v2660 = vpop.f32.mrf.mxu0
      %v2661 = vadd.f32 0.0, %v2660
      %2662 = vmatprep.mubr.bf16.mxu0 %v2518
      %2663 = vmatmul.mubr.bf16.gmra.mxu0 %v2469
      %v2664 = vpop.f32.mrf.mxu0
      %v2665 = vadd.f32 0.0, %v2664
      %v2666 = vpop.f32.mrf.mxu0
      %v2667 = vadd.f32 0.0, %v2666
      %v2668 = vpop.f32.mrf.mxu0
      %v2669 = vadd.f32 0.0, %v2668
      %v2670 = vpop.f32.mrf.mxu0
      %v2671 = vadd.f32 0.0, %v2670
      %2672 = vdwg.mxu0
      %2673 = vmatprep.subr.bf16.mxu0 %v2312
      %2674 = vmatpush1.bf16.msra.mxu0 %v2311
      %2675 = vmatprep.subr.bf16.mxu0 %v2305
      %2676 = vmatpush1.bf16.msra.mxu0 %v2304
      %2677 = vmatprep.subr.bf16.mxu0 %v2298
      %2678 = vmatpush1.bf16.msra.mxu0 %v2297
      %2679 = vmatprep.subr.bf16.mxu0 %v2291
      %2680 = vmatpush1.bf16.msra.mxu0 %v2290
      %2681 = vmatprep.subr.bf16.mxu0 %v2284
      %2682 = vmatpush1.bf16.msra.mxu0 %v2283
      %2683 = vmatprep.subr.bf16.mxu0 %v2277
      %2684 = vmatpush1.bf16.msra.mxu0 %v2276
      %2685 = vmatprep.subr.bf16.mxu0 %v2270
      %2686 = vmatpush1.bf16.msra.mxu0 %v2269
      %2687 = vmatprep.subr.bf16.mxu0 %v2263
      %2688 = vmatpush1.bf16.msra.mxu0 %v2262
      %2689 = vmatprep.subr.bf16.mxu0 0
      %2690 = vmatpush2.bf16.msra.mxu0 0
      %2691 = vmatprep.subr.bf16.mxu0 0
      %2692 = vmatpush2.bf16.msra.mxu0 0
      %2693 = vmatprep.subr.bf16.mxu0 0
      %2694 = vmatpush2.bf16.msra.mxu0 0
      %2695 = vmatprep.subr.bf16.mxu0 %v2347
      %2696 = vmatpush2.bf16.msra.mxu0 %v2346
      %2697 = vmatprep.subr.bf16.mxu0 %v2340
      %2698 = vmatpush2.bf16.msra.mxu0 %v2339
      %2699 = vmatprep.subr.bf16.mxu0 %v2333
      %2700 = vmatpush2.bf16.msra.mxu0 %v2332
      %2701 = vmatprep.subr.bf16.mxu0 %v2326
      %2702 = vmatpush2.bf16.msra.mxu0 %v2325
      %2703 = vmatprep.subr.bf16.mxu0 %v2319
      %2704 = vmatpush2.bf16.msra.mxu0 %v2318
      %2705 = vmatprep.mubr.bf16.mxu0 %v2485
      %2706 = vmatmul.mubr.bf16.gmra.mxu0 %v2447
      %v2707 = vpop.f32.mrf.mxu0
      %v2708 = vadd.f32 0.0, %v2707
      %v2709 = vpop.f32.mrf.mxu0
      %v2710 = vadd.f32 0.0, %v2709
      %v2711 = vpop.f32.mrf.mxu0
      %v2712 = vadd.f32 0.0, %v2711
      %v2713 = vpop.f32.mrf.mxu0
      %v2714 = vadd.f32 0.0, %v2713
      %2715 = vmatprep.mubr.bf16.mxu0 %v2488
      %2716 = vmatmul.mubr.bf16.gmra.mxu0 %v2449
      %v2717 = vpop.f32.mrf.mxu0
      %v2718 = vadd.f32 0.0, %v2717
      %v2719 = vpop.f32.mrf.mxu0
      %v2720 = vadd.f32 0.0, %v2719
      %v2721 = vpop.f32.mrf.mxu0
      %v2722 = vadd.f32 0.0, %v2721
      %v2723 = vpop.f32.mrf.mxu0
      %v2724 = vadd.f32 0.0, %v2723
      %2725 = vmatprep.mubr.bf16.mxu0 %v2491
      %2726 = vmatmul.mubr.bf16.gmra.mxu0 %v2451
      %v2727 = vpop.f32.mrf.mxu0
      %v2728 = vadd.f32 0.0, %v2727
      %v2729 = vpop.f32.mrf.mxu0
      %v2730 = vadd.f32 0.0, %v2729
      %v2731 = vpop.f32.mrf.mxu0
      %v2732 = vadd.f32 0.0, %v2731
      %v2733 = vpop.f32.mrf.mxu0
      %v2734 = vadd.f32 0.0, %v2733
      %2735 = vmatprep.mubr.bf16.mxu0 %v2494
      %2736 = vmatmul.mubr.bf16.gmra.mxu0 %v2453
      %v2737 = vpop.f32.mrf.mxu0
      %v2738 = vadd.f32 0.0, %v2737
      %v2739 = vpop.f32.mrf.mxu0
      %v2740 = vadd.f32 0.0, %v2739
      %v2741 = vpop.f32.mrf.mxu0
      %v2742 = vadd.f32 0.0, %v2741
      %v2743 = vpop.f32.mrf.mxu0
      %v2744 = vadd.f32 0.0, %v2743
      %2745 = vmatprep.mubr.bf16.mxu0 %v2497
      %2746 = vmatmul.mubr.bf16.gmra.mxu0 %v2455
      %v2747 = vpop.f32.mrf.mxu0
      %v2748 = vadd.f32 0.0, %v2747
      %v2749 = vpop.f32.mrf.mxu0
      %v2750 = vadd.f32 0.0, %v2749
      %v2751 = vpop.f32.mrf.mxu0
      %v2752 = vadd.f32 0.0, %v2751
      %v2753 = vpop.f32.mrf.mxu0
      %v2754 = vadd.f32 0.0, %v2753
      %2755 = vmatprep.mubr.bf16.mxu0 %v2500
      %2756 = vmatmul.mubr.bf16.gmra.mxu0 %v2457
      %v2757 = vpop.f32.mrf.mxu0
      %v2758 = vadd.f32 0.0, %v2757
      %v2759 = vpop.f32.mrf.mxu0
      %v2760 = vadd.f32 0.0, %v2759
      %v2761 = vpop.f32.mrf.mxu0
      %v2762 = vadd.f32 0.0, %v2761
      %v2763 = vpop.f32.mrf.mxu0
      %v2764 = vadd.f32 0.0, %v2763
      %2765 = vmatprep.mubr.bf16.mxu0 %v2503
      %2766 = vmatmul.mubr.bf16.gmra.mxu0 %v2459
      %v2767 = vpop.f32.mrf.mxu0
      %v2768 = vadd.f32 0.0, %v2767
      %v2769 = vpop.f32.mrf.mxu0
      %v2770 = vadd.f32 0.0, %v2769
      %v2771 = vpop.f32.mrf.mxu0
      %v2772 = vadd.f32 0.0, %v2771
      %v2773 = vpop.f32.mrf.mxu0
      %v2774 = vadd.f32 0.0, %v2773
      %2775 = vmatprep.mubr.bf16.mxu0 %v2506
      %2776 = vmatmul.mubr.bf16.gmra.mxu0 %v2461
      %v2777 = vpop.f32.mrf.mxu0
      %v2778 = vadd.f32 0.0, %v2777
      %v2779 = vpop.f32.mrf.mxu0
      %v2780 = vadd.f32 0.0, %v2779
      %v2781 = vpop.f32.mrf.mxu0
      %v2782 = vadd.f32 0.0, %v2781
      %v2783 = vpop.f32.mrf.mxu0
      %v2784 = vadd.f32 0.0, %v2783
      %2785 = vmatprep.mubr.bf16.mxu0 %v2509
      %2786 = vmatmul.mubr.bf16.gmra.mxu0 %v2463
      %v2787 = vpop.f32.mrf.mxu0
      %v2788 = vadd.f32 0.0, %v2787
      %v2789 = vpop.f32.mrf.mxu0
      %v2790 = vadd.f32 0.0, %v2789
      %v2791 = vpop.f32.mrf.mxu0
      %v2792 = vadd.f32 0.0, %v2791
      %v2793 = vpop.f32.mrf.mxu0
      %v2794 = vadd.f32 0.0, %v2793
      %2795 = vmatprep.mubr.bf16.mxu0 %v2512
      %2796 = vmatmul.mubr.bf16.gmra.mxu0 %v2465
      %v2797 = vpop.f32.mrf.mxu0
      %v2798 = vadd.f32 0.0, %v2797
      %v2799 = vpop.f32.mrf.mxu0
      %v2800 = vadd.f32 0.0, %v2799
      %v2801 = vpop.f32.mrf.mxu0
      %v2802 = vadd.f32 0.0, %v2801
      %v2803 = vpop.f32.mrf.mxu0
      %v2804 = vadd.f32 0.0, %v2803
      %2805 = vmatprep.mubr.bf16.mxu0 %v2515
      %2806 = vmatmul.mubr.bf16.gmra.mxu0 %v2467
      %v2807 = vpop.f32.mrf.mxu0
      %v2808 = vadd.f32 0.0, %v2807
      %v2809 = vpop.f32.mrf.mxu0
      %v2810 = vadd.f32 0.0, %v2809
      %v2811 = vpop.f32.mrf.mxu0
      %v2812 = vadd.f32 0.0, %v2811
      %v2813 = vpop.f32.mrf.mxu0
      %v2814 = vadd.f32 0.0, %v2813
      %2815 = vmatprep.mubr.bf16.mxu0 %v2518
      %2816 = vmatmul.mubr.bf16.gmra.mxu0 %v2469
      %v2817 = vpop.f32.mrf.mxu0
      %v2818 = vadd.f32 0.0, %v2817
      %v2819 = vpop.f32.mrf.mxu0
      %v2820 = vadd.f32 0.0, %v2819
      %v2821 = vpop.f32.mrf.mxu0
      %v2822 = vadd.f32 0.0, %v2821
      %v2823 = vpop.f32.mrf.mxu0
      %v2824 = vadd.f32 0.0, %v2823
      %2825 = vdwg.mxu0
      %2826 = vmatprep.subr.bf16.mxu0 %v2314
      %2827 = vmatpush1.bf16.msra.mxu0 %v2313
      %2828 = vmatprep.subr.bf16.mxu0 %v2307
      %2829 = vmatpush1.bf16.msra.mxu0 %v2306
      %2830 = vmatprep.subr.bf16.mxu0 %v2300
      %2831 = vmatpush1.bf16.msra.mxu0 %v2299
      %2832 = vmatprep.subr.bf16.mxu0 %v2293
      %2833 = vmatpush1.bf16.msra.mxu0 %v2292
      %2834 = vmatprep.subr.bf16.mxu0 %v2286
      %2835 = vmatpush1.bf16.msra.mxu0 %v2285
      %2836 = vmatprep.subr.bf16.mxu0 %v2279
      %2837 = vmatpush1.bf16.msra.mxu0 %v2278
      %2838 = vmatprep.subr.bf16.mxu0 %v2272
      %2839 = vmatpush1.bf16.msra.mxu0 %v2271
      %2840 = vmatprep.subr.bf16.mxu0 %v2265
      %2841 = vmatpush1.bf16.msra.mxu0 %v2264
      %2842 = vmatprep.subr.bf16.mxu0 0
      %2843 = vmatpush2.bf16.msra.mxu0 0
      %2844 = vmatprep.subr.bf16.mxu0 0
      %2845 = vmatpush2.bf16.msra.mxu0 0
      %2846 = vmatprep.subr.bf16.mxu0 0
      %2847 = vmatpush2.bf16.msra.mxu0 0
      %2848 = vmatprep.subr.bf16.mxu0 %v2349
      %2849 = vmatpush2.bf16.msra.mxu0 %v2348
      %2850 = vmatprep.subr.bf16.mxu0 %v2342
      %2851 = vmatpush2.bf16.msra.mxu0 %v2341
      %2852 = vmatprep.subr.bf16.mxu0 %v2335
      %2853 = vmatpush2.bf16.msra.mxu0 %v2334
      %2854 = vmatprep.subr.bf16.mxu0 %v2328
      %2855 = vmatpush2.bf16.msra.mxu0 %v2327
      %2856 = vmatprep.subr.bf16.mxu0 %v2321
      %2857 = vmatpush2.bf16.msra.mxu0 %v2320
      %2858 = vmatprep.mubr.bf16.mxu0 %v2485
      %2859 = vmatmul.mubr.bf16.gmra.mxu0 %v2447
      %v2860 = vpop.f32.mrf.mxu0
      %v2861 = vadd.f32 0.0, %v2860
      %v2862 = vpop.f32.mrf.mxu0
      %v2863 = vadd.f32 0.0, %v2862
      %v2864 = vpop.f32.mrf.mxu0
      %v2865 = vadd.f32 0.0, %v2864
      %v2866 = vpop.f32.mrf.mxu0
      %v2867 = vadd.f32 0.0, %v2866
      %2868 = vmatprep.mubr.bf16.mxu0 %v2488
      %2869 = vmatmul.mubr.bf16.gmra.mxu0 %v2449
      %v2870 = vpop.f32.mrf.mxu0
      %v2871 = vadd.f32 0.0, %v2870
      %v2872 = vpop.f32.mrf.mxu0
      %v2873 = vadd.f32 0.0, %v2872
      %v2874 = vpop.f32.mrf.mxu0
      %v2875 = vadd.f32 0.0, %v2874
      %v2876 = vpop.f32.mrf.mxu0
      %v2877 = vadd.f32 0.0, %v2876
      %2878 = vmatprep.mubr.bf16.mxu0 %v2491
      %2879 = vmatmul.mubr.bf16.gmra.mxu0 %v2451
      %v2880 = vpop.f32.mrf.mxu0
      %v2881 = vadd.f32 0.0, %v2880
      %v2882 = vpop.f32.mrf.mxu0
      %v2883 = vadd.f32 0.0, %v2882
      %v2884 = vpop.f32.mrf.mxu0
      %v2885 = vadd.f32 0.0, %v2884
      %v2886 = vpop.f32.mrf.mxu0
      %v2887 = vadd.f32 0.0, %v2886
      %2888 = vmatprep.mubr.bf16.mxu0 %v2494
      %2889 = vmatmul.mubr.bf16.gmra.mxu0 %v2453
      %v2890 = vpop.f32.mrf.mxu0
      %v2891 = vadd.f32 0.0, %v2890
      %v2892 = vpop.f32.mrf.mxu0
      %v2893 = vadd.f32 0.0, %v2892
      %v2894 = vpop.f32.mrf.mxu0
      %v2895 = vadd.f32 0.0, %v2894
      %v2896 = vpop.f32.mrf.mxu0
      %v2897 = vadd.f32 0.0, %v2896
      %2898 = vmatprep.mubr.bf16.mxu0 %v2497
      %2899 = vmatmul.mubr.bf16.gmra.mxu0 %v2455
      %v2900 = vpop.f32.mrf.mxu0
      %v2901 = vadd.f32 0.0, %v2900
      %v2902 = vpop.f32.mrf.mxu0
      %v2903 = vadd.f32 0.0, %v2902
      %v2904 = vpop.f32.mrf.mxu0
      %v2905 = vadd.f32 0.0, %v2904
      %v2906 = vpop.f32.mrf.mxu0
      %v2907 = vadd.f32 0.0, %v2906
      %2908 = vmatprep.mubr.bf16.mxu0 %v2500
      %2909 = vmatmul.mubr.bf16.gmra.mxu0 %v2457
      %v2910 = vpop.f32.mrf.mxu0
      %v2911 = vadd.f32 0.0, %v2910
      %v2912 = vpop.f32.mrf.mxu0
      %v2913 = vadd.f32 0.0, %v2912
      %v2914 = vpop.f32.mrf.mxu0
      %v2915 = vadd.f32 0.0, %v2914
      %v2916 = vpop.f32.mrf.mxu0
      %v2917 = vadd.f32 0.0, %v2916
      %2918 = vmatprep.mubr.bf16.mxu0 %v2503
      %2919 = vmatmul.mubr.bf16.gmra.mxu0 %v2459
      %v2920 = vpop.f32.mrf.mxu0
      %v2921 = vadd.f32 0.0, %v2920
      %v2922 = vpop.f32.mrf.mxu0
      %v2923 = vadd.f32 0.0, %v2922
      %v2924 = vpop.f32.mrf.mxu0
      %v2925 = vadd.f32 0.0, %v2924
      %v2926 = vpop.f32.mrf.mxu0
      %v2927 = vadd.f32 0.0, %v2926
      %2928 = vmatprep.mubr.bf16.mxu0 %v2506
      %2929 = vmatmul.mubr.bf16.gmra.mxu0 %v2461
      %v2930 = vpop.f32.mrf.mxu0
      %v2931 = vadd.f32 0.0, %v2930
      %v2932 = vpop.f32.mrf.mxu0
      %v2933 = vadd.f32 0.0, %v2932
      %v2934 = vpop.f32.mrf.mxu0
      %v2935 = vadd.f32 0.0, %v2934
      %v2936 = vpop.f32.mrf.mxu0
      %v2937 = vadd.f32 0.0, %v2936
      %2938 = vmatprep.mubr.bf16.mxu0 %v2509
      %2939 = vmatmul.mubr.bf16.gmra.mxu0 %v2463
      %v2940 = vpop.f32.mrf.mxu0
      %v2941 = vadd.f32 0.0, %v2940
      %v2942 = vpop.f32.mrf.mxu0
      %v2943 = vadd.f32 0.0, %v2942
      %v2944 = vpop.f32.mrf.mxu0
      %v2945 = vadd.f32 0.0, %v2944
      %v2946 = vpop.f32.mrf.mxu0
      %v2947 = vadd.f32 0.0, %v2946
      %2948 = vmatprep.mubr.bf16.mxu0 %v2512
      %2949 = vmatmul.mubr.bf16.gmra.mxu0 %v2465
      %v2950 = vpop.f32.mrf.mxu0
      %v2951 = vadd.f32 0.0, %v2950
      %v2952 = vpop.f32.mrf.mxu0
      %v2953 = vadd.f32 0.0, %v2952
      %v2954 = vpop.f32.mrf.mxu0
      %v2955 = vadd.f32 0.0, %v2954
      %v2956 = vpop.f32.mrf.mxu0
      %v2957 = vadd.f32 0.0, %v2956
      %2958 = vmatprep.mubr.bf16.mxu0 %v2515
      %2959 = vmatmul.mubr.bf16.gmra.mxu0 %v2467
      %v2960 = vpop.f32.mrf.mxu0
      %v2961 = vadd.f32 0.0, %v2960
      %v2962 = vpop.f32.mrf.mxu0
      %v2963 = vadd.f32 0.0, %v2962
      %v2964 = vpop.f32.mrf.mxu0
      %v2965 = vadd.f32 0.0, %v2964
      %v2966 = vpop.f32.mrf.mxu0
      %v2967 = vadd.f32 0.0, %v2966
      %2968 = vmatprep.mubr.bf16.mxu0 %v2518
      %2969 = vmatmul.mubr.bf16.gmra.mxu0 %v2469
      %v2970 = vpop.f32.mrf.mxu0
      %v2971 = vadd.f32 0.0, %v2970
      %v2972 = vpop.f32.mrf.mxu0
      %v2973 = vadd.f32 0.0, %v2972
      %v2974 = vpop.f32.mrf.mxu0
      %v2975 = vadd.f32 0.0, %v2974
      %v2976 = vpop.f32.mrf.mxu0
      %v2977 = vadd.f32 0.0, %v2976
      %2978 = vdwg.mxu0
      %2979 = vmatprep.subr.bf16.mxu0 0
      %2980 = vmatpush1.bf16.msra.mxu0 %v2315
      %2981 = vmatprep.subr.bf16.mxu0 0
      %2982 = vmatpush1.bf16.msra.mxu0 %v2308
      %2983 = vmatprep.subr.bf16.mxu0 0
      %2984 = vmatpush1.bf16.msra.mxu0 %v2301
      %2985 = vmatprep.subr.bf16.mxu0 0
      %2986 = vmatpush1.bf16.msra.mxu0 %v2294
      %2987 = vmatprep.subr.bf16.mxu0 0
      %2988 = vmatpush1.bf16.msra.mxu0 %v2287
      %2989 = vmatprep.subr.bf16.mxu0 0
      %2990 = vmatpush1.bf16.msra.mxu0 %v2280
      %2991 = vmatprep.subr.bf16.mxu0 0
      %2992 = vmatpush1.bf16.msra.mxu0 %v2273
      %2993 = vmatprep.subr.bf16.mxu0 0
      %2994 = vmatpush1.bf16.msra.mxu0 %v2266
      %2995 = vmatprep.subr.bf16.mxu0 0
      %2996 = vmatpush2.bf16.msra.mxu0 0
      %2997 = vmatprep.subr.bf16.mxu0 0
      %2998 = vmatpush2.bf16.msra.mxu0 0
      %2999 = vmatprep.subr.bf16.mxu0 0
      %3000 = vmatpush2.bf16.msra.mxu0 0
      %3001 = vmatprep.subr.bf16.mxu0 0
      %3002 = vmatpush2.bf16.msra.mxu0 %v2350
      %3003 = vmatprep.subr.bf16.mxu0 0
      %3004 = vmatpush2.bf16.msra.mxu0 %v2343
      %3005 = vmatprep.subr.bf16.mxu0 0
      %3006 = vmatpush2.bf16.msra.mxu0 %v2336
      %3007 = vmatprep.subr.bf16.mxu0 0
      %3008 = vmatpush2.bf16.msra.mxu0 %v2329
      %3009 = vmatprep.subr.bf16.mxu0 0
      %3010 = vmatpush2.bf16.msra.mxu0 %v2322
      %3011 = vmatprep.mubr.bf16.mxu0 %v2485
      %3012 = vmatmul.mubr.bf16.gmra.mxu0 %v2447
      %v3013 = vpop.f32.mrf.mxu0
      %v3014 = vadd.f32 0.0, %v3013
      %v3015 = vpop.f32.mrf.mxu0
      %v3016 = vpop.f32.mrf.mxu0
      %v3017 = vadd.f32 0.0, %v3016
      %v3018 = vpop.f32.mrf.mxu0
      %3019 = vmatprep.mubr.bf16.mxu0 %v2488
      %3020 = vmatmul.mubr.bf16.gmra.mxu0 %v2449
      %v3021 = vpop.f32.mrf.mxu0
      %v3022 = vadd.f32 0.0, %v3021
      %v3023 = vpop.f32.mrf.mxu0
      %v3024 = vpop.f32.mrf.mxu0
      %v3025 = vadd.f32 0.0, %v3024
      %v3026 = vpop.f32.mrf.mxu0
      %3027 = vmatprep.mubr.bf16.mxu0 %v2491
      %3028 = vmatmul.mubr.bf16.gmra.mxu0 %v2451
      %v3029 = vpop.f32.mrf.mxu0
      %v3030 = vadd.f32 0.0, %v3029
      %v3031 = vpop.f32.mrf.mxu0
      %v3032 = vpop.f32.mrf.mxu0
      %v3033 = vadd.f32 0.0, %v3032
      %v3034 = vpop.f32.mrf.mxu0
      %3035 = vmatprep.mubr.bf16.mxu0 %v2494
      %3036 = vmatmul.mubr.bf16.gmra.mxu0 %v2453
      %v3037 = vpop.f32.mrf.mxu0
      %v3038 = vadd.f32 0.0, %v3037
      %v3039 = vpop.f32.mrf.mxu0
      %v3040 = vpop.f32.mrf.mxu0
      %v3041 = vadd.f32 0.0, %v3040
      %v3042 = vpop.f32.mrf.mxu0
      %3043 = vmatprep.mubr.bf16.mxu0 %v2497
      %3044 = vmatmul.mubr.bf16.gmra.mxu0 %v2455
      %v3045 = vpop.f32.mrf.mxu0
      %v3046 = vadd.f32 0.0, %v3045
      %v3047 = vpop.f32.mrf.mxu0
      %v3048 = vpop.f32.mrf.mxu0
      %v3049 = vadd.f32 0.0, %v3048
      %v3050 = vpop.f32.mrf.mxu0
      %3051 = vmatprep.mubr.bf16.mxu0 %v2500
      %3052 = vmatmul.mubr.bf16.gmra.mxu0 %v2457
      %v3053 = vpop.f32.mrf.mxu0
      %v3054 = vadd.f32 0.0, %v3053
      %v3055 = vpop.f32.mrf.mxu0
      %v3056 = vpop.f32.mrf.mxu0
      %v3057 = vadd.f32 0.0, %v3056
      %v3058 = vpop.f32.mrf.mxu0
      %3059 = vmatprep.mubr.bf16.mxu0 %v2503
      %3060 = vmatmul.mubr.bf16.gmra.mxu0 %v2459
      %v3061 = vpop.f32.mrf.mxu0
      %v3062 = vadd.f32 0.0, %v3061
      %v3063 = vpop.f32.mrf.mxu0
      %v3064 = vpop.f32.mrf.mxu0
      %v3065 = vadd.f32 0.0, %v3064
      %v3066 = vpop.f32.mrf.mxu0
      %3067 = vmatprep.mubr.bf16.mxu0 %v2506
      %3068 = vmatmul.mubr.bf16.gmra.mxu0 %v2461
      %v3069 = vpop.f32.mrf.mxu0
      %v3070 = vadd.f32 0.0, %v3069
      %v3071 = vpop.f32.mrf.mxu0
      %v3072 = vpop.f32.mrf.mxu0
      %v3073 = vadd.f32 0.0, %v3072
      %v3074 = vpop.f32.mrf.mxu0
      %3075 = vmatprep.mubr.bf16.mxu0 %v2509
      %3076 = vmatmul.mubr.bf16.gmra.mxu0 %v2463
      %v3077 = vpop.f32.mrf.mxu0
      %v3078 = vadd.f32 0.0, %v3077
      %v3079 = vpop.f32.mrf.mxu0
      %v3080 = vpop.f32.mrf.mxu0
      %v3081 = vadd.f32 0.0, %v3080
      %v3082 = vpop.f32.mrf.mxu0
      %3083 = vmatprep.mubr.bf16.mxu0 %v2512
      %3084 = vmatmul.mubr.bf16.gmra.mxu0 %v2465
      %v3085 = vpop.f32.mrf.mxu0
      %v3086 = vadd.f32 0.0, %v3085
      %v3087 = vpop.f32.mrf.mxu0
      %v3088 = vpop.f32.mrf.mxu0
      %v3089 = vadd.f32 0.0, %v3088
      %v3090 = vpop.f32.mrf.mxu0
      %3091 = vmatprep.mubr.bf16.mxu0 %v2515
      %3092 = vmatmul.mubr.bf16.gmra.mxu0 %v2467
      %v3093 = vpop.f32.mrf.mxu0
      %v3094 = vadd.f32 0.0, %v3093
      %v3095 = vpop.f32.mrf.mxu0
      %v3096 = vpop.f32.mrf.mxu0
      %v3097 = vadd.f32 0.0, %v3096
      %v3098 = vpop.f32.mrf.mxu0
      %3099 = vmatprep.mubr.bf16.mxu0 %v2518
      %3100 = vmatmul.mubr.bf16.gmra.mxu0 %v2469
      %v3101 = vpop.f32.mrf.mxu0
      %v3102 = vadd.f32 0.0, %v3101
      %v3103 = vpop.f32.mrf.mxu0
      %v3104 = vpop.f32.mrf.mxu0
      %v3105 = vadd.f32 0.0, %v3104
      %v3106 = vpop.f32.mrf.mxu0
      %3107 = vdwg.mxu0
      %p3108 = scmp.eq.s32.totalorder %s15, 0
      // Predicated region
      $region37: #{fused_module.1} parent=35 // pred_check
        %p3109 = pneg %p3108
      $region38: #{fused_module.1} parent=35 // pred_check_branch
        %3111 = sbr.rel (%p3109) target = $region40
      $region39: #{fused_module.1} parent=35 // pred_region
        %3112 = vst [vmem:[#allocation2] sm:$0xff] %v2555
        %3113 = vst [vmem:[#allocation2 + $0x8] sm:$0xff] %v2557
        %3114 = vst [vmem:[#allocation2 + $0x10] sm:$0xff] %v2708
        %3115 = vst [vmem:[#allocation2 + $0x18] sm:$0xff] %v2710
        %3116 = vst [vmem:[#allocation2 + $0x20] sm:$0xff] %v2861
        %3117 = vst [vmem:[#allocation2 + $0x28] sm:$0xff] %v2863
        %3118 = vst.msk [vmem:[#allocation2 + $0x30] sm:$0xff] %vm418, %v3014
        %3119 = vst [vmem:[#allocation2 + $0x38] sm:$0xff] %v2559
        %3120 = vst [vmem:[#allocation2 + $0x40] sm:$0xff] %v2561
        %3121 = vst [vmem:[#allocation2 + $0x48] sm:$0xff] %v2712
        %3122 = vst [vmem:[#allocation2 + $0x50] sm:$0xff] %v2714
        %3123 = vst [vmem:[#allocation2 + $0x58] sm:$0xff] %v2865
        %3124 = vst [vmem:[#allocation2 + $0x60] sm:$0xff] %v2867
        %3125 = vst.msk [vmem:[#allocation2 + $0x68] sm:$0xff] %vm418, %v3017
        %3126 = vst [vmem:[#allocation2 + $0x70] sm:$0xff] %v2565
        %3127 = vst [vmem:[#allocation2 + $0x78] sm:$0xff] %v2567
        %3128 = vst [vmem:[#allocation2 + $0x80] sm:$0xff] %v2718
        %3129 = vst [vmem:[#allocation2 + $0x88] sm:$0xff] %v2720
        %3130 = vst [vmem:[#allocation2 + $0x90] sm:$0xff] %v2871
        %3131 = vst [vmem:[#allocation2 + $0x98] sm:$0xff] %v2873
        %3132 = vst.msk [vmem:[#allocation2 + $0xa0] sm:$0xff] %vm418, %v3022
        %3133 = vst [vmem:[#allocation2 + $0xa8] sm:$0xff] %v2569
        %3134 = vst [vmem:[#allocation2 + $0xb0] sm:$0xff] %v2571
        %3135 = vst [vmem:[#allocation2 + $0xb8] sm:$0xff] %v2722
        %3136 = vst [vmem:[#allocation2 + $0xc0] sm:$0xff] %v2724
        %3137 = vst [vmem:[#allocation2 + $0xc8] sm:$0xff] %v2875
        %3138 = vst [vmem:[#allocation2 + $0xd0] sm:$0xff] %v2877
        %3139 = vst.msk [vmem:[#allocation2 + $0xd8] sm:$0xff] %vm418, %v3025
        %3140 = vst [vmem:[#allocation2 + $0xe0] sm:$0xff] %v2575
        %3141 = vst [vmem:[#allocation2 + $0xe8] sm:$0xff] %v2577
        %3142 = vst [vmem:[#allocation2 + $0xf0] sm:$0xff] %v2728
        %3143 = vst [vmem:[#allocation2 + $0xf8] sm:$0xff] %v2730
        %3144 = vst [vmem:[#allocation2 + $0x100] sm:$0xff] %v2881
        %3145 = vst [vmem:[#allocation2 + $0x108] sm:$0xff] %v2883
        %3146 = vst.msk [vmem:[#allocation2 + $0x110] sm:$0xff] %vm418, %v3030
        %3147 = vst [vmem:[#allocation2 + $0x118] sm:$0xff] %v2579
        %3148 = vst [vmem:[#allocation2 + $0x120] sm:$0xff] %v2581
        %3149 = vst [vmem:[#allocation2 + $0x128] sm:$0xff] %v2732
        %3150 = vst [vmem:[#allocation2 + $0x130] sm:$0xff] %v2734
        %3151 = vst [vmem:[#allocation2 + $0x138] sm:$0xff] %v2885
        %3152 = vst [vmem:[#allocation2 + $0x140] sm:$0xff] %v2887
        %3153 = vst.msk [vmem:[#allocation2 + $0x148] sm:$0xff] %vm418, %v3033
        %3154 = vst [vmem:[#allocation2 + $0x150] sm:$0xff] %v2585
        %3155 = vst [vmem:[#allocation2 + $0x158] sm:$0xff] %v2587
        %3156 = vst [vmem:[#allocation2 + $0x160] sm:$0xff] %v2738
        %3157 = vst [vmem:[#allocation2 + $0x168] sm:$0xff] %v2740
        %3158 = vst [vmem:[#allocation2 + $0x170] sm:$0xff] %v2891
        %3159 = vst [vmem:[#allocation2 + $0x178] sm:$0xff] %v2893
        %3160 = vst.msk [vmem:[#allocation2 + $0x180] sm:$0xff] %vm418, %v3038
        %3161 = vst [vmem:[#allocation2 + $0x188] sm:$0xff] %v2589
        %3162 = vst [vmem:[#allocation2 + $0x190] sm:$0xff] %v2591
        %3163 = vst [vmem:[#allocation2 + $0x198] sm:$0xff] %v2742
        %3164 = vst [vmem:[#allocation2 + $0x1a0] sm:$0xff] %v2744
        %3165 = vst [vmem:[#allocation2 + $0x1a8] sm:$0xff] %v2895
        %3166 = vst [vmem:[#allocation2 + $0x1b0] sm:$0xff] %v2897
        %3167 = vst.msk [vmem:[#allocation2 + $0x1b8] sm:$0xff] %vm418, %v3041
        %3168 = vst [vmem:[#allocation2 + $0x1c0] sm:$0xff] %v2595
        %3169 = vst [vmem:[#allocation2 + $0x1c8] sm:$0xff] %v2597
        %3170 = vst [vmem:[#allocation2 + $0x1d0] sm:$0xff] %v2748
        %3171 = vst [vmem:[#allocation2 + $0x1d8] sm:$0xff] %v2750
        %3172 = vst [vmem:[#allocation2 + $0x1e0] sm:$0xff] %v2901
        %3173 = vst [vmem:[#allocation2 + $0x1e8] sm:$0xff] %v2903
        %3174 = vst.msk [vmem:[#allocation2 + $0x1f0] sm:$0xff] %vm418, %v3046
        %3175 = vst [vmem:[#allocation2 + $0x1f8] sm:$0xff] %v2599
        %3176 = vst [vmem:[#allocation2 + $0x200] sm:$0xff] %v2601
        %3177 = vst [vmem:[#allocation2 + $0x208] sm:$0xff] %v2752
        %3178 = vst [vmem:[#allocation2 + $0x210] sm:$0xff] %v2754
        %3179 = vst [vmem:[#allocation2 + $0x218] sm:$0xff] %v2905
        %3180 = vst [vmem:[#allocation2 + $0x220] sm:$0xff] %v2907
        %3181 = vst.msk [vmem:[#allocation2 + $0x228] sm:$0xff] %vm418, %v3049
        %3182 = vst [vmem:[#allocation2 + $0x230] sm:$0xff] %v2605
        %3183 = vst [vmem:[#allocation2 + $0x238] sm:$0xff] %v2607
        %3184 = vst [vmem:[#allocation2 + $0x240] sm:$0xff] %v2758
        %3185 = vst [vmem:[#allocation2 + $0x248] sm:$0xff] %v2760
        %3186 = vst [vmem:[#allocation2 + $0x250] sm:$0xff] %v2911
        %3187 = vst [vmem:[#allocation2 + $0x258] sm:$0xff] %v2913
        %3188 = vst.msk [vmem:[#allocation2 + $0x260] sm:$0xff] %vm418, %v3054
        %3189 = vst [vmem:[#allocation2 + $0x268] sm:$0xff] %v2609
        %3190 = vst [vmem:[#allocation2 + $0x270] sm:$0xff] %v2611
        %3191 = vst [vmem:[#allocation2 + $0x278] sm:$0xff] %v2762
        %3192 = vst [vmem:[#allocation2 + $0x280] sm:$0xff] %v2764
        %3193 = vst [vmem:[#allocation2 + $0x288] sm:$0xff] %v2915
        %3194 = vst [vmem:[#allocation2 + $0x290] sm:$0xff] %v2917
        %3195 = vst.msk [vmem:[#allocation2 + $0x298] sm:$0xff] %vm418, %v3057
        %3196 = vst [vmem:[#allocation2 + $0x2a0] sm:$0xff] %v2615
        %3197 = vst [vmem:[#allocation2 + $0x2a8] sm:$0xff] %v2617
        %3198 = vst [vmem:[#allocation2 + $0x2b0] sm:$0xff] %v2768
        %3199 = vst [vmem:[#allocation2 + $0x2b8] sm:$0xff] %v2770
        %3200 = vst [vmem:[#allocation2 + $0x2c0] sm:$0xff] %v2921
        %3201 = vst [vmem:[#allocation2 + $0x2c8] sm:$0xff] %v2923
        %3202 = vst.msk [vmem:[#allocation2 + $0x2d0] sm:$0xff] %vm418, %v3062
        %3203 = vst [vmem:[#allocation2 + $0x2d8] sm:$0xff] %v2619
        %3204 = vst [vmem:[#allocation2 + $0x2e0] sm:$0xff] %v2621
        %3205 = vst [vmem:[#allocation2 + $0x2e8] sm:$0xff] %v2772
        %3206 = vst [vmem:[#allocation2 + $0x2f0] sm:$0xff] %v2774
        %3207 = vst [vmem:[#allocation2 + $0x2f8] sm:$0xff] %v2925
        %3208 = vst [vmem:[#allocation2 + $0x300] sm:$0xff] %v2927
        %3209 = vst.msk [vmem:[#allocation2 + $0x308] sm:$0xff] %vm418, %v3065
        %3210 = vst [vmem:[#allocation2 + $0x310] sm:$0xff] %v2625
        %3211 = vst [vmem:[#allocation2 + $0x318] sm:$0xff] %v2627
        %3212 = vst [vmem:[#allocation2 + $0x320] sm:$0xff] %v2778
        %3213 = vst [vmem:[#allocation2 + $0x328] sm:$0xff] %v2780
        %3214 = vst [vmem:[#allocation2 + $0x330] sm:$0xff] %v2931
        %3215 = vst [vmem:[#allocation2 + $0x338] sm:$0xff] %v2933
        %3216 = vst.msk [vmem:[#allocation2 + $0x340] sm:$0xff] %vm418, %v3070
        %3217 = vst [vmem:[#allocation2 + $0x348] sm:$0xff] %v2629
        %3218 = vst [vmem:[#allocation2 + $0x350] sm:$0xff] %v2631
        %3219 = vst [vmem:[#allocation2 + $0x358] sm:$0xff] %v2782
        %3220 = vst [vmem:[#allocation2 + $0x360] sm:$0xff] %v2784
        %3221 = vst [vmem:[#allocation2 + $0x368] sm:$0xff] %v2935
        %3222 = vst [vmem:[#allocation2 + $0x370] sm:$0xff] %v2937
        %3223 = vst.msk [vmem:[#allocation2 + $0x378] sm:$0xff] %vm418, %v3073
        %3224 = vst [vmem:[#allocation2 + $0x380] sm:$0xff] %v2635
        %3225 = vst [vmem:[#allocation2 + $0x388] sm:$0xff] %v2637
        %3226 = vst [vmem:[#allocation2 + $0x390] sm:$0xff] %v2788
        %3227 = vst [vmem:[#allocation2 + $0x398] sm:$0xff] %v2790
        %3228 = vst [vmem:[#allocation2 + $0x3a0] sm:$0xff] %v2941
        %3229 = vst [vmem:[#allocation2 + $0x3a8] sm:$0xff] %v2943
        %3230 = vst.msk [vmem:[#allocation2 + $0x3b0] sm:$0xff] %vm418, %v3078
        %3231 = vst [vmem:[#allocation2 + $0x3b8] sm:$0xff] %v2639
        %3232 = vst [vmem:[#allocation2 + $0x3c0] sm:$0xff] %v2641
        %3233 = vst [vmem:[#allocation2 + $0x3c8] sm:$0xff] %v2792
        %3234 = vst [vmem:[#allocation2 + $0x3d0] sm:$0xff] %v2794
        %3235 = vst [vmem:[#allocation2 + $0x3d8] sm:$0xff] %v2945
        %3236 = vst [vmem:[#allocation2 + $0x3e0] sm:$0xff] %v2947
        %3237 = vst.msk [vmem:[#allocation2 + $0x3e8] sm:$0xff] %vm418, %v3081
        %3238 = vst [vmem:[#allocation2 + $0x3f0] sm:$0xff] %v2645
        %3239 = vst [vmem:[#allocation2 + $0x3f8] sm:$0xff] %v2647
        %3240 = vst [vmem:[#allocation2 + $0x400] sm:$0xff] %v2798
        %3241 = vst [vmem:[#allocation2 + $0x408] sm:$0xff] %v2800
        %3242 = vst [vmem:[#allocation2 + $0x410] sm:$0xff] %v2951
        %3243 = vst [vmem:[#allocation2 + $0x418] sm:$0xff] %v2953
        %3244 = vst.msk [vmem:[#allocation2 + $0x420] sm:$0xff] %vm418, %v3086
        %3245 = vst [vmem:[#allocation2 + $0x428] sm:$0xff] %v2649
        %3246 = vst [vmem:[#allocation2 + $0x430] sm:$0xff] %v2651
        %3247 = vst [vmem:[#allocation2 + $0x438] sm:$0xff] %v2802
        %3248 = vst [vmem:[#allocation2 + $0x440] sm:$0xff] %v2804
        %3249 = vst [vmem:[#allocation2 + $0x448] sm:$0xff] %v2955
        %3250 = vst [vmem:[#allocation2 + $0x450] sm:$0xff] %v2957
        %3251 = vst.msk [vmem:[#allocation2 + $0x458] sm:$0xff] %vm418, %v3089
        %3252 = vst [vmem:[#allocation2 + $0x460] sm:$0xff] %v2655
        %3253 = vst [vmem:[#allocation2 + $0x468] sm:$0xff] %v2657
        %3254 = vst [vmem:[#allocation2 + $0x470] sm:$0xff] %v2808
        %3255 = vst [vmem:[#allocation2 + $0x478] sm:$0xff] %v2810
        %3256 = vst [vmem:[#allocation2 + $0x480] sm:$0xff] %v2961
        %3257 = vst [vmem:[#allocation2 + $0x488] sm:$0xff] %v2963
        %3258 = vst.msk [vmem:[#allocation2 + $0x490] sm:$0xff] %vm418, %v3094
        %3259 = vst [vmem:[#allocation2 + $0x498] sm:$0xff] %v2659
        %3260 = vst [vmem:[#allocation2 + $0x4a0] sm:$0xff] %v2661
        %3261 = vst [vmem:[#allocation2 + $0x4a8] sm:$0xff] %v2812
        %3262 = vst [vmem:[#allocation2 + $0x4b0] sm:$0xff] %v2814
        %3263 = vst [vmem:[#allocation2 + $0x4b8] sm:$0xff] %v2965
        %3264 = vst [vmem:[#allocation2 + $0x4c0] sm:$0xff] %v2967
        %3265 = vst.msk [vmem:[#allocation2 + $0x4c8] sm:$0xff] %vm418, %v3097
        %3266 = vst [vmem:[#allocation2 + $0x4d0] sm:$0xff] %v2665
        %3267 = vst [vmem:[#allocation2 + $0x4d8] sm:$0xff] %v2667
        %3268 = vst [vmem:[#allocation2 + $0x4e0] sm:$0xff] %v2818
        %3269 = vst [vmem:[#allocation2 + $0x4e8] sm:$0xff] %v2820
        %3270 = vst [vmem:[#allocation2 + $0x4f0] sm:$0xff] %v2971
        %3271 = vst [vmem:[#allocation2 + $0x4f8] sm:$0xff] %v2973
        %3272 = vst.msk [vmem:[#allocation2 + $0x500] sm:$0xff] %vm418, %v3102
        %3273 = vst [vmem:[#allocation2 + $0x508] sm:$0xff] %v2669
        %3274 = vst [vmem:[#allocation2 + $0x510] sm:$0xff] %v2671
        %3275 = vst [vmem:[#allocation2 + $0x518] sm:$0xff] %v2822
        %3276 = vst [vmem:[#allocation2 + $0x520] sm:$0xff] %v2824
        %3277 = vst [vmem:[#allocation2 + $0x528] sm:$0xff] %v2975
        %3278 = vst [vmem:[#allocation2 + $0x530] sm:$0xff] %v2977
        %3279 = vst.msk [vmem:[#allocation2 + $0x538] sm:$0xff] %vm418, %v3105
      $region40: #{fused_module.1} parent=35 // pred_fallthru
        _
      %p3280 = scmp.gt.s32.totalorder %s15, 0
      // Predicated region
      $region41: #{fused_module.1} parent=35 // pred_check
        %p3281 = pneg %p3280
      $region42: #{fused_module.1} parent=35 // pred_check_branch
        %3283 = sbr.rel (%p3281) target = $region44
      $region43: #{fused_module.1} parent=35 // pred_region
        %v3284 = vld [vmem:[#allocation2] sm:$0xff]
        %v3285 = vld [vmem:[#allocation2 + $0x8] sm:$0xff]
        %v3286 = vld [vmem:[#allocation2 + $0x10] sm:$0xff]
        %v3287 = vld [vmem:[#allocation2 + $0x18] sm:$0xff]
        %v3288 = vld [vmem:[#allocation2 + $0x20] sm:$0xff]
        %v3289 = vld [vmem:[#allocation2 + $0x28] sm:$0xff]
        %v3290 = vld [vmem:[#allocation2 + $0x30] sm:$0xff]
        %v3291 = vld [vmem:[#allocation2 + $0x38] sm:$0xff]
        %v3292 = vld [vmem:[#allocation2 + $0x40] sm:$0xff]
        %v3293 = vld [vmem:[#allocation2 + $0x48] sm:$0xff]
        %v3294 = vld [vmem:[#allocation2 + $0x50] sm:$0xff]
        %v3295 = vld [vmem:[#allocation2 + $0x58] sm:$0xff]
        %v3296 = vld [vmem:[#allocation2 + $0x60] sm:$0xff]
        %v3297 = vld [vmem:[#allocation2 + $0x68] sm:$0xff]
        %v3298 = vld [vmem:[#allocation2 + $0x70] sm:$0xff]
        %v3299 = vld [vmem:[#allocation2 + $0x78] sm:$0xff]
        %v3300 = vld [vmem:[#allocation2 + $0x80] sm:$0xff]
        %v3301 = vld [vmem:[#allocation2 + $0x88] sm:$0xff]
        %v3302 = vld [vmem:[#allocation2 + $0x90] sm:$0xff]
        %v3303 = vld [vmem:[#allocation2 + $0x98] sm:$0xff]
        %v3304 = vld [vmem:[#allocation2 + $0xa0] sm:$0xff]
        %v3305 = vld [vmem:[#allocation2 + $0xa8] sm:$0xff]
        %v3306 = vld [vmem:[#allocation2 + $0xb0] sm:$0xff]
        %v3307 = vld [vmem:[#allocation2 + $0xb8] sm:$0xff]
        %v3308 = vld [vmem:[#allocation2 + $0xc0] sm:$0xff]
        %v3309 = vld [vmem:[#allocation2 + $0xc8] sm:$0xff]
        %v3310 = vld [vmem:[#allocation2 + $0xd0] sm:$0xff]
        %v3311 = vld [vmem:[#allocation2 + $0xd8] sm:$0xff]
        %v3312 = vld [vmem:[#allocation2 + $0xe0] sm:$0xff]
        %v3313 = vld [vmem:[#allocation2 + $0xe8] sm:$0xff]
        %v3314 = vld [vmem:[#allocation2 + $0xf0] sm:$0xff]
        %v3315 = vld [vmem:[#allocation2 + $0xf8] sm:$0xff]
        %v3316 = vld [vmem:[#allocation2 + $0x100] sm:$0xff]
        %v3317 = vld [vmem:[#allocation2 + $0x108] sm:$0xff]
        %v3318 = vld [vmem:[#allocation2 + $0x110] sm:$0xff]
        %v3319 = vld [vmem:[#allocation2 + $0x118] sm:$0xff]
        %v3320 = vld [vmem:[#allocation2 + $0x120] sm:$0xff]
        %v3321 = vld [vmem:[#allocation2 + $0x128] sm:$0xff]
        %v3322 = vld [vmem:[#allocation2 + $0x130] sm:$0xff]
        %v3323 = vld [vmem:[#allocation2 + $0x138] sm:$0xff]
        %v3324 = vld [vmem:[#allocation2 + $0x140] sm:$0xff]
        %v3325 = vld [vmem:[#allocation2 + $0x148] sm:$0xff]
        %v3326 = vld [vmem:[#allocation2 + $0x150] sm:$0xff]
        %v3327 = vld [vmem:[#allocation2 + $0x158] sm:$0xff]
        %v3328 = vld [vmem:[#allocation2 + $0x160] sm:$0xff]
        %v3329 = vld [vmem:[#allocation2 + $0x168] sm:$0xff]
        %v3330 = vld [vmem:[#allocation2 + $0x170] sm:$0xff]
        %v3331 = vld [vmem:[#allocation2 + $0x178] sm:$0xff]
        %v3332 = vld [vmem:[#allocation2 + $0x180] sm:$0xff]
        %v3333 = vld [vmem:[#allocation2 + $0x188] sm:$0xff]
        %v3334 = vld [vmem:[#allocation2 + $0x190] sm:$0xff]
        %v3335 = vld [vmem:[#allocation2 + $0x198] sm:$0xff]
        %v3336 = vld [vmem:[#allocation2 + $0x1a0] sm:$0xff]
        %v3337 = vld [vmem:[#allocation2 + $0x1a8] sm:$0xff]
        %v3338 = vld [vmem:[#allocation2 + $0x1b0] sm:$0xff]
        %v3339 = vld [vmem:[#allocation2 + $0x1b8] sm:$0xff]
        %v3340 = vld [vmem:[#allocation2 + $0x1c0] sm:$0xff]
        %v3341 = vld [vmem:[#allocation2 + $0x1c8] sm:$0xff]
        %v3342 = vld [vmem:[#allocation2 + $0x1d0] sm:$0xff]
        %v3343 = vld [vmem:[#allocation2 + $0x1d8] sm:$0xff]
        %v3344 = vld [vmem:[#allocation2 + $0x1e0] sm:$0xff]
        %v3345 = vld [vmem:[#allocation2 + $0x1e8] sm:$0xff]
        %v3346 = vld [vmem:[#allocation2 + $0x1f0] sm:$0xff]
        %v3347 = vld [vmem:[#allocation2 + $0x1f8] sm:$0xff]
        %v3348 = vld [vmem:[#allocation2 + $0x200] sm:$0xff]
        %v3349 = vld [vmem:[#allocation2 + $0x208] sm:$0xff]
        %v3350 = vld [vmem:[#allocation2 + $0x210] sm:$0xff]
        %v3351 = vld [vmem:[#allocation2 + $0x218] sm:$0xff]
        %v3352 = vld [vmem:[#allocation2 + $0x220] sm:$0xff]
        %v3353 = vld [vmem:[#allocation2 + $0x228] sm:$0xff]
        %v3354 = vld [vmem:[#allocation2 + $0x230] sm:$0xff]
        %v3355 = vld [vmem:[#allocation2 + $0x238] sm:$0xff]
        %v3356 = vld [vmem:[#allocation2 + $0x240] sm:$0xff]
        %v3357 = vld [vmem:[#allocation2 + $0x248] sm:$0xff]
        %v3358 = vld [vmem:[#allocation2 + $0x250] sm:$0xff]
        %v3359 = vld [vmem:[#allocation2 + $0x258] sm:$0xff]
        %v3360 = vld [vmem:[#allocation2 + $0x260] sm:$0xff]
        %v3361 = vld [vmem:[#allocation2 + $0x268] sm:$0xff]
        %v3362 = vld [vmem:[#allocation2 + $0x270] sm:$0xff]
        %v3363 = vld [vmem:[#allocation2 + $0x278] sm:$0xff]
        %v3364 = vld [vmem:[#allocation2 + $0x280] sm:$0xff]
        %v3365 = vld [vmem:[#allocation2 + $0x288] sm:$0xff]
        %v3366 = vld [vmem:[#allocation2 + $0x290] sm:$0xff]
        %v3367 = vld [vmem:[#allocation2 + $0x298] sm:$0xff]
        %v3368 = vld [vmem:[#allocation2 + $0x2a0] sm:$0xff]
        %v3369 = vld [vmem:[#allocation2 + $0x2a8] sm:$0xff]
        %v3370 = vld [vmem:[#allocation2 + $0x2b0] sm:$0xff]
        %v3371 = vld [vmem:[#allocation2 + $0x2b8] sm:$0xff]
        %v3372 = vld [vmem:[#allocation2 + $0x2c0] sm:$0xff]
        %v3373 = vld [vmem:[#allocation2 + $0x2c8] sm:$0xff]
        %v3374 = vld [vmem:[#allocation2 + $0x2d0] sm:$0xff]
        %v3375 = vld [vmem:[#allocation2 + $0x2d8] sm:$0xff]
        %v3376 = vld [vmem:[#allocation2 + $0x2e0] sm:$0xff]
        %v3377 = vld [vmem:[#allocation2 + $0x2e8] sm:$0xff]
        %v3378 = vld [vmem:[#allocation2 + $0x2f0] sm:$0xff]
        %v3379 = vld [vmem:[#allocation2 + $0x2f8] sm:$0xff]
        %v3380 = vld [vmem:[#allocation2 + $0x300] sm:$0xff]
        %v3381 = vld [vmem:[#allocation2 + $0x308] sm:$0xff]
        %v3382 = vld [vmem:[#allocation2 + $0x310] sm:$0xff]
        %v3383 = vld [vmem:[#allocation2 + $0x318] sm:$0xff]
        %v3384 = vld [vmem:[#allocation2 + $0x320] sm:$0xff]
        %v3385 = vld [vmem:[#allocation2 + $0x328] sm:$0xff]
        %v3386 = vld [vmem:[#allocation2 + $0x330] sm:$0xff]
        %v3387 = vld [vmem:[#allocation2 + $0x338] sm:$0xff]
        %v3388 = vld [vmem:[#allocation2 + $0x340] sm:$0xff]
        %v3389 = vld [vmem:[#allocation2 + $0x348] sm:$0xff]
        %v3390 = vld [vmem:[#allocation2 + $0x350] sm:$0xff]
        %v3391 = vld [vmem:[#allocation2 + $0x358] sm:$0xff]
        %v3392 = vld [vmem:[#allocation2 + $0x360] sm:$0xff]
        %v3393 = vld [vmem:[#allocation2 + $0x368] sm:$0xff]
        %v3394 = vld [vmem:[#allocation2 + $0x370] sm:$0xff]
        %v3395 = vld [vmem:[#allocation2 + $0x378] sm:$0xff]
        %v3396 = vld [vmem:[#allocation2 + $0x380] sm:$0xff]
        %v3397 = vld [vmem:[#allocation2 + $0x388] sm:$0xff]
        %v3398 = vld [vmem:[#allocation2 + $0x390] sm:$0xff]
        %v3399 = vld [vmem:[#allocation2 + $0x398] sm:$0xff]
        %v3400 = vld [vmem:[#allocation2 + $0x3a0] sm:$0xff]
        %v3401 = vld [vmem:[#allocation2 + $0x3a8] sm:$0xff]
        %v3402 = vld [vmem:[#allocation2 + $0x3b0] sm:$0xff]
        %v3403 = vld [vmem:[#allocation2 + $0x3b8] sm:$0xff]
        %v3404 = vld [vmem:[#allocation2 + $0x3c0] sm:$0xff]
        %v3405 = vld [vmem:[#allocation2 + $0x3c8] sm:$0xff]
        %v3406 = vld [vmem:[#allocation2 + $0x3d0] sm:$0xff]
        %v3407 = vld [vmem:[#allocation2 + $0x3d8] sm:$0xff]
        %v3408 = vld [vmem:[#allocation2 + $0x3e0] sm:$0xff]
        %v3409 = vld [vmem:[#allocation2 + $0x3e8] sm:$0xff]
        %v3410 = vld [vmem:[#allocation2 + $0x3f0] sm:$0xff]
        %v3411 = vld [vmem:[#allocation2 + $0x3f8] sm:$0xff]
        %v3412 = vld [vmem:[#allocation2 + $0x400] sm:$0xff]
        %v3413 = vld [vmem:[#allocation2 + $0x408] sm:$0xff]
        %v3414 = vld [vmem:[#allocation2 + $0x410] sm:$0xff]
        %v3415 = vld [vmem:[#allocation2 + $0x418] sm:$0xff]
        %v3416 = vld [vmem:[#allocation2 + $0x420] sm:$0xff]
        %v3417 = vld [vmem:[#allocation2 + $0x428] sm:$0xff]
        %v3418 = vld [vmem:[#allocation2 + $0x430] sm:$0xff]
        %v3419 = vld [vmem:[#allocation2 + $0x438] sm:$0xff]
        %v3420 = vld [vmem:[#allocation2 + $0x440] sm:$0xff]
        %v3421 = vld [vmem:[#allocation2 + $0x448] sm:$0xff]
        %v3422 = vld [vmem:[#allocation2 + $0x450] sm:$0xff]
        %v3423 = vld [vmem:[#allocation2 + $0x458] sm:$0xff]
        %v3424 = vld [vmem:[#allocation2 + $0x460] sm:$0xff]
        %v3425 = vld [vmem:[#allocation2 + $0x468] sm:$0xff]
        %v3426 = vld [vmem:[#allocation2 + $0x470] sm:$0xff]
        %v3427 = vld [vmem:[#allocation2 + $0x478] sm:$0xff]
        %v3428 = vld [vmem:[#allocation2 + $0x480] sm:$0xff]
        %v3429 = vld [vmem:[#allocation2 + $0x488] sm:$0xff]
        %v3430 = vld [vmem:[#allocation2 + $0x490] sm:$0xff]
        %v3431 = vld [vmem:[#allocation2 + $0x498] sm:$0xff]
        %v3432 = vld [vmem:[#allocation2 + $0x4a0] sm:$0xff]
        %v3433 = vld [vmem:[#allocation2 + $0x4a8] sm:$0xff]
        %v3434 = vld [vmem:[#allocation2 + $0x4b0] sm:$0xff]
        %v3435 = vld [vmem:[#allocation2 + $0x4b8] sm:$0xff]
        %v3436 = vld [vmem:[#allocation2 + $0x4c0] sm:$0xff]
        %v3437 = vld [vmem:[#allocation2 + $0x4c8] sm:$0xff]
        %v3438 = vld [vmem:[#allocation2 + $0x4d0] sm:$0xff]
        %v3439 = vld [vmem:[#allocation2 + $0x4d8] sm:$0xff]
        %v3440 = vld [vmem:[#allocation2 + $0x4e0] sm:$0xff]
        %v3441 = vld [vmem:[#allocation2 + $0x4e8] sm:$0xff]
        %v3442 = vld [vmem:[#allocation2 + $0x4f0] sm:$0xff]
        %v3443 = vld [vmem:[#allocation2 + $0x4f8] sm:$0xff]
        %v3444 = vld [vmem:[#allocation2 + $0x500] sm:$0xff]
        %v3445 = vld [vmem:[#allocation2 + $0x508] sm:$0xff]
        %v3446 = vld [vmem:[#allocation2 + $0x510] sm:$0xff]
        %v3447 = vld [vmem:[#allocation2 + $0x518] sm:$0xff]
        %v3448 = vld [vmem:[#allocation2 + $0x520] sm:$0xff]
        %v3449 = vld [vmem:[#allocation2 + $0x528] sm:$0xff]
        %v3450 = vld [vmem:[#allocation2 + $0x530] sm:$0xff]
        %v3451 = vld [vmem:[#allocation2 + $0x538] sm:$0xff]
        %v3452 = vadd.f32 %v3284, %v2555
        %v3453 = vadd.f32 %v3285, %v2557
        %v3454 = vadd.f32 %v3286, %v2708
        %v3455 = vadd.f32 %v3287, %v2710
        %v3456 = vadd.f32 %v3288, %v2861
        %v3457 = vadd.f32 %v3289, %v2863
        %v3458 = vadd.f32 %v3290, %v3014
        %v3459 = vadd.f32 %v3291, %v2559
        %v3460 = vadd.f32 %v3292, %v2561
        %v3461 = vadd.f32 %v3293, %v2712
        %v3462 = vadd.f32 %v3294, %v2714
        %v3463 = vadd.f32 %v3295, %v2865
        %v3464 = vadd.f32 %v3296, %v2867
        %v3465 = vadd.f32 %v3297, %v3017
        %v3466 = vadd.f32 %v3298, %v2565
        %v3467 = vadd.f32 %v3299, %v2567
        %v3468 = vadd.f32 %v3300, %v2718
        %v3469 = vadd.f32 %v3301, %v2720
        %v3470 = vadd.f32 %v3302, %v2871
        %v3471 = vadd.f32 %v3303, %v2873
        %v3472 = vadd.f32 %v3304, %v3022
        %v3473 = vadd.f32 %v3305, %v2569
        %v3474 = vadd.f32 %v3306, %v2571
        %v3475 = vadd.f32 %v3307, %v2722
        %v3476 = vadd.f32 %v3308, %v2724
        %v3477 = vadd.f32 %v3309, %v2875
        %v3478 = vadd.f32 %v3310, %v2877
        %v3479 = vadd.f32 %v3311, %v3025
        %v3480 = vadd.f32 %v3312, %v2575
        %v3481 = vadd.f32 %v3313, %v2577
        %v3482 = vadd.f32 %v3314, %v2728
        %v3483 = vadd.f32 %v3315, %v2730
        %v3484 = vadd.f32 %v3316, %v2881
        %v3485 = vadd.f32 %v3317, %v2883
        %v3486 = vadd.f32 %v3318, %v3030
        %v3487 = vadd.f32 %v3319, %v2579
        %v3488 = vadd.f32 %v3320, %v2581
        %v3489 = vadd.f32 %v3321, %v2732
        %v3490 = vadd.f32 %v3322, %v2734
        %v3491 = vadd.f32 %v3323, %v2885
        %v3492 = vadd.f32 %v3324, %v2887
        %v3493 = vadd.f32 %v3325, %v3033
        %v3494 = vadd.f32 %v3326, %v2585
        %v3495 = vadd.f32 %v3327, %v2587
        %v3496 = vadd.f32 %v3328, %v2738
        %v3497 = vadd.f32 %v3329, %v2740
        %v3498 = vadd.f32 %v3330, %v2891
        %v3499 = vadd.f32 %v3331, %v2893
        %v3500 = vadd.f32 %v3332, %v3038
        %v3501 = vadd.f32 %v3333, %v2589
        %v3502 = vadd.f32 %v3334, %v2591
        %v3503 = vadd.f32 %v3335, %v2742
        %v3504 = vadd.f32 %v3336, %v2744
        %v3505 = vadd.f32 %v3337, %v2895
        %v3506 = vadd.f32 %v3338, %v2897
        %v3507 = vadd.f32 %v3339, %v3041
        %v3508 = vadd.f32 %v3340, %v2595
        %v3509 = vadd.f32 %v3341, %v2597
        %v3510 = vadd.f32 %v3342, %v2748
        %v3511 = vadd.f32 %v3343, %v2750
        %v3512 = vadd.f32 %v3344, %v2901
        %v3513 = vadd.f32 %v3345, %v2903
        %v3514 = vadd.f32 %v3346, %v3046
        %v3515 = vadd.f32 %v3347, %v2599
        %v3516 = vadd.f32 %v3348, %v2601
        %v3517 = vadd.f32 %v3349, %v2752
        %v3518 = vadd.f32 %v3350, %v2754
        %v3519 = vadd.f32 %v3351, %v2905
        %v3520 = vadd.f32 %v3352, %v2907
        %v3521 = vadd.f32 %v3353, %v3049
        %v3522 = vadd.f32 %v3354, %v2605
        %v3523 = vadd.f32 %v3355, %v2607
        %v3524 = vadd.f32 %v3356, %v2758
        %v3525 = vadd.f32 %v3357, %v2760
        %v3526 = vadd.f32 %v3358, %v2911
        %v3527 = vadd.f32 %v3359, %v2913
        %v3528 = vadd.f32 %v3360, %v3054
        %v3529 = vadd.f32 %v3361, %v2609
        %v3530 = vadd.f32 %v3362, %v2611
        %v3531 = vadd.f32 %v3363, %v2762
        %v3532 = vadd.f32 %v3364, %v2764
        %v3533 = vadd.f32 %v3365, %v2915
        %v3534 = vadd.f32 %v3366, %v2917
        %v3535 = vadd.f32 %v3367, %v3057
        %v3536 = vadd.f32 %v3368, %v2615
        %v3537 = vadd.f32 %v3369, %v2617
        %v3538 = vadd.f32 %v3370, %v2768
        %v3539 = vadd.f32 %v3371, %v2770
        %v3540 = vadd.f32 %v3372, %v2921
        %v3541 = vadd.f32 %v3373, %v2923
        %v3542 = vadd.f32 %v3374, %v3062
        %v3543 = vadd.f32 %v3375, %v2619
        %v3544 = vadd.f32 %v3376, %v2621
        %v3545 = vadd.f32 %v3377, %v2772
        %v3546 = vadd.f32 %v3378, %v2774
        %v3547 = vadd.f32 %v3379, %v2925
        %v3548 = vadd.f32 %v3380, %v2927
        %v3549 = vadd.f32 %v3381, %v3065
        %v3550 = vadd.f32 %v3382, %v2625
        %v3551 = vadd.f32 %v3383, %v2627
        %v3552 = vadd.f32 %v3384, %v2778
        %v3553 = vadd.f32 %v3385, %v2780
        %v3554 = vadd.f32 %v3386, %v2931
        %v3555 = vadd.f32 %v3387, %v2933
        %v3556 = vadd.f32 %v3388, %v3070
        %v3557 = vadd.f32 %v3389, %v2629
        %v3558 = vadd.f32 %v3390, %v2631
        %v3559 = vadd.f32 %v3391, %v2782
        %v3560 = vadd.f32 %v3392, %v2784
        %v3561 = vadd.f32 %v3393, %v2935
        %v3562 = vadd.f32 %v3394, %v2937
        %v3563 = vadd.f32 %v3395, %v3073
        %v3564 = vadd.f32 %v3396, %v2635
        %v3565 = vadd.f32 %v3397, %v2637
        %v3566 = vadd.f32 %v3398, %v2788
        %v3567 = vadd.f32 %v3399, %v2790
        %v3568 = vadd.f32 %v3400, %v2941
        %v3569 = vadd.f32 %v3401, %v2943
        %v3570 = vadd.f32 %v3402, %v3078
        %v3571 = vadd.f32 %v3403, %v2639
        %v3572 = vadd.f32 %v3404, %v2641
        %v3573 = vadd.f32 %v3405, %v2792
        %v3574 = vadd.f32 %v3406, %v2794
        %v3575 = vadd.f32 %v3407, %v2945
        %v3576 = vadd.f32 %v3408, %v2947
        %v3577 = vadd.f32 %v3409, %v3081
        %v3578 = vadd.f32 %v3410, %v2645
        %v3579 = vadd.f32 %v3411, %v2647
        %v3580 = vadd.f32 %v3412, %v2798
        %v3581 = vadd.f32 %v3413, %v2800
        %v3582 = vadd.f32 %v3414, %v2951
        %v3583 = vadd.f32 %v3415, %v2953
        %v3584 = vadd.f32 %v3416, %v3086
        %v3585 = vadd.f32 %v3417, %v2649
        %v3586 = vadd.f32 %v3418, %v2651
        %v3587 = vadd.f32 %v3419, %v2802
        %v3588 = vadd.f32 %v3420, %v2804
        %v3589 = vadd.f32 %v3421, %v2955
        %v3590 = vadd.f32 %v3422, %v2957
        %v3591 = vadd.f32 %v3423, %v3089
        %v3592 = vadd.f32 %v3424, %v2655
        %v3593 = vadd.f32 %v3425, %v2657
        %v3594 = vadd.f32 %v3426, %v2808
        %v3595 = vadd.f32 %v3427, %v2810
        %v3596 = vadd.f32 %v3428, %v2961
        %v3597 = vadd.f32 %v3429, %v2963
        %v3598 = vadd.f32 %v3430, %v3094
        %v3599 = vadd.f32 %v3431, %v2659
        %v3600 = vadd.f32 %v3432, %v2661
        %v3601 = vadd.f32 %v3433, %v2812
        %v3602 = vadd.f32 %v3434, %v2814
        %v3603 = vadd.f32 %v3435, %v2965
        %v3604 = vadd.f32 %v3436, %v2967
        %v3605 = vadd.f32 %v3437, %v3097
        %v3606 = vadd.f32 %v3438, %v2665
        %v3607 = vadd.f32 %v3439, %v2667
        %v3608 = vadd.f32 %v3440, %v2818
        %v3609 = vadd.f32 %v3441, %v2820
        %v3610 = vadd.f32 %v3442, %v2971
        %v3611 = vadd.f32 %v3443, %v2973
        %v3612 = vadd.f32 %v3444, %v3102
        %v3613 = vadd.f32 %v3445, %v2669
        %v3614 = vadd.f32 %v3446, %v2671
        %v3615 = vadd.f32 %v3447, %v2822
        %v3616 = vadd.f32 %v3448, %v2824
        %v3617 = vadd.f32 %v3449, %v2975
        %v3618 = vadd.f32 %v3450, %v2977
        %v3619 = vadd.f32 %v3451, %v3105
        %3620 = vst [vmem:[#allocation2] sm:$0xff] %v3452
        %3621 = vst [vmem:[#allocation2 + $0x8] sm:$0xff] %v3453
        %3622 = vst [vmem:[#allocation2 + $0x10] sm:$0xff] %v3454
        %3623 = vst [vmem:[#allocation2 + $0x18] sm:$0xff] %v3455
        %3624 = vst [vmem:[#allocation2 + $0x20] sm:$0xff] %v3456
        %3625 = vst [vmem:[#allocation2 + $0x28] sm:$0xff] %v3457
        %3626 = vst.msk [vmem:[#allocation2 + $0x30] sm:$0xff] %vm418, %v3458
        %3627 = vst [vmem:[#allocation2 + $0x38] sm:$0xff] %v3459
        %3628 = vst [vmem:[#allocation2 + $0x40] sm:$0xff] %v3460
        %3629 = vst [vmem:[#allocation2 + $0x48] sm:$0xff] %v3461
        %3630 = vst [vmem:[#allocation2 + $0x50] sm:$0xff] %v3462
        %3631 = vst [vmem:[#allocation2 + $0x58] sm:$0xff] %v3463
        %3632 = vst [vmem:[#allocation2 + $0x60] sm:$0xff] %v3464
        %3633 = vst.msk [vmem:[#allocation2 + $0x68] sm:$0xff] %vm418, %v3465
        %3634 = vst [vmem:[#allocation2 + $0x70] sm:$0xff] %v3466
        %3635 = vst [vmem:[#allocation2 + $0x78] sm:$0xff] %v3467
        %3636 = vst [vmem:[#allocation2 + $0x80] sm:$0xff] %v3468
        %3637 = vst [vmem:[#allocation2 + $0x88] sm:$0xff] %v3469
        %3638 = vst [vmem:[#allocation2 + $0x90] sm:$0xff] %v3470
        %3639 = vst [vmem:[#allocation2 + $0x98] sm:$0xff] %v3471
        %3640 = vst.msk [vmem:[#allocation2 + $0xa0] sm:$0xff] %vm418, %v3472
        %3641 = vst [vmem:[#allocation2 + $0xa8] sm:$0xff] %v3473
        %3642 = vst [vmem:[#allocation2 + $0xb0] sm:$0xff] %v3474
        %3643 = vst [vmem:[#allocation2 + $0xb8] sm:$0xff] %v3475
        %3644 = vst [vmem:[#allocation2 + $0xc0] sm:$0xff] %v3476
        %3645 = vst [vmem:[#allocation2 + $0xc8] sm:$0xff] %v3477
        %3646 = vst [vmem:[#allocation2 + $0xd0] sm:$0xff] %v3478
        %3647 = vst.msk [vmem:[#allocation2 + $0xd8] sm:$0xff] %vm418, %v3479
        %3648 = vst [vmem:[#allocation2 + $0xe0] sm:$0xff] %v3480
        %3649 = vst [vmem:[#allocation2 + $0xe8] sm:$0xff] %v3481
        %3650 = vst [vmem:[#allocation2 + $0xf0] sm:$0xff] %v3482
        %3651 = vst [vmem:[#allocation2 + $0xf8] sm:$0xff] %v3483
        %3652 = vst [vmem:[#allocation2 + $0x100] sm:$0xff] %v3484
        %3653 = vst [vmem:[#allocation2 + $0x108] sm:$0xff] %v3485
        %3654 = vst.msk [vmem:[#allocation2 + $0x110] sm:$0xff] %vm418, %v3486
        %3655 = vst [vmem:[#allocation2 + $0x118] sm:$0xff] %v3487
        %3656 = vst [vmem:[#allocation2 + $0x120] sm:$0xff] %v3488
        %3657 = vst [vmem:[#allocation2 + $0x128] sm:$0xff] %v3489
        %3658 = vst [vmem:[#allocation2 + $0x130] sm:$0xff] %v3490
        %3659 = vst [vmem:[#allocation2 + $0x138] sm:$0xff] %v3491
        %3660 = vst [vmem:[#allocation2 + $0x140] sm:$0xff] %v3492
        %3661 = vst.msk [vmem:[#allocation2 + $0x148] sm:$0xff] %vm418, %v3493
        %3662 = vst [vmem:[#allocation2 + $0x150] sm:$0xff] %v3494
        %3663 = vst [vmem:[#allocation2 + $0x158] sm:$0xff] %v3495
        %3664 = vst [vmem:[#allocation2 + $0x160] sm:$0xff] %v3496
        %3665 = vst [vmem:[#allocation2 + $0x168] sm:$0xff] %v3497
        %3666 = vst [vmem:[#allocation2 + $0x170] sm:$0xff] %v3498
        %3667 = vst [vmem:[#allocation2 + $0x178] sm:$0xff] %v3499
        %3668 = vst.msk [vmem:[#allocation2 + $0x180] sm:$0xff] %vm418, %v3500
        %3669 = vst [vmem:[#allocation2 + $0x188] sm:$0xff] %v3501
        %3670 = vst [vmem:[#allocation2 + $0x190] sm:$0xff] %v3502
        %3671 = vst [vmem:[#allocation2 + $0x198] sm:$0xff] %v3503
        %3672 = vst [vmem:[#allocation2 + $0x1a0] sm:$0xff] %v3504
        %3673 = vst [vmem:[#allocation2 + $0x1a8] sm:$0xff] %v3505
        %3674 = vst [vmem:[#allocation2 + $0x1b0] sm:$0xff] %v3506
        %3675 = vst.msk [vmem:[#allocation2 + $0x1b8] sm:$0xff] %vm418, %v3507
        %3676 = vst [vmem:[#allocation2 + $0x1c0] sm:$0xff] %v3508
        %3677 = vst [vmem:[#allocation2 + $0x1c8] sm:$0xff] %v3509
        %3678 = vst [vmem:[#allocation2 + $0x1d0] sm:$0xff] %v3510
        %3679 = vst [vmem:[#allocation2 + $0x1d8] sm:$0xff] %v3511
        %3680 = vst [vmem:[#allocation2 + $0x1e0] sm:$0xff] %v3512
        %3681 = vst [vmem:[#allocation2 + $0x1e8] sm:$0xff] %v3513
        %3682 = vst.msk [vmem:[#allocation2 + $0x1f0] sm:$0xff] %vm418, %v3514
        %3683 = vst [vmem:[#allocation2 + $0x1f8] sm:$0xff] %v3515
        %3684 = vst [vmem:[#allocation2 + $0x200] sm:$0xff] %v3516
        %3685 = vst [vmem:[#allocation2 + $0x208] sm:$0xff] %v3517
        %3686 = vst [vmem:[#allocation2 + $0x210] sm:$0xff] %v3518
        %3687 = vst [vmem:[#allocation2 + $0x218] sm:$0xff] %v3519
        %3688 = vst [vmem:[#allocation2 + $0x220] sm:$0xff] %v3520
        %3689 = vst.msk [vmem:[#allocation2 + $0x228] sm:$0xff] %vm418, %v3521
        %3690 = vst [vmem:[#allocation2 + $0x230] sm:$0xff] %v3522
        %3691 = vst [vmem:[#allocation2 + $0x238] sm:$0xff] %v3523
        %3692 = vst [vmem:[#allocation2 + $0x240] sm:$0xff] %v3524
        %3693 = vst [vmem:[#allocation2 + $0x248] sm:$0xff] %v3525
        %3694 = vst [vmem:[#allocation2 + $0x250] sm:$0xff] %v3526
        %3695 = vst [vmem:[#allocation2 + $0x258] sm:$0xff] %v3527
        %3696 = vst.msk [vmem:[#allocation2 + $0x260] sm:$0xff] %vm418, %v3528
        %3697 = vst [vmem:[#allocation2 + $0x268] sm:$0xff] %v3529
        %3698 = vst [vmem:[#allocation2 + $0x270] sm:$0xff] %v3530
        %3699 = vst [vmem:[#allocation2 + $0x278] sm:$0xff] %v3531
        %3700 = vst [vmem:[#allocation2 + $0x280] sm:$0xff] %v3532
        %3701 = vst [vmem:[#allocation2 + $0x288] sm:$0xff] %v3533
        %3702 = vst [vmem:[#allocation2 + $0x290] sm:$0xff] %v3534
        %3703 = vst.msk [vmem:[#allocation2 + $0x298] sm:$0xff] %vm418, %v3535
        %3704 = vst [vmem:[#allocation2 + $0x2a0] sm:$0xff] %v3536
        %3705 = vst [vmem:[#allocation2 + $0x2a8] sm:$0xff] %v3537
        %3706 = vst [vmem:[#allocation2 + $0x2b0] sm:$0xff] %v3538
        %3707 = vst [vmem:[#allocation2 + $0x2b8] sm:$0xff] %v3539
        %3708 = vst [vmem:[#allocation2 + $0x2c0] sm:$0xff] %v3540
        %3709 = vst [vmem:[#allocation2 + $0x2c8] sm:$0xff] %v3541
        %3710 = vst.msk [vmem:[#allocation2 + $0x2d0] sm:$0xff] %vm418, %v3542
        %3711 = vst [vmem:[#allocation2 + $0x2d8] sm:$0xff] %v3543
        %3712 = vst [vmem:[#allocation2 + $0x2e0] sm:$0xff] %v3544
        %3713 = vst [vmem:[#allocation2 + $0x2e8] sm:$0xff] %v3545
        %3714 = vst [vmem:[#allocation2 + $0x2f0] sm:$0xff] %v3546
        %3715 = vst [vmem:[#allocation2 + $0x2f8] sm:$0xff] %v3547
        %3716 = vst [vmem:[#allocation2 + $0x300] sm:$0xff] %v3548
        %3717 = vst.msk [vmem:[#allocation2 + $0x308] sm:$0xff] %vm418, %v3549
        %3718 = vst [vmem:[#allocation2 + $0x310] sm:$0xff] %v3550
        %3719 = vst [vmem:[#allocation2 + $0x318] sm:$0xff] %v3551
        %3720 = vst [vmem:[#allocation2 + $0x320] sm:$0xff] %v3552
        %3721 = vst [vmem:[#allocation2 + $0x328] sm:$0xff] %v3553
        %3722 = vst [vmem:[#allocation2 + $0x330] sm:$0xff] %v3554
        %3723 = vst [vmem:[#allocation2 + $0x338] sm:$0xff] %v3555
        %3724 = vst.msk [vmem:[#allocation2 + $0x340] sm:$0xff] %vm418, %v3556
        %3725 = vst [vmem:[#allocation2 + $0x348] sm:$0xff] %v3557
        %3726 = vst [vmem:[#allocation2 + $0x350] sm:$0xff] %v3558
        %3727 = vst [vmem:[#allocation2 + $0x358] sm:$0xff] %v3559
        %3728 = vst [vmem:[#allocation2 + $0x360] sm:$0xff] %v3560
        %3729 = vst [vmem:[#allocation2 + $0x368] sm:$0xff] %v3561
        %3730 = vst [vmem:[#allocation2 + $0x370] sm:$0xff] %v3562
        %3731 = vst.msk [vmem:[#allocation2 + $0x378] sm:$0xff] %vm418, %v3563
        %3732 = vst [vmem:[#allocation2 + $0x380] sm:$0xff] %v3564
        %3733 = vst [vmem:[#allocation2 + $0x388] sm:$0xff] %v3565
        %3734 = vst [vmem:[#allocation2 + $0x390] sm:$0xff] %v3566
        %3735 = vst [vmem:[#allocation2 + $0x398] sm:$0xff] %v3567
        %3736 = vst [vmem:[#allocation2 + $0x3a0] sm:$0xff] %v3568
        %3737 = vst [vmem:[#allocation2 + $0x3a8] sm:$0xff] %v3569
        %3738 = vst.msk [vmem:[#allocation2 + $0x3b0] sm:$0xff] %vm418, %v3570
        %3739 = vst [vmem:[#allocation2 + $0x3b8] sm:$0xff] %v3571
        %3740 = vst [vmem:[#allocation2 + $0x3c0] sm:$0xff] %v3572
        %3741 = vst [vmem:[#allocation2 + $0x3c8] sm:$0xff] %v3573
        %3742 = vst [vmem:[#allocation2 + $0x3d0] sm:$0xff] %v3574
        %3743 = vst [vmem:[#allocation2 + $0x3d8] sm:$0xff] %v3575
        %3744 = vst [vmem:[#allocation2 + $0x3e0] sm:$0xff] %v3576
        %3745 = vst.msk [vmem:[#allocation2 + $0x3e8] sm:$0xff] %vm418, %v3577
        %3746 = vst [vmem:[#allocation2 + $0x3f0] sm:$0xff] %v3578
        %3747 = vst [vmem:[#allocation2 + $0x3f8] sm:$0xff] %v3579
        %3748 = vst [vmem:[#allocation2 + $0x400] sm:$0xff] %v3580
        %3749 = vst [vmem:[#allocation2 + $0x408] sm:$0xff] %v3581
        %3750 = vst [vmem:[#allocation2 + $0x410] sm:$0xff] %v3582
        %3751 = vst [vmem:[#allocation2 + $0x418] sm:$0xff] %v3583
        %3752 = vst.msk [vmem:[#allocation2 + $0x420] sm:$0xff] %vm418, %v3584
        %3753 = vst [vmem:[#allocation2 + $0x428] sm:$0xff] %v3585
        %3754 = vst [vmem:[#allocation2 + $0x430] sm:$0xff] %v3586
        %3755 = vst [vmem:[#allocation2 + $0x438] sm:$0xff] %v3587
        %3756 = vst [vmem:[#allocation2 + $0x440] sm:$0xff] %v3588
        %3757 = vst [vmem:[#allocation2 + $0x448] sm:$0xff] %v3589
        %3758 = vst [vmem:[#allocation2 + $0x450] sm:$0xff] %v3590
        %3759 = vst.msk [vmem:[#allocation2 + $0x458] sm:$0xff] %vm418, %v3591
        %3760 = vst [vmem:[#allocation2 + $0x460] sm:$0xff] %v3592
        %3761 = vst [vmem:[#allocation2 + $0x468] sm:$0xff] %v3593
        %3762 = vst [vmem:[#allocation2 + $0x470] sm:$0xff] %v3594
        %3763 = vst [vmem:[#allocation2 + $0x478] sm:$0xff] %v3595
        %3764 = vst [vmem:[#allocation2 + $0x480] sm:$0xff] %v3596
        %3765 = vst [vmem:[#allocation2 + $0x488] sm:$0xff] %v3597
        %3766 = vst.msk [vmem:[#allocation2 + $0x490] sm:$0xff] %vm418, %v3598
        %3767 = vst [vmem:[#allocation2 + $0x498] sm:$0xff] %v3599
        %3768 = vst [vmem:[#allocation2 + $0x4a0] sm:$0xff] %v3600
        %3769 = vst [vmem:[#allocation2 + $0x4a8] sm:$0xff] %v3601
        %3770 = vst [vmem:[#allocation2 + $0x4b0] sm:$0xff] %v3602
        %3771 = vst [vmem:[#allocation2 + $0x4b8] sm:$0xff] %v3603
        %3772 = vst [vmem:[#allocation2 + $0x4c0] sm:$0xff] %v3604
        %3773 = vst.msk [vmem:[#allocation2 + $0x4c8] sm:$0xff] %vm418, %v3605
        %3774 = vst [vmem:[#allocation2 + $0x4d0] sm:$0xff] %v3606
        %3775 = vst [vmem:[#allocation2 + $0x4d8] sm:$0xff] %v3607
        %3776 = vst [vmem:[#allocation2 + $0x4e0] sm:$0xff] %v3608
        %3777 = vst [vmem:[#allocation2 + $0x4e8] sm:$0xff] %v3609
        %3778 = vst [vmem:[#allocation2 + $0x4f0] sm:$0xff] %v3610
        %3779 = vst [vmem:[#allocation2 + $0x4f8] sm:$0xff] %v3611
        %3780 = vst.msk [vmem:[#allocation2 + $0x500] sm:$0xff] %vm418, %v3612
        %3781 = vst [vmem:[#allocation2 + $0x508] sm:$0xff] %v3613
        %3782 = vst [vmem:[#allocation2 + $0x510] sm:$0xff] %v3614
        %3783 = vst [vmem:[#allocation2 + $0x518] sm:$0xff] %v3615
        %3784 = vst [vmem:[#allocation2 + $0x520] sm:$0xff] %v3616
        %3785 = vst [vmem:[#allocation2 + $0x528] sm:$0xff] %v3617
        %3786 = vst [vmem:[#allocation2 + $0x530] sm:$0xff] %v3618
        %3787 = vst.msk [vmem:[#allocation2 + $0x538] sm:$0xff] %vm418, %v3619
      $region44: #{fused_module.1} parent=35 // pred_fallthru
        _
      %p3788 = scmp.eq.s32.totalorder %s15, 2
      // Predicated region
      $region45: #{fused_module.1} parent=35 // pred_check
        %p3789 = pneg %p3788
      $region46: #{fused_module.1} parent=35 // pred_check_branch
        %3791 = sbr.rel (%p3789) target = $region48
      $region47: #{fused_module.1} parent=35 // pred_region
        %v3792 = vld [vmem:[#allocation2] sm:$0xff]
        %v3793 = vld [vmem:[#allocation2 + $0x8] sm:$0xff]
        %v3794 = vld [vmem:[#allocation2 + $0x10] sm:$0xff]
        %v3795 = vld [vmem:[#allocation2 + $0x18] sm:$0xff]
        %v3796 = vld [vmem:[#allocation2 + $0x20] sm:$0xff]
        %v3797 = vld [vmem:[#allocation2 + $0x28] sm:$0xff]
        %v3798 = vld [vmem:[#allocation2 + $0x30] sm:$0xff]
        %v3799 = vld [vmem:[#allocation2 + $0x38] sm:$0xff]
        %v3800 = vld [vmem:[#allocation2 + $0x40] sm:$0xff]
        %v3801 = vld [vmem:[#allocation2 + $0x48] sm:$0xff]
        %v3802 = vld [vmem:[#allocation2 + $0x50] sm:$0xff]
        %v3803 = vld [vmem:[#allocation2 + $0x58] sm:$0xff]
        %v3804 = vld [vmem:[#allocation2 + $0x60] sm:$0xff]
        %v3805 = vld [vmem:[#allocation2 + $0x68] sm:$0xff]
        %v3806 = vld [vmem:[#allocation2 + $0x70] sm:$0xff]
        %v3807 = vld [vmem:[#allocation2 + $0x78] sm:$0xff]
        %v3808 = vld [vmem:[#allocation2 + $0x80] sm:$0xff]
        %v3809 = vld [vmem:[#allocation2 + $0x88] sm:$0xff]
        %v3810 = vld [vmem:[#allocation2 + $0x90] sm:$0xff]
        %v3811 = vld [vmem:[#allocation2 + $0x98] sm:$0xff]
        %v3812 = vld [vmem:[#allocation2 + $0xa0] sm:$0xff]
        %v3813 = vld [vmem:[#allocation2 + $0xa8] sm:$0xff]
        %v3814 = vld [vmem:[#allocation2 + $0xb0] sm:$0xff]
        %v3815 = vld [vmem:[#allocation2 + $0xb8] sm:$0xff]
        %v3816 = vld [vmem:[#allocation2 + $0xc0] sm:$0xff]
        %v3817 = vld [vmem:[#allocation2 + $0xc8] sm:$0xff]
        %v3818 = vld [vmem:[#allocation2 + $0xd0] sm:$0xff]
        %v3819 = vld [vmem:[#allocation2 + $0xd8] sm:$0xff]
        %v3820 = vld [vmem:[#allocation2 + $0xe0] sm:$0xff]
        %v3821 = vld [vmem:[#allocation2 + $0xe8] sm:$0xff]
        %v3822 = vld [vmem:[#allocation2 + $0xf0] sm:$0xff]
        %v3823 = vld [vmem:[#allocation2 + $0xf8] sm:$0xff]
        %v3824 = vld [vmem:[#allocation2 + $0x100] sm:$0xff]
        %v3825 = vld [vmem:[#allocation2 + $0x108] sm:$0xff]
        %v3826 = vld [vmem:[#allocation2 + $0x110] sm:$0xff]
        %v3827 = vld [vmem:[#allocation2 + $0x118] sm:$0xff]
        %v3828 = vld [vmem:[#allocation2 + $0x120] sm:$0xff]
        %v3829 = vld [vmem:[#allocation2 + $0x128] sm:$0xff]
        %v3830 = vld [vmem:[#allocation2 + $0x130] sm:$0xff]
        %v3831 = vld [vmem:[#allocation2 + $0x138] sm:$0xff]
        %v3832 = vld [vmem:[#allocation2 + $0x140] sm:$0xff]
        %v3833 = vld [vmem:[#allocation2 + $0x148] sm:$0xff]
        %v3834 = vld [vmem:[#allocation2 + $0x150] sm:$0xff]
        %v3835 = vld [vmem:[#allocation2 + $0x158] sm:$0xff]
        %v3836 = vld [vmem:[#allocation2 + $0x160] sm:$0xff]
        %v3837 = vld [vmem:[#allocation2 + $0x168] sm:$0xff]
        %v3838 = vld [vmem:[#allocation2 + $0x170] sm:$0xff]
        %v3839 = vld [vmem:[#allocation2 + $0x178] sm:$0xff]
        %v3840 = vld [vmem:[#allocation2 + $0x180] sm:$0xff]
        %v3841 = vld [vmem:[#allocation2 + $0x188] sm:$0xff]
        %v3842 = vld [vmem:[#allocation2 + $0x190] sm:$0xff]
        %v3843 = vld [vmem:[#allocation2 + $0x198] sm:$0xff]
        %v3844 = vld [vmem:[#allocation2 + $0x1a0] sm:$0xff]
        %v3845 = vld [vmem:[#allocation2 + $0x1a8] sm:$0xff]
        %v3846 = vld [vmem:[#allocation2 + $0x1b0] sm:$0xff]
        %v3847 = vld [vmem:[#allocation2 + $0x1b8] sm:$0xff]
        %v3848 = vld [vmem:[#allocation2 + $0x1c0] sm:$0xff]
        %v3849 = vld [vmem:[#allocation2 + $0x1c8] sm:$0xff]
        %v3850 = vld [vmem:[#allocation2 + $0x1d0] sm:$0xff]
        %v3851 = vld [vmem:[#allocation2 + $0x1d8] sm:$0xff]
        %v3852 = vld [vmem:[#allocation2 + $0x1e0] sm:$0xff]
        %v3853 = vld [vmem:[#allocation2 + $0x1e8] sm:$0xff]
        %v3854 = vld [vmem:[#allocation2 + $0x1f0] sm:$0xff]
        %v3855 = vld [vmem:[#allocation2 + $0x1f8] sm:$0xff]
        %v3856 = vld [vmem:[#allocation2 + $0x200] sm:$0xff]
        %v3857 = vld [vmem:[#allocation2 + $0x208] sm:$0xff]
        %v3858 = vld [vmem:[#allocation2 + $0x210] sm:$0xff]
        %v3859 = vld [vmem:[#allocation2 + $0x218] sm:$0xff]
        %v3860 = vld [vmem:[#allocation2 + $0x220] sm:$0xff]
        %v3861 = vld [vmem:[#allocation2 + $0x228] sm:$0xff]
        %v3862 = vld [vmem:[#allocation2 + $0x230] sm:$0xff]
        %v3863 = vld [vmem:[#allocation2 + $0x238] sm:$0xff]
        %v3864 = vld [vmem:[#allocation2 + $0x240] sm:$0xff]
        %v3865 = vld [vmem:[#allocation2 + $0x248] sm:$0xff]
        %v3866 = vld [vmem:[#allocation2 + $0x250] sm:$0xff]
        %v3867 = vld [vmem:[#allocation2 + $0x258] sm:$0xff]
        %v3868 = vld [vmem:[#allocation2 + $0x260] sm:$0xff]
        %v3869 = vld [vmem:[#allocation2 + $0x268] sm:$0xff]
        %v3870 = vld [vmem:[#allocation2 + $0x270] sm:$0xff]
        %v3871 = vld [vmem:[#allocation2 + $0x278] sm:$0xff]
        %v3872 = vld [vmem:[#allocation2 + $0x280] sm:$0xff]
        %v3873 = vld [vmem:[#allocation2 + $0x288] sm:$0xff]
        %v3874 = vld [vmem:[#allocation2 + $0x290] sm:$0xff]
        %v3875 = vld [vmem:[#allocation2 + $0x298] sm:$0xff]
        %v3876 = vld [vmem:[#allocation2 + $0x2a0] sm:$0xff]
        %v3877 = vld [vmem:[#allocation2 + $0x2a8] sm:$0xff]
        %v3878 = vld [vmem:[#allocation2 + $0x2b0] sm:$0xff]
        %v3879 = vld [vmem:[#allocation2 + $0x2b8] sm:$0xff]
        %v3880 = vld [vmem:[#allocation2 + $0x2c0] sm:$0xff]
        %v3881 = vld [vmem:[#allocation2 + $0x2c8] sm:$0xff]
        %v3882 = vld [vmem:[#allocation2 + $0x2d0] sm:$0xff]
        %v3883 = vld [vmem:[#allocation2 + $0x2d8] sm:$0xff]
        %v3884 = vld [vmem:[#allocation2 + $0x2e0] sm:$0xff]
        %v3885 = vld [vmem:[#allocation2 + $0x2e8] sm:$0xff]
        %v3886 = vld [vmem:[#allocation2 + $0x2f0] sm:$0xff]
        %v3887 = vld [vmem:[#allocation2 + $0x2f8] sm:$0xff]
        %v3888 = vld [vmem:[#allocation2 + $0x300] sm:$0xff]
        %v3889 = vld [vmem:[#allocation2 + $0x308] sm:$0xff]
        %v3890 = vld [vmem:[#allocation2 + $0x310] sm:$0xff]
        %v3891 = vld [vmem:[#allocation2 + $0x318] sm:$0xff]
        %v3892 = vld [vmem:[#allocation2 + $0x320] sm:$0xff]
        %v3893 = vld [vmem:[#allocation2 + $0x328] sm:$0xff]
        %v3894 = vld [vmem:[#allocation2 + $0x330] sm:$0xff]
        %v3895 = vld [vmem:[#allocation2 + $0x338] sm:$0xff]
        %v3896 = vld [vmem:[#allocation2 + $0x340] sm:$0xff]
        %v3897 = vld [vmem:[#allocation2 + $0x348] sm:$0xff]
        %v3898 = vld [vmem:[#allocation2 + $0x350] sm:$0xff]
        %v3899 = vld [vmem:[#allocation2 + $0x358] sm:$0xff]
        %v3900 = vld [vmem:[#allocation2 + $0x360] sm:$0xff]
        %v3901 = vld [vmem:[#allocation2 + $0x368] sm:$0xff]
        %v3902 = vld [vmem:[#allocation2 + $0x370] sm:$0xff]
        %v3903 = vld [vmem:[#allocation2 + $0x378] sm:$0xff]
        %v3904 = vld [vmem:[#allocation2 + $0x380] sm:$0xff]
        %v3905 = vld [vmem:[#allocation2 + $0x388] sm:$0xff]
        %v3906 = vld [vmem:[#allocation2 + $0x390] sm:$0xff]
        %v3907 = vld [vmem:[#allocation2 + $0x398] sm:$0xff]
        %v3908 = vld [vmem:[#allocation2 + $0x3a0] sm:$0xff]
        %v3909 = vld [vmem:[#allocation2 + $0x3a8] sm:$0xff]
        %v3910 = vld [vmem:[#allocation2 + $0x3b0] sm:$0xff]
        %v3911 = vld [vmem:[#allocation2 + $0x3b8] sm:$0xff]
        %v3912 = vld [vmem:[#allocation2 + $0x3c0] sm:$0xff]
        %v3913 = vld [vmem:[#allocation2 + $0x3c8] sm:$0xff]
        %v3914 = vld [vmem:[#allocation2 + $0x3d0] sm:$0xff]
        %v3915 = vld [vmem:[#allocation2 + $0x3d8] sm:$0xff]
        %v3916 = vld [vmem:[#allocation2 + $0x3e0] sm:$0xff]
        %v3917 = vld [vmem:[#allocation2 + $0x3e8] sm:$0xff]
        %v3918 = vld [vmem:[#allocation2 + $0x3f0] sm:$0xff]
        %v3919 = vld [vmem:[#allocation2 + $0x3f8] sm:$0xff]
        %v3920 = vld [vmem:[#allocation2 + $0x400] sm:$0xff]
        %v3921 = vld [vmem:[#allocation2 + $0x408] sm:$0xff]
        %v3922 = vld [vmem:[#allocation2 + $0x410] sm:$0xff]
        %v3923 = vld [vmem:[#allocation2 + $0x418] sm:$0xff]
        %v3924 = vld [vmem:[#allocation2 + $0x420] sm:$0xff]
        %v3925 = vld [vmem:[#allocation2 + $0x428] sm:$0xff]
        %v3926 = vld [vmem:[#allocation2 + $0x430] sm:$0xff]
        %v3927 = vld [vmem:[#allocation2 + $0x438] sm:$0xff]
        %v3928 = vld [vmem:[#allocation2 + $0x440] sm:$0xff]
        %v3929 = vld [vmem:[#allocation2 + $0x448] sm:$0xff]
        %v3930 = vld [vmem:[#allocation2 + $0x450] sm:$0xff]
        %v3931 = vld [vmem:[#allocation2 + $0x458] sm:$0xff]
        %v3932 = vld [vmem:[#allocation2 + $0x460] sm:$0xff]
        %v3933 = vld [vmem:[#allocation2 + $0x468] sm:$0xff]
        %v3934 = vld [vmem:[#allocation2 + $0x470] sm:$0xff]
        %v3935 = vld [vmem:[#allocation2 + $0x478] sm:$0xff]
        %v3936 = vld [vmem:[#allocation2 + $0x480] sm:$0xff]
        %v3937 = vld [vmem:[#allocation2 + $0x488] sm:$0xff]
        %v3938 = vld [vmem:[#allocation2 + $0x490] sm:$0xff]
        %v3939 = vld [vmem:[#allocation2 + $0x498] sm:$0xff]
        %v3940 = vld [vmem:[#allocation2 + $0x4a0] sm:$0xff]
        %v3941 = vld [vmem:[#allocation2 + $0x4a8] sm:$0xff]
        %v3942 = vld [vmem:[#allocation2 + $0x4b0] sm:$0xff]
        %v3943 = vld [vmem:[#allocation2 + $0x4b8] sm:$0xff]
        %v3944 = vld [vmem:[#allocation2 + $0x4c0] sm:$0xff]
        %v3945 = vld [vmem:[#allocation2 + $0x4c8] sm:$0xff]
        %v3946 = vld [vmem:[#allocation2 + $0x4d0] sm:$0xff]
        %v3947 = vld [vmem:[#allocation2 + $0x4d8] sm:$0xff]
        %v3948 = vld [vmem:[#allocation2 + $0x4e0] sm:$0xff]
        %v3949 = vld [vmem:[#allocation2 + $0x4e8] sm:$0xff]
        %v3950 = vld [vmem:[#allocation2 + $0x4f0] sm:$0xff]
        %v3951 = vld [vmem:[#allocation2 + $0x4f8] sm:$0xff]
        %v3952 = vld [vmem:[#allocation2 + $0x500] sm:$0xff]
        %v3953 = vld [vmem:[#allocation2 + $0x508] sm:$0xff]
        %v3954 = vld [vmem:[#allocation2 + $0x510] sm:$0xff]
        %v3955 = vld [vmem:[#allocation2 + $0x518] sm:$0xff]
        %v3956 = vld [vmem:[#allocation2 + $0x520] sm:$0xff]
        %v3957 = vld [vmem:[#allocation2 + $0x528] sm:$0xff]
        %v3958 = vld [vmem:[#allocation2 + $0x530] sm:$0xff]
        %v3959 = vld [vmem:[#allocation2 + $0x538] sm:$0xff]
        %v3960 = vadd.f32 %v3792, %v3793
        %v3961 = vadd.f32 %v3960, %v3794
        %v3962 = vadd.f32 %v3961, %v3795
        %v3963 = vadd.f32 %v3962, %v3796
        %v3964 = vadd.f32 %v3963, %v3797
        %v3965 = vsel %vm418, %v3798, 0.0
        %v3966 = vadd.f32 %v3964, %v3965
        %3967 = vadd.xlane.f32.xlu0 %v3966
        %v3968 = vpop.xlane.xlu0 %3967
        %v3969 = vadd.f32 %v3799, %v3800
        %v3970 = vadd.f32 %v3969, %v3801
        %v3971 = vadd.f32 %v3970, %v3802
        %v3972 = vadd.f32 %v3971, %v3803
        %v3973 = vadd.f32 %v3972, %v3804
        %v3974 = vsel %vm418, %v3805, 0.0
        %v3975 = vadd.f32 %v3973, %v3974
        %3976 = vadd.xlane.f32.xlu0 %v3975
        %v3977 = vpop.xlane.xlu0 %3976
        %v3978 = vadd.f32 %v3806, %v3807
        %v3979 = vadd.f32 %v3978, %v3808
        %v3980 = vadd.f32 %v3979, %v3809
        %v3981 = vadd.f32 %v3980, %v3810
        %v3982 = vadd.f32 %v3981, %v3811
        %v3983 = vsel %vm418, %v3812, 0.0
        %v3984 = vadd.f32 %v3982, %v3983
        %3985 = vadd.xlane.f32.xlu0 %v3984
        %v3986 = vpop.xlane.xlu0 %3985
        %v3987 = vadd.f32 %v3813, %v3814
        %v3988 = vadd.f32 %v3987, %v3815
        %v3989 = vadd.f32 %v3988, %v3816
        %v3990 = vadd.f32 %v3989, %v3817
        %v3991 = vadd.f32 %v3990, %v3818
        %v3992 = vsel %vm418, %v3819, 0.0
        %v3993 = vadd.f32 %v3991, %v3992
        %3994 = vadd.xlane.f32.xlu0 %v3993
        %v3995 = vpop.xlane.xlu0 %3994
        %v3996 = vadd.f32 %v3820, %v3821
        %v3997 = vadd.f32 %v3996, %v3822
        %v3998 = vadd.f32 %v3997, %v3823
        %v3999 = vadd.f32 %v3998, %v3824
        %v4000 = vadd.f32 %v3999, %v3825
        %v4001 = vsel %vm418, %v3826, 0.0
        %v4002 = vadd.f32 %v4000, %v4001
        %4003 = vadd.xlane.f32.xlu0 %v4002
        %v4004 = vpop.xlane.xlu0 %4003
        %v4005 = vadd.f32 %v3827, %v3828
        %v4006 = vadd.f32 %v4005, %v3829
        %v4007 = vadd.f32 %v4006, %v3830
        %v4008 = vadd.f32 %v4007, %v3831
        %v4009 = vadd.f32 %v4008, %v3832
        %v4010 = vsel %vm418, %v3833, 0.0
        %v4011 = vadd.f32 %v4009, %v4010
        %4012 = vadd.xlane.f32.xlu0 %v4011
        %v4013 = vpop.xlane.xlu0 %4012
        %v4014 = vadd.f32 %v3834, %v3835
        %v4015 = vadd.f32 %v4014, %v3836
        %v4016 = vadd.f32 %v4015, %v3837
        %v4017 = vadd.f32 %v4016, %v3838
        %v4018 = vadd.f32 %v4017, %v3839
        %v4019 = vsel %vm418, %v3840, 0.0
        %v4020 = vadd.f32 %v4018, %v4019
        %4021 = vadd.xlane.f32.xlu0 %v4020
        %v4022 = vpop.xlane.xlu0 %4021
        %v4023 = vadd.f32 %v3841, %v3842
        %v4024 = vadd.f32 %v4023, %v3843
        %v4025 = vadd.f32 %v4024, %v3844
        %v4026 = vadd.f32 %v4025, %v3845
        %v4027 = vadd.f32 %v4026, %v3846
        %v4028 = vsel %vm418, %v3847, 0.0
        %v4029 = vadd.f32 %v4027, %v4028
        %4030 = vadd.xlane.f32.xlu0 %v4029
        %v4031 = vpop.xlane.xlu0 %4030
        %v4032 = vadd.f32 %v3848, %v3849
        %v4033 = vadd.f32 %v4032, %v3850
        %v4034 = vadd.f32 %v4033, %v3851
        %v4035 = vadd.f32 %v4034, %v3852
        %v4036 = vadd.f32 %v4035, %v3853
        %v4037 = vsel %vm418, %v3854, 0.0
        %v4038 = vadd.f32 %v4036, %v4037
        %4039 = vadd.xlane.f32.xlu0 %v4038
        %v4040 = vpop.xlane.xlu0 %4039
        %v4041 = vadd.f32 %v3855, %v3856
        %v4042 = vadd.f32 %v4041, %v3857
        %v4043 = vadd.f32 %v4042, %v3858
        %v4044 = vadd.f32 %v4043, %v3859
        %v4045 = vadd.f32 %v4044, %v3860
        %v4046 = vsel %vm418, %v3861, 0.0
        %v4047 = vadd.f32 %v4045, %v4046
        %4048 = vadd.xlane.f32.xlu0 %v4047
        %v4049 = vpop.xlane.xlu0 %4048
        %v4050 = vadd.f32 %v3862, %v3863
        %v4051 = vadd.f32 %v4050, %v3864
        %v4052 = vadd.f32 %v4051, %v3865
        %v4053 = vadd.f32 %v4052, %v3866
        %v4054 = vadd.f32 %v4053, %v3867
        %v4055 = vsel %vm418, %v3868, 0.0
        %v4056 = vadd.f32 %v4054, %v4055
        %4057 = vadd.xlane.f32.xlu0 %v4056
        %v4058 = vpop.xlane.xlu0 %4057
        %v4059 = vadd.f32 %v3869, %v3870
        %v4060 = vadd.f32 %v4059, %v3871
        %v4061 = vadd.f32 %v4060, %v3872
        %v4062 = vadd.f32 %v4061, %v3873
        %v4063 = vadd.f32 %v4062, %v3874
        %v4064 = vsel %vm418, %v3875, 0.0
        %v4065 = vadd.f32 %v4063, %v4064
        %4066 = vadd.xlane.f32.xlu0 %v4065
        %v4067 = vpop.xlane.xlu0 %4066
        %v4068 = vadd.f32 %v3876, %v3877
        %v4069 = vadd.f32 %v4068, %v3878
        %v4070 = vadd.f32 %v4069, %v3879
        %v4071 = vadd.f32 %v4070, %v3880
        %v4072 = vadd.f32 %v4071, %v3881
        %v4073 = vsel %vm418, %v3882, 0.0
        %v4074 = vadd.f32 %v4072, %v4073
        %4075 = vadd.xlane.f32.xlu0 %v4074
        %v4076 = vpop.xlane.xlu0 %4075
        %v4077 = vadd.f32 %v3883, %v3884
        %v4078 = vadd.f32 %v4077, %v3885
        %v4079 = vadd.f32 %v4078, %v3886
        %v4080 = vadd.f32 %v4079, %v3887
        %v4081 = vadd.f32 %v4080, %v3888
        %v4082 = vsel %vm418, %v3889, 0.0
        %v4083 = vadd.f32 %v4081, %v4082
        %4084 = vadd.xlane.f32.xlu0 %v4083
        %v4085 = vpop.xlane.xlu0 %4084
        %v4086 = vadd.f32 %v3890, %v3891
        %v4087 = vadd.f32 %v4086, %v3892
        %v4088 = vadd.f32 %v4087, %v3893
        %v4089 = vadd.f32 %v4088, %v3894
        %v4090 = vadd.f32 %v4089, %v3895
        %v4091 = vsel %vm418, %v3896, 0.0
        %v4092 = vadd.f32 %v4090, %v4091
        %4093 = vadd.xlane.f32.xlu0 %v4092
        %v4094 = vpop.xlane.xlu0 %4093
        %v4095 = vadd.f32 %v3897, %v3898
        %v4096 = vadd.f32 %v4095, %v3899
        %v4097 = vadd.f32 %v4096, %v3900
        %v4098 = vadd.f32 %v4097, %v3901
        %v4099 = vadd.f32 %v4098, %v3902
        %v4100 = vsel %vm418, %v3903, 0.0
        %v4101 = vadd.f32 %v4099, %v4100
        %4102 = vadd.xlane.f32.xlu0 %v4101
        %v4103 = vpop.xlane.xlu0 %4102
        %v4104 = vadd.f32 %v3904, %v3905
        %v4105 = vadd.f32 %v4104, %v3906
        %v4106 = vadd.f32 %v4105, %v3907
        %v4107 = vadd.f32 %v4106, %v3908
        %v4108 = vadd.f32 %v4107, %v3909
        %v4109 = vsel %vm418, %v3910, 0.0
        %v4110 = vadd.f32 %v4108, %v4109
        %4111 = vadd.xlane.f32.xlu0 %v4110
        %v4112 = vpop.xlane.xlu0 %4111
        %v4113 = vadd.f32 %v3911, %v3912
        %v4114 = vadd.f32 %v4113, %v3913
        %v4115 = vadd.f32 %v4114, %v3914
        %v4116 = vadd.f32 %v4115, %v3915
        %v4117 = vadd.f32 %v4116, %v3916
        %v4118 = vsel %vm418, %v3917, 0.0
        %v4119 = vadd.f32 %v4117, %v4118
        %4120 = vadd.xlane.f32.xlu0 %v4119
        %v4121 = vpop.xlane.xlu0 %4120
        %v4122 = vadd.f32 %v3918, %v3919
        %v4123 = vadd.f32 %v4122, %v3920
        %v4124 = vadd.f32 %v4123, %v3921
        %v4125 = vadd.f32 %v4124, %v3922
        %v4126 = vadd.f32 %v4125, %v3923
        %v4127 = vsel %vm418, %v3924, 0.0
        %v4128 = vadd.f32 %v4126, %v4127
        %4129 = vadd.xlane.f32.xlu0 %v4128
        %v4130 = vpop.xlane.xlu0 %4129
        %v4131 = vadd.f32 %v3925, %v3926
        %v4132 = vadd.f32 %v4131, %v3927
        %v4133 = vadd.f32 %v4132, %v3928
        %v4134 = vadd.f32 %v4133, %v3929
        %v4135 = vadd.f32 %v4134, %v3930
        %v4136 = vsel %vm418, %v3931, 0.0
        %v4137 = vadd.f32 %v4135, %v4136
        %4138 = vadd.xlane.f32.xlu0 %v4137
        %v4139 = vpop.xlane.xlu0 %4138
        %v4140 = vadd.f32 %v3932, %v3933
        %v4141 = vadd.f32 %v4140, %v3934
        %v4142 = vadd.f32 %v4141, %v3935
        %v4143 = vadd.f32 %v4142, %v3936
        %v4144 = vadd.f32 %v4143, %v3937
        %v4145 = vsel %vm418, %v3938, 0.0
        %v4146 = vadd.f32 %v4144, %v4145
        %4147 = vadd.xlane.f32.xlu0 %v4146
        %v4148 = vpop.xlane.xlu0 %4147
        %v4149 = vadd.f32 %v3939, %v3940
        %v4150 = vadd.f32 %v4149, %v3941
        %v4151 = vadd.f32 %v4150, %v3942
        %v4152 = vadd.f32 %v4151, %v3943
        %v4153 = vadd.f32 %v4152, %v3944
        %v4154 = vsel %vm418, %v3945, 0.0
        %v4155 = vadd.f32 %v4153, %v4154
        %4156 = vadd.xlane.f32.xlu0 %v4155
        %v4157 = vpop.xlane.xlu0 %4156
        %v4158 = vadd.f32 %v3946, %v3947
        %v4159 = vadd.f32 %v4158, %v3948
        %v4160 = vadd.f32 %v4159, %v3949
        %v4161 = vadd.f32 %v4160, %v3950
        %v4162 = vadd.f32 %v4161, %v3951
        %v4163 = vsel %vm418, %v3952, 0.0
        %v4164 = vadd.f32 %v4162, %v4163
        %4165 = vadd.xlane.f32.xlu0 %v4164
        %v4166 = vpop.xlane.xlu0 %4165
        %v4167 = vadd.f32 %v3953, %v3954
        %v4168 = vadd.f32 %v4167, %v3955
        %v4169 = vadd.f32 %v4168, %v3956
        %v4170 = vadd.f32 %v4169, %v3957
        %v4171 = vadd.f32 %v4170, %v3958
        %v4172 = vsel %vm418, %v3959, 0.0
        %v4173 = vadd.f32 %v4171, %v4172
        %4174 = vadd.xlane.f32.xlu0 %v4173
        %v4175 = vpop.xlane.xlu0 %4174
        %v4176 = vmul.f32 %v3968, 0.0012755102
        %v4177 = vmul.f32 %v3977, 0.0012755102
        %v4178 = vmul.f32 %v3986, 0.0012755102
        %v4179 = vmul.f32 %v3995, 0.0012755102
        %v4180 = vmul.f32 %v4004, 0.0012755102
        %v4181 = vmul.f32 %v4013, 0.0012755102
        %v4182 = vmul.f32 %v4022, 0.0012755102
        %v4183 = vmul.f32 %v4031, 0.0012755102
        %v4184 = vmul.f32 %v4040, 0.0012755102
        %v4185 = vmul.f32 %v4049, 0.0012755102
        %v4186 = vmul.f32 %v4058, 0.0012755102
        %v4187 = vmul.f32 %v4067, 0.0012755102
        %v4188 = vmul.f32 %v4076, 0.0012755102
        %v4189 = vmul.f32 %v4085, 0.0012755102
        %v4190 = vmul.f32 %v4094, 0.0012755102
        %v4191 = vmul.f32 %v4103, 0.0012755102
        %v4192 = vmul.f32 %v4112, 0.0012755102
        %v4193 = vmul.f32 %v4121, 0.0012755102
        %v4194 = vmul.f32 %v4130, 0.0012755102
        %v4195 = vmul.f32 %v4139, 0.0012755102
        %v4196 = vmul.f32 %v4148, 0.0012755102
        %v4197 = vmul.f32 %v4157, 0.0012755102
        %v4198 = vmul.f32 %v4166, 0.0012755102
        %v4199 = vmul.f32 %v4175, 0.0012755102
        %v4200 = vsub.f32 %v3792, %v4176
        %v4201 = vsub.f32 %v3793, %v4176
        %v4202 = vsub.f32 %v3794, %v4176
        %v4203 = vsub.f32 %v3795, %v4176
        %v4204 = vsub.f32 %v3796, %v4176
        %v4205 = vsub.f32 %v3797, %v4176
        %v4206 = vsub.f32 %v3798, %v4176
        %v4207 = vsub.f32 %v3799, %v4177
        %v4208 = vsub.f32 %v3800, %v4177
        %v4209 = vsub.f32 %v3801, %v4177
        %v4210 = vsub.f32 %v3802, %v4177
        %v4211 = vsub.f32 %v3803, %v4177
        %v4212 = vsub.f32 %v3804, %v4177
        %v4213 = vsub.f32 %v3805, %v4177
        %v4214 = vsub.f32 %v3806, %v4178
        %v4215 = vsub.f32 %v3807, %v4178
        %v4216 = vsub.f32 %v3808, %v4178
        %v4217 = vsub.f32 %v3809, %v4178
        %v4218 = vsub.f32 %v3810, %v4178
        %v4219 = vsub.f32 %v3811, %v4178
        %v4220 = vsub.f32 %v3812, %v4178
        %v4221 = vsub.f32 %v3813, %v4179
        %v4222 = vsub.f32 %v3814, %v4179
        %v4223 = vsub.f32 %v3815, %v4179
        %v4224 = vsub.f32 %v3816, %v4179
        %v4225 = vsub.f32 %v3817, %v4179
        %v4226 = vsub.f32 %v3818, %v4179
        %v4227 = vsub.f32 %v3819, %v4179
        %v4228 = vsub.f32 %v3820, %v4180
        %v4229 = vsub.f32 %v3821, %v4180
        %v4230 = vsub.f32 %v3822, %v4180
        %v4231 = vsub.f32 %v3823, %v4180
        %v4232 = vsub.f32 %v3824, %v4180
        %v4233 = vsub.f32 %v3825, %v4180
        %v4234 = vsub.f32 %v3826, %v4180
        %v4235 = vsub.f32 %v3827, %v4181
        %v4236 = vsub.f32 %v3828, %v4181
        %v4237 = vsub.f32 %v3829, %v4181
        %v4238 = vsub.f32 %v3830, %v4181
        %v4239 = vsub.f32 %v3831, %v4181
        %v4240 = vsub.f32 %v3832, %v4181
        %v4241 = vsub.f32 %v3833, %v4181
        %v4242 = vsub.f32 %v3834, %v4182
        %v4243 = vsub.f32 %v3835, %v4182
        %v4244 = vsub.f32 %v3836, %v4182
        %v4245 = vsub.f32 %v3837, %v4182
        %v4246 = vsub.f32 %v3838, %v4182
        %v4247 = vsub.f32 %v3839, %v4182
        %v4248 = vsub.f32 %v3840, %v4182
        %v4249 = vsub.f32 %v3841, %v4183
        %v4250 = vsub.f32 %v3842, %v4183
        %v4251 = vsub.f32 %v3843, %v4183
        %v4252 = vsub.f32 %v3844, %v4183
        %v4253 = vsub.f32 %v3845, %v4183
        %v4254 = vsub.f32 %v3846, %v4183
        %v4255 = vsub.f32 %v3847, %v4183
        %v4256 = vsub.f32 %v3848, %v4184
        %v4257 = vsub.f32 %v3849, %v4184
        %v4258 = vsub.f32 %v3850, %v4184
        %v4259 = vsub.f32 %v3851, %v4184
        %v4260 = vsub.f32 %v3852, %v4184
        %v4261 = vsub.f32 %v3853, %v4184
        %v4262 = vsub.f32 %v3854, %v4184
        %v4263 = vsub.f32 %v3855, %v4185
        %v4264 = vsub.f32 %v3856, %v4185
        %v4265 = vsub.f32 %v3857, %v4185
        %v4266 = vsub.f32 %v3858, %v4185
        %v4267 = vsub.f32 %v3859, %v4185
        %v4268 = vsub.f32 %v3860, %v4185
        %v4269 = vsub.f32 %v3861, %v4185
        %v4270 = vsub.f32 %v3862, %v4186
        %v4271 = vsub.f32 %v3863, %v4186
        %v4272 = vsub.f32 %v3864, %v4186
        %v4273 = vsub.f32 %v3865, %v4186
        %v4274 = vsub.f32 %v3866, %v4186
        %v4275 = vsub.f32 %v3867, %v4186
        %v4276 = vsub.f32 %v3868, %v4186
        %v4277 = vsub.f32 %v3869, %v4187
        %v4278 = vsub.f32 %v3870, %v4187
        %v4279 = vsub.f32 %v3871, %v4187
        %v4280 = vsub.f32 %v3872, %v4187
        %v4281 = vsub.f32 %v3873, %v4187
        %v4282 = vsub.f32 %v3874, %v4187
        %v4283 = vsub.f32 %v3875, %v4187
        %v4284 = vsub.f32 %v3876, %v4188
        %v4285 = vsub.f32 %v3877, %v4188
        %v4286 = vsub.f32 %v3878, %v4188
        %v4287 = vsub.f32 %v3879, %v4188
        %v4288 = vsub.f32 %v3880, %v4188
        %v4289 = vsub.f32 %v3881, %v4188
        %v4290 = vsub.f32 %v3882, %v4188
        %v4291 = vsub.f32 %v3883, %v4189
        %v4292 = vsub.f32 %v3884, %v4189
        %v4293 = vsub.f32 %v3885, %v4189
        %v4294 = vsub.f32 %v3886, %v4189
        %v4295 = vsub.f32 %v3887, %v4189
        %v4296 = vsub.f32 %v3888, %v4189
        %v4297 = vsub.f32 %v3889, %v4189
        %v4298 = vsub.f32 %v3890, %v4190
        %v4299 = vsub.f32 %v3891, %v4190
        %v4300 = vsub.f32 %v3892, %v4190
        %v4301 = vsub.f32 %v3893, %v4190
        %v4302 = vsub.f32 %v3894, %v4190
        %v4303 = vsub.f32 %v3895, %v4190
        %v4304 = vsub.f32 %v3896, %v4190
        %v4305 = vsub.f32 %v3897, %v4191
        %v4306 = vsub.f32 %v3898, %v4191
        %v4307 = vsub.f32 %v3899, %v4191
        %v4308 = vsub.f32 %v3900, %v4191
        %v4309 = vsub.f32 %v3901, %v4191
        %v4310 = vsub.f32 %v3902, %v4191
        %v4311 = vsub.f32 %v3903, %v4191
        %v4312 = vsub.f32 %v3904, %v4192
        %v4313 = vsub.f32 %v3905, %v4192
        %v4314 = vsub.f32 %v3906, %v4192
        %v4315 = vsub.f32 %v3907, %v4192
        %v4316 = vsub.f32 %v3908, %v4192
        %v4317 = vsub.f32 %v3909, %v4192
        %v4318 = vsub.f32 %v3910, %v4192
        %v4319 = vsub.f32 %v3911, %v4193
        %v4320 = vsub.f32 %v3912, %v4193
        %v4321 = vsub.f32 %v3913, %v4193
        %v4322 = vsub.f32 %v3914, %v4193
        %v4323 = vsub.f32 %v3915, %v4193
        %v4324 = vsub.f32 %v3916, %v4193
        %v4325 = vsub.f32 %v3917, %v4193
        %v4326 = vsub.f32 %v3918, %v4194
        %v4327 = vsub.f32 %v3919, %v4194
        %v4328 = vsub.f32 %v3920, %v4194
        %v4329 = vsub.f32 %v3921, %v4194
        %v4330 = vsub.f32 %v3922, %v4194
        %v4331 = vsub.f32 %v3923, %v4194
        %v4332 = vsub.f32 %v3924, %v4194
        %v4333 = vsub.f32 %v3925, %v4195
        %v4334 = vsub.f32 %v3926, %v4195
        %v4335 = vsub.f32 %v3927, %v4195
        %v4336 = vsub.f32 %v3928, %v4195
        %v4337 = vsub.f32 %v3929, %v4195
        %v4338 = vsub.f32 %v3930, %v4195
        %v4339 = vsub.f32 %v3931, %v4195
        %v4340 = vsub.f32 %v3932, %v4196
        %v4341 = vsub.f32 %v3933, %v4196
        %v4342 = vsub.f32 %v3934, %v4196
        %v4343 = vsub.f32 %v3935, %v4196
        %v4344 = vsub.f32 %v3936, %v4196
        %v4345 = vsub.f32 %v3937, %v4196
        %v4346 = vsub.f32 %v3938, %v4196
        %v4347 = vsub.f32 %v3939, %v4197
        %v4348 = vsub.f32 %v3940, %v4197
        %v4349 = vsub.f32 %v3941, %v4197
        %v4350 = vsub.f32 %v3942, %v4197
        %v4351 = vsub.f32 %v3943, %v4197
        %v4352 = vsub.f32 %v3944, %v4197
        %v4353 = vsub.f32 %v3945, %v4197
        %v4354 = vsub.f32 %v3946, %v4198
        %v4355 = vsub.f32 %v3947, %v4198
        %v4356 = vsub.f32 %v3948, %v4198
        %v4357 = vsub.f32 %v3949, %v4198
        %v4358 = vsub.f32 %v3950, %v4198
        %v4359 = vsub.f32 %v3951, %v4198
        %v4360 = vsub.f32 %v3952, %v4198
        %v4361 = vsub.f32 %v3953, %v4199
        %v4362 = vsub.f32 %v3954, %v4199
        %v4363 = vsub.f32 %v3955, %v4199
        %v4364 = vsub.f32 %v3956, %v4199
        %v4365 = vsub.f32 %v3957, %v4199
        %v4366 = vsub.f32 %v3958, %v4199
        %v4367 = vsub.f32 %v3959, %v4199
        %v4368 = vmul.f32 %v4200, %v4200
        %v4369 = vmul.f32 %v4201, %v4201
        %v4370 = vmul.f32 %v4202, %v4202
        %v4371 = vmul.f32 %v4203, %v4203
        %v4372 = vmul.f32 %v4204, %v4204
        %v4373 = vmul.f32 %v4205, %v4205
        %v4374 = vmul.f32 %v4206, %v4206
        %v4375 = vmul.f32 %v4207, %v4207
        %v4376 = vmul.f32 %v4208, %v4208
        %v4377 = vmul.f32 %v4209, %v4209
        %v4378 = vmul.f32 %v4210, %v4210
        %v4379 = vmul.f32 %v4211, %v4211
        %v4380 = vmul.f32 %v4212, %v4212
        %v4381 = vmul.f32 %v4213, %v4213
        %v4382 = vmul.f32 %v4214, %v4214
        %v4383 = vmul.f32 %v4215, %v4215
        %v4384 = vmul.f32 %v4216, %v4216
        %v4385 = vmul.f32 %v4217, %v4217
        %v4386 = vmul.f32 %v4218, %v4218
        %v4387 = vmul.f32 %v4219, %v4219
        %v4388 = vmul.f32 %v4220, %v4220
        %v4389 = vmul.f32 %v4221, %v4221
        %v4390 = vmul.f32 %v4222, %v4222
        %v4391 = vmul.f32 %v4223, %v4223
        %v4392 = vmul.f32 %v4224, %v4224
        %v4393 = vmul.f32 %v4225, %v4225
        %v4394 = vmul.f32 %v4226, %v4226
        %v4395 = vmul.f32 %v4227, %v4227
        %v4396 = vmul.f32 %v4228, %v4228
        %v4397 = vmul.f32 %v4229, %v4229
        %v4398 = vmul.f32 %v4230, %v4230
        %v4399 = vmul.f32 %v4231, %v4231
        %v4400 = vmul.f32 %v4232, %v4232
        %v4401 = vmul.f32 %v4233, %v4233
        %v4402 = vmul.f32 %v4234, %v4234
        %v4403 = vmul.f32 %v4235, %v4235
        %v4404 = vmul.f32 %v4236, %v4236
        %v4405 = vmul.f32 %v4237, %v4237
        %v4406 = vmul.f32 %v4238, %v4238
        %v4407 = vmul.f32 %v4239, %v4239
        %v4408 = vmul.f32 %v4240, %v4240
        %v4409 = vmul.f32 %v4241, %v4241
        %v4410 = vmul.f32 %v4242, %v4242
        %v4411 = vmul.f32 %v4243, %v4243
        %v4412 = vmul.f32 %v4244, %v4244
        %v4413 = vmul.f32 %v4245, %v4245
        %v4414 = vmul.f32 %v4246, %v4246
        %v4415 = vmul.f32 %v4247, %v4247
        %v4416 = vmul.f32 %v4248, %v4248
        %v4417 = vmul.f32 %v4249, %v4249
        %v4418 = vmul.f32 %v4250, %v4250
        %v4419 = vmul.f32 %v4251, %v4251
        %v4420 = vmul.f32 %v4252, %v4252
        %v4421 = vmul.f32 %v4253, %v4253
        %v4422 = vmul.f32 %v4254, %v4254
        %v4423 = vmul.f32 %v4255, %v4255
        %v4424 = vmul.f32 %v4256, %v4256
        %v4425 = vmul.f32 %v4257, %v4257
        %v4426 = vmul.f32 %v4258, %v4258
        %v4427 = vmul.f32 %v4259, %v4259
        %v4428 = vmul.f32 %v4260, %v4260
        %v4429 = vmul.f32 %v4261, %v4261
        %v4430 = vmul.f32 %v4262, %v4262
        %v4431 = vmul.f32 %v4263, %v4263
        %v4432 = vmul.f32 %v4264, %v4264
        %v4433 = vmul.f32 %v4265, %v4265
        %v4434 = vmul.f32 %v4266, %v4266
        %v4435 = vmul.f32 %v4267, %v4267
        %v4436 = vmul.f32 %v4268, %v4268
        %v4437 = vmul.f32 %v4269, %v4269
        %v4438 = vmul.f32 %v4270, %v4270
        %v4439 = vmul.f32 %v4271, %v4271
        %v4440 = vmul.f32 %v4272, %v4272
        %v4441 = vmul.f32 %v4273, %v4273
        %v4442 = vmul.f32 %v4274, %v4274
        %v4443 = vmul.f32 %v4275, %v4275
        %v4444 = vmul.f32 %v4276, %v4276
        %v4445 = vmul.f32 %v4277, %v4277
        %v4446 = vmul.f32 %v4278, %v4278
        %v4447 = vmul.f32 %v4279, %v4279
        %v4448 = vmul.f32 %v4280, %v4280
        %v4449 = vmul.f32 %v4281, %v4281
        %v4450 = vmul.f32 %v4282, %v4282
        %v4451 = vmul.f32 %v4283, %v4283
        %v4452 = vmul.f32 %v4284, %v4284
        %v4453 = vmul.f32 %v4285, %v4285
        %v4454 = vmul.f32 %v4286, %v4286
        %v4455 = vmul.f32 %v4287, %v4287
        %v4456 = vmul.f32 %v4288, %v4288
        %v4457 = vmul.f32 %v4289, %v4289
        %v4458 = vmul.f32 %v4290, %v4290
        %v4459 = vmul.f32 %v4291, %v4291
        %v4460 = vmul.f32 %v4292, %v4292
        %v4461 = vmul.f32 %v4293, %v4293
        %v4462 = vmul.f32 %v4294, %v4294
        %v4463 = vmul.f32 %v4295, %v4295
        %v4464 = vmul.f32 %v4296, %v4296
        %v4465 = vmul.f32 %v4297, %v4297
        %v4466 = vmul.f32 %v4298, %v4298
        %v4467 = vmul.f32 %v4299, %v4299
        %v4468 = vmul.f32 %v4300, %v4300
        %v4469 = vmul.f32 %v4301, %v4301
        %v4470 = vmul.f32 %v4302, %v4302
        %v4471 = vmul.f32 %v4303, %v4303
        %v4472 = vmul.f32 %v4304, %v4304
        %v4473 = vmul.f32 %v4305, %v4305
        %v4474 = vmul.f32 %v4306, %v4306
        %v4475 = vmul.f32 %v4307, %v4307
        %v4476 = vmul.f32 %v4308, %v4308
        %v4477 = vmul.f32 %v4309, %v4309
        %v4478 = vmul.f32 %v4310, %v4310
        %v4479 = vmul.f32 %v4311, %v4311
        %v4480 = vmul.f32 %v4312, %v4312
        %v4481 = vmul.f32 %v4313, %v4313
        %v4482 = vmul.f32 %v4314, %v4314
        %v4483 = vmul.f32 %v4315, %v4315
        %v4484 = vmul.f32 %v4316, %v4316
        %v4485 = vmul.f32 %v4317, %v4317
        %v4486 = vmul.f32 %v4318, %v4318
        %v4487 = vmul.f32 %v4319, %v4319
        %v4488 = vmul.f32 %v4320, %v4320
        %v4489 = vmul.f32 %v4321, %v4321
        %v4490 = vmul.f32 %v4322, %v4322
        %v4491 = vmul.f32 %v4323, %v4323
        %v4492 = vmul.f32 %v4324, %v4324
        %v4493 = vmul.f32 %v4325, %v4325
        %v4494 = vmul.f32 %v4326, %v4326
        %v4495 = vmul.f32 %v4327, %v4327
        %v4496 = vmul.f32 %v4328, %v4328
        %v4497 = vmul.f32 %v4329, %v4329
        %v4498 = vmul.f32 %v4330, %v4330
        %v4499 = vmul.f32 %v4331, %v4331
        %v4500 = vmul.f32 %v4332, %v4332
        %v4501 = vmul.f32 %v4333, %v4333
        %v4502 = vmul.f32 %v4334, %v4334
        %v4503 = vmul.f32 %v4335, %v4335
        %v4504 = vmul.f32 %v4336, %v4336
        %v4505 = vmul.f32 %v4337, %v4337
        %v4506 = vmul.f32 %v4338, %v4338
        %v4507 = vmul.f32 %v4339, %v4339
        %v4508 = vmul.f32 %v4340, %v4340
        %v4509 = vmul.f32 %v4341, %v4341
        %v4510 = vmul.f32 %v4342, %v4342
        %v4511 = vmul.f32 %v4343, %v4343
        %v4512 = vmul.f32 %v4344, %v4344
        %v4513 = vmul.f32 %v4345, %v4345
        %v4514 = vmul.f32 %v4346, %v4346
        %v4515 = vmul.f32 %v4347, %v4347
        %v4516 = vmul.f32 %v4348, %v4348
        %v4517 = vmul.f32 %v4349, %v4349
        %v4518 = vmul.f32 %v4350, %v4350
        %v4519 = vmul.f32 %v4351, %v4351
        %v4520 = vmul.f32 %v4352, %v4352
        %v4521 = vmul.f32 %v4353, %v4353
        %v4522 = vmul.f32 %v4354, %v4354
        %v4523 = vmul.f32 %v4355, %v4355
        %v4524 = vmul.f32 %v4356, %v4356
        %v4525 = vmul.f32 %v4357, %v4357
        %v4526 = vmul.f32 %v4358, %v4358
        %v4527 = vmul.f32 %v4359, %v4359
        %v4528 = vmul.f32 %v4360, %v4360
        %v4529 = vmul.f32 %v4361, %v4361
        %v4530 = vmul.f32 %v4362, %v4362
        %v4531 = vmul.f32 %v4363, %v4363
        %v4532 = vmul.f32 %v4364, %v4364
        %v4533 = vmul.f32 %v4365, %v4365
        %v4534 = vmul.f32 %v4366, %v4366
        %v4535 = vmul.f32 %v4367, %v4367
        %v4536 = vadd.f32 %v4368, %v4369
        %v4537 = vadd.f32 %v4536, %v4370
        %v4538 = vadd.f32 %v4537, %v4371
        %v4539 = vadd.f32 %v4538, %v4372
        %v4540 = vadd.f32 %v4539, %v4373
        %v4541 = vsel %vm418, %v4374, 0.0
        %v4542 = vadd.f32 %v4540, %v4541
        %4543 = vadd.xlane.f32.xlu0 %v4542
        %v4544 = vpop.xlane.xlu0 %4543
        %v4545 = vadd.f32 %v4375, %v4376
        %v4546 = vadd.f32 %v4545, %v4377
        %v4547 = vadd.f32 %v4546, %v4378
        %v4548 = vadd.f32 %v4547, %v4379
        %v4549 = vadd.f32 %v4548, %v4380
        %v4550 = vsel %vm418, %v4381, 0.0
        %v4551 = vadd.f32 %v4549, %v4550
        %4552 = vadd.xlane.f32.xlu0 %v4551
        %v4553 = vpop.xlane.xlu0 %4552
        %v4554 = vadd.f32 %v4382, %v4383
        %v4555 = vadd.f32 %v4554, %v4384
        %v4556 = vadd.f32 %v4555, %v4385
        %v4557 = vadd.f32 %v4556, %v4386
        %v4558 = vadd.f32 %v4557, %v4387
        %v4559 = vsel %vm418, %v4388, 0.0
        %v4560 = vadd.f32 %v4558, %v4559
        %4561 = vadd.xlane.f32.xlu0 %v4560
        %v4562 = vpop.xlane.xlu0 %4561
        %v4563 = vadd.f32 %v4389, %v4390
        %v4564 = vadd.f32 %v4563, %v4391
        %v4565 = vadd.f32 %v4564, %v4392
        %v4566 = vadd.f32 %v4565, %v4393
        %v4567 = vadd.f32 %v4566, %v4394
        %v4568 = vsel %vm418, %v4395, 0.0
        %v4569 = vadd.f32 %v4567, %v4568
        %4570 = vadd.xlane.f32.xlu0 %v4569
        %v4571 = vpop.xlane.xlu0 %4570
        %v4572 = vadd.f32 %v4396, %v4397
        %v4573 = vadd.f32 %v4572, %v4398
        %v4574 = vadd.f32 %v4573, %v4399
        %v4575 = vadd.f32 %v4574, %v4400
        %v4576 = vadd.f32 %v4575, %v4401
        %v4577 = vsel %vm418, %v4402, 0.0
        %v4578 = vadd.f32 %v4576, %v4577
        %4579 = vadd.xlane.f32.xlu0 %v4578
        %v4580 = vpop.xlane.xlu0 %4579
        %v4581 = vadd.f32 %v4403, %v4404
        %v4582 = vadd.f32 %v4581, %v4405
        %v4583 = vadd.f32 %v4582, %v4406
        %v4584 = vadd.f32 %v4583, %v4407
        %v4585 = vadd.f32 %v4584, %v4408
        %v4586 = vsel %vm418, %v4409, 0.0
        %v4587 = vadd.f32 %v4585, %v4586
        %4588 = vadd.xlane.f32.xlu0 %v4587
        %v4589 = vpop.xlane.xlu0 %4588
        %v4590 = vadd.f32 %v4410, %v4411
        %v4591 = vadd.f32 %v4590, %v4412
        %v4592 = vadd.f32 %v4591, %v4413
        %v4593 = vadd.f32 %v4592, %v4414
        %v4594 = vadd.f32 %v4593, %v4415
        %v4595 = vsel %vm418, %v4416, 0.0
        %v4596 = vadd.f32 %v4594, %v4595
        %4597 = vadd.xlane.f32.xlu0 %v4596
        %v4598 = vpop.xlane.xlu0 %4597
        %v4599 = vadd.f32 %v4417, %v4418
        %v4600 = vadd.f32 %v4599, %v4419
        %v4601 = vadd.f32 %v4600, %v4420
        %v4602 = vadd.f32 %v4601, %v4421
        %v4603 = vadd.f32 %v4602, %v4422
        %v4604 = vsel %vm418, %v4423, 0.0
        %v4605 = vadd.f32 %v4603, %v4604
        %4606 = vadd.xlane.f32.xlu0 %v4605
        %v4607 = vpop.xlane.xlu0 %4606
        %v4608 = vadd.f32 %v4424, %v4425
        %v4609 = vadd.f32 %v4608, %v4426
        %v4610 = vadd.f32 %v4609, %v4427
        %v4611 = vadd.f32 %v4610, %v4428
        %v4612 = vadd.f32 %v4611, %v4429
        %v4613 = vsel %vm418, %v4430, 0.0
        %v4614 = vadd.f32 %v4612, %v4613
        %4615 = vadd.xlane.f32.xlu0 %v4614
        %v4616 = vpop.xlane.xlu0 %4615
        %v4617 = vadd.f32 %v4431, %v4432
        %v4618 = vadd.f32 %v4617, %v4433
        %v4619 = vadd.f32 %v4618, %v4434
        %v4620 = vadd.f32 %v4619, %v4435
        %v4621 = vadd.f32 %v4620, %v4436
        %v4622 = vsel %vm418, %v4437, 0.0
        %v4623 = vadd.f32 %v4621, %v4622
        %4624 = vadd.xlane.f32.xlu0 %v4623
        %v4625 = vpop.xlane.xlu0 %4624
        %v4626 = vadd.f32 %v4438, %v4439
        %v4627 = vadd.f32 %v4626, %v4440
        %v4628 = vadd.f32 %v4627, %v4441
        %v4629 = vadd.f32 %v4628, %v4442
        %v4630 = vadd.f32 %v4629, %v4443
        %v4631 = vsel %vm418, %v4444, 0.0
        %v4632 = vadd.f32 %v4630, %v4631
        %4633 = vadd.xlane.f32.xlu0 %v4632
        %v4634 = vpop.xlane.xlu0 %4633
        %v4635 = vadd.f32 %v4445, %v4446
        %v4636 = vadd.f32 %v4635, %v4447
        %v4637 = vadd.f32 %v4636, %v4448
        %v4638 = vadd.f32 %v4637, %v4449
        %v4639 = vadd.f32 %v4638, %v4450
        %v4640 = vsel %vm418, %v4451, 0.0
        %v4641 = vadd.f32 %v4639, %v4640
        %4642 = vadd.xlane.f32.xlu0 %v4641
        %v4643 = vpop.xlane.xlu0 %4642
        %v4644 = vadd.f32 %v4452, %v4453
        %v4645 = vadd.f32 %v4644, %v4454
        %v4646 = vadd.f32 %v4645, %v4455
        %v4647 = vadd.f32 %v4646, %v4456
        %v4648 = vadd.f32 %v4647, %v4457
        %v4649 = vsel %vm418, %v4458, 0.0
        %v4650 = vadd.f32 %v4648, %v4649
        %4651 = vadd.xlane.f32.xlu0 %v4650
        %v4652 = vpop.xlane.xlu0 %4651
        %v4653 = vadd.f32 %v4459, %v4460
        %v4654 = vadd.f32 %v4653, %v4461
        %v4655 = vadd.f32 %v4654, %v4462
        %v4656 = vadd.f32 %v4655, %v4463
        %v4657 = vadd.f32 %v4656, %v4464
        %v4658 = vsel %vm418, %v4465, 0.0
        %v4659 = vadd.f32 %v4657, %v4658
        %4660 = vadd.xlane.f32.xlu0 %v4659
        %v4661 = vpop.xlane.xlu0 %4660
        %v4662 = vadd.f32 %v4466, %v4467
        %v4663 = vadd.f32 %v4662, %v4468
        %v4664 = vadd.f32 %v4663, %v4469
        %v4665 = vadd.f32 %v4664, %v4470
        %v4666 = vadd.f32 %v4665, %v4471
        %v4667 = vsel %vm418, %v4472, 0.0
        %v4668 = vadd.f32 %v4666, %v4667
        %4669 = vadd.xlane.f32.xlu0 %v4668
        %v4670 = vpop.xlane.xlu0 %4669
        %v4671 = vadd.f32 %v4473, %v4474
        %v4672 = vadd.f32 %v4671, %v4475
        %v4673 = vadd.f32 %v4672, %v4476
        %v4674 = vadd.f32 %v4673, %v4477
        %v4675 = vadd.f32 %v4674, %v4478
        %v4676 = vsel %vm418, %v4479, 0.0
        %v4677 = vadd.f32 %v4675, %v4676
        %4678 = vadd.xlane.f32.xlu0 %v4677
        %v4679 = vpop.xlane.xlu0 %4678
        %v4680 = vadd.f32 %v4480, %v4481
        %v4681 = vadd.f32 %v4680, %v4482
        %v4682 = vadd.f32 %v4681, %v4483
        %v4683 = vadd.f32 %v4682, %v4484
        %v4684 = vadd.f32 %v4683, %v4485
        %v4685 = vsel %vm418, %v4486, 0.0
        %v4686 = vadd.f32 %v4684, %v4685
        %4687 = vadd.xlane.f32.xlu0 %v4686
        %v4688 = vpop.xlane.xlu0 %4687
        %v4689 = vadd.f32 %v4487, %v4488
        %v4690 = vadd.f32 %v4689, %v4489
        %v4691 = vadd.f32 %v4690, %v4490
        %v4692 = vadd.f32 %v4691, %v4491
        %v4693 = vadd.f32 %v4692, %v4492
        %v4694 = vsel %vm418, %v4493, 0.0
        %v4695 = vadd.f32 %v4693, %v4694
        %4696 = vadd.xlane.f32.xlu0 %v4695
        %v4697 = vpop.xlane.xlu0 %4696
        %v4698 = vadd.f32 %v4494, %v4495
        %v4699 = vadd.f32 %v4698, %v4496
        %v4700 = vadd.f32 %v4699, %v4497
        %v4701 = vadd.f32 %v4700, %v4498
        %v4702 = vadd.f32 %v4701, %v4499
        %v4703 = vsel %vm418, %v4500, 0.0
        %v4704 = vadd.f32 %v4702, %v4703
        %4705 = vadd.xlane.f32.xlu0 %v4704
        %v4706 = vpop.xlane.xlu0 %4705
        %v4707 = vadd.f32 %v4501, %v4502
        %v4708 = vadd.f32 %v4707, %v4503
        %v4709 = vadd.f32 %v4708, %v4504
        %v4710 = vadd.f32 %v4709, %v4505
        %v4711 = vadd.f32 %v4710, %v4506
        %v4712 = vsel %vm418, %v4507, 0.0
        %v4713 = vadd.f32 %v4711, %v4712
        %4714 = vadd.xlane.f32.xlu0 %v4713
        %v4715 = vpop.xlane.xlu0 %4714
        %v4716 = vadd.f32 %v4508, %v4509
        %v4717 = vadd.f32 %v4716, %v4510
        %v4718 = vadd.f32 %v4717, %v4511
        %v4719 = vadd.f32 %v4718, %v4512
        %v4720 = vadd.f32 %v4719, %v4513
        %v4721 = vsel %vm418, %v4514, 0.0
        %v4722 = vadd.f32 %v4720, %v4721
        %4723 = vadd.xlane.f32.xlu0 %v4722
        %v4724 = vpop.xlane.xlu0 %4723
        %v4725 = vadd.f32 %v4515, %v4516
        %v4726 = vadd.f32 %v4725, %v4517
        %v4727 = vadd.f32 %v4726, %v4518
        %v4728 = vadd.f32 %v4727, %v4519
        %v4729 = vadd.f32 %v4728, %v4520
        %v4730 = vsel %vm418, %v4521, 0.0
        %v4731 = vadd.f32 %v4729, %v4730
        %4732 = vadd.xlane.f32.xlu0 %v4731
        %v4733 = vpop.xlane.xlu0 %4732
        %v4734 = vadd.f32 %v4522, %v4523
        %v4735 = vadd.f32 %v4734, %v4524
        %v4736 = vadd.f32 %v4735, %v4525
        %v4737 = vadd.f32 %v4736, %v4526
        %v4738 = vadd.f32 %v4737, %v4527
        %v4739 = vsel %vm418, %v4528, 0.0
        %v4740 = vadd.f32 %v4738, %v4739
        %4741 = vadd.xlane.f32.xlu0 %v4740
        %v4742 = vpop.xlane.xlu0 %4741
        %v4743 = vadd.f32 %v4529, %v4530
        %v4744 = vadd.f32 %v4743, %v4531
        %v4745 = vadd.f32 %v4744, %v4532
        %v4746 = vadd.f32 %v4745, %v4533
        %v4747 = vadd.f32 %v4746, %v4534
        %v4748 = vsel %vm418, %v4535, 0.0
        %v4749 = vadd.f32 %v4747, %v4748
        %4750 = vadd.xlane.f32.xlu0 %v4749
        %v4751 = vpop.xlane.xlu0 %4750
        %v4752 = vmul.f32 %v4544, 0.0012755102
        %v4753 = vmul.f32 %v4553, 0.0012755102
        %v4754 = vmul.f32 %v4562, 0.0012755102
        %v4755 = vmul.f32 %v4571, 0.0012755102
        %v4756 = vmul.f32 %v4580, 0.0012755102
        %v4757 = vmul.f32 %v4589, 0.0012755102
        %v4758 = vmul.f32 %v4598, 0.0012755102
        %v4759 = vmul.f32 %v4607, 0.0012755102
        %v4760 = vmul.f32 %v4616, 0.0012755102
        %v4761 = vmul.f32 %v4625, 0.0012755102
        %v4762 = vmul.f32 %v4634, 0.0012755102
        %v4763 = vmul.f32 %v4643, 0.0012755102
        %v4764 = vmul.f32 %v4652, 0.0012755102
        %v4765 = vmul.f32 %v4661, 0.0012755102
        %v4766 = vmul.f32 %v4670, 0.0012755102
        %v4767 = vmul.f32 %v4679, 0.0012755102
        %v4768 = vmul.f32 %v4688, 0.0012755102
        %v4769 = vmul.f32 %v4697, 0.0012755102
        %v4770 = vmul.f32 %v4706, 0.0012755102
        %v4771 = vmul.f32 %v4715, 0.0012755102
        %v4772 = vmul.f32 %v4724, 0.0012755102
        %v4773 = vmul.f32 %v4733, 0.0012755102
        %v4774 = vmul.f32 %v4742, 0.0012755102
        %v4775 = vmul.f32 %v4751, 0.0012755102
        %v4776 = vld [vmem:[%s3] sm:$0xff]
        %v4777 = vld [vmem:[%s3 + $0x8] sm:$0xff]
        %v4778 = vld [vmem:[%s3 + $0x10] sm:$0xff]
        %v4779 = vld [vmem:[%s3 + $0x18] sm:$0xff]
        %v4780 = vld [vmem:[%s3 + $0x20] sm:$0xff]
        %v4781 = vld [vmem:[%s3 + $0x28] sm:$0xff]
        %v4782 = vld [vmem:[%s3 + $0x30] sm:$0xff]
        %v4783 = vld [vmem:[%s3 + $0x38] sm:$0xff]
        %v4784 = vld [vmem:[%s3 + $0x40] sm:$0xff]
        %v4785 = vld [vmem:[%s3 + $0x48] sm:$0xff]
        %v4786 = vld [vmem:[%s3 + $0x50] sm:$0xff]
        %v4787 = vld [vmem:[%s3 + $0x58] sm:$0xff]
        %v4788 = vld [vmem:[%s3 + $0x60] sm:$0xff]
        %v4789 = vld [vmem:[%s3 + $0x68] sm:$0xff]
        %v4790 = vld [vmem:[%s3 + $0x70] sm:$0xff]
        %v4791 = vld [vmem:[%s3 + $0x78] sm:$0xff]
        %v4792 = vld [vmem:[%s3 + $0x80] sm:$0xff]
        %v4793 = vld [vmem:[%s3 + $0x88] sm:$0xff]
        %v4794 = vld [vmem:[%s3 + $0x90] sm:$0xff]
        %v4795 = vld [vmem:[%s3 + $0x98] sm:$0xff]
        %v4796 = vld [vmem:[%s3 + $0xa0] sm:$0xff]
        %v4797 = vld [vmem:[%s3 + $0xa8] sm:$0xff]
        %v4798 = vld [vmem:[%s3 + $0xb0] sm:$0xff]
        %v4799 = vld [vmem:[%s3 + $0xb8] sm:$0xff]
        %v4800 = vadd.f32 %v4752, 1e-05
        %v4801 = vadd.f32 %v4753, 1e-05
        %v4802 = vadd.f32 %v4754, 1e-05
        %v4803 = vadd.f32 %v4755, 1e-05
        %v4804 = vadd.f32 %v4756, 1e-05
        %v4805 = vadd.f32 %v4757, 1e-05
        %v4806 = vadd.f32 %v4758, 1e-05
        %v4807 = vadd.f32 %v4759, 1e-05
        %v4808 = vadd.f32 %v4760, 1e-05
        %v4809 = vadd.f32 %v4761, 1e-05
        %v4810 = vadd.f32 %v4762, 1e-05
        %v4811 = vadd.f32 %v4763, 1e-05
        %v4812 = vadd.f32 %v4764, 1e-05
        %v4813 = vadd.f32 %v4765, 1e-05
        %v4814 = vadd.f32 %v4766, 1e-05
        %v4815 = vadd.f32 %v4767, 1e-05
        %v4816 = vadd.f32 %v4768, 1e-05
        %v4817 = vadd.f32 %v4769, 1e-05
        %v4818 = vadd.f32 %v4770, 1e-05
        %v4819 = vadd.f32 %v4771, 1e-05
        %v4820 = vadd.f32 %v4772, 1e-05
        %v4821 = vadd.f32 %v4773, 1e-05
        %v4822 = vadd.f32 %v4774, 1e-05
        %v4823 = vadd.f32 %v4775, 1e-05
        %v4824 = vrsqrt.pop %v4800
        %v4825 = vrsqrt.pop %v4801
        %v4826 = vrsqrt.pop %v4802
        %v4827 = vrsqrt.pop %v4803
        %v4828 = vrsqrt.pop %v4804
        %v4829 = vrsqrt.pop %v4805
        %v4830 = vrsqrt.pop %v4806
        %v4831 = vrsqrt.pop %v4807
        %v4832 = vrsqrt.pop %v4808
        %v4833 = vrsqrt.pop %v4809
        %v4834 = vrsqrt.pop %v4810
        %v4835 = vrsqrt.pop %v4811
        %v4836 = vrsqrt.pop %v4812
        %v4837 = vrsqrt.pop %v4813
        %v4838 = vrsqrt.pop %v4814
        %v4839 = vrsqrt.pop %v4815
        %v4840 = vrsqrt.pop %v4816
        %v4841 = vrsqrt.pop %v4817
        %v4842 = vrsqrt.pop %v4818
        %v4843 = vrsqrt.pop %v4819
        %v4844 = vrsqrt.pop %v4820
        %v4845 = vrsqrt.pop %v4821
        %v4846 = vrsqrt.pop %v4822
        %v4847 = vrsqrt.pop %v4823
        %v4848 = vmul.f32 %v4776, %v4824
        %v4849 = vmul.f32 %v4777, %v4825
        %v4850 = vmul.f32 %v4778, %v4826
        %v4851 = vmul.f32 %v4779, %v4827
        %v4852 = vmul.f32 %v4780, %v4828
        %v4853 = vmul.f32 %v4781, %v4829
        %v4854 = vmul.f32 %v4782, %v4830
        %v4855 = vmul.f32 %v4783, %v4831
        %v4856 = vmul.f32 %v4784, %v4832
        %v4857 = vmul.f32 %v4785, %v4833
        %v4858 = vmul.f32 %v4786, %v4834
        %v4859 = vmul.f32 %v4787, %v4835
        %v4860 = vmul.f32 %v4788, %v4836
        %v4861 = vmul.f32 %v4789, %v4837
        %v4862 = vmul.f32 %v4790, %v4838
        %v4863 = vmul.f32 %v4791, %v4839
        %v4864 = vmul.f32 %v4792, %v4840
        %v4865 = vmul.f32 %v4793, %v4841
        %v4866 = vmul.f32 %v4794, %v4842
        %v4867 = vmul.f32 %v4795, %v4843
        %v4868 = vmul.f32 %v4796, %v4844
        %v4869 = vmul.f32 %v4797, %v4845
        %v4870 = vmul.f32 %v4798, %v4846
        %v4871 = vmul.f32 %v4799, %v4847
        %4873 = vset.pattern.permute.xlu0 0
        %4874 = vperm.xlu0 %4873, %v4848
        %v4875 = vpop.permute.xlu0 %4874
        %4878 = vset.pattern.permute.xlu0 0
        %4879 = vperm.xlu0 %4878, %v4849
        %v4880 = vpop.permute.xlu0 %4879
        %4883 = vset.pattern.permute.xlu0 0
        %4884 = vperm.xlu0 %4883, %v4850
        %v4885 = vpop.permute.xlu0 %4884
        %4888 = vset.pattern.permute.xlu0 0
        %4889 = vperm.xlu0 %4888, %v4851
        %v4890 = vpop.permute.xlu0 %4889
        %4893 = vset.pattern.permute.xlu0 0
        %4894 = vperm.xlu0 %4893, %v4852
        %v4895 = vpop.permute.xlu0 %4894
        %4898 = vset.pattern.permute.xlu0 0
        %4899 = vperm.xlu0 %4898, %v4853
        %v4900 = vpop.permute.xlu0 %4899
        %4903 = vset.pattern.permute.xlu0 0
        %4904 = vperm.xlu0 %4903, %v4854
        %v4905 = vpop.permute.xlu0 %4904
        %4908 = vset.pattern.permute.xlu0 0
        %4909 = vperm.xlu0 %4908, %v4855
        %v4910 = vpop.permute.xlu0 %4909
        %4913 = vset.pattern.permute.xlu0 0
        %4914 = vperm.xlu0 %4913, %v4856
        %v4915 = vpop.permute.xlu0 %4914
        %4918 = vset.pattern.permute.xlu0 0
        %4919 = vperm.xlu0 %4918, %v4857
        %v4920 = vpop.permute.xlu0 %4919
        %4923 = vset.pattern.permute.xlu0 0
        %4924 = vperm.xlu0 %4923, %v4858
        %v4925 = vpop.permute.xlu0 %4924
        %4928 = vset.pattern.permute.xlu0 0
        %4929 = vperm.xlu0 %4928, %v4859
        %v4930 = vpop.permute.xlu0 %4929
        %4933 = vset.pattern.permute.xlu0 0
        %4934 = vperm.xlu0 %4933, %v4860
        %v4935 = vpop.permute.xlu0 %4934
        %4938 = vset.pattern.permute.xlu0 0
        %4939 = vperm.xlu0 %4938, %v4861
        %v4940 = vpop.permute.xlu0 %4939
        %4943 = vset.pattern.permute.xlu0 0
        %4944 = vperm.xlu0 %4943, %v4862
        %v4945 = vpop.permute.xlu0 %4944
        %4948 = vset.pattern.permute.xlu0 0
        %4949 = vperm.xlu0 %4948, %v4863
        %v4950 = vpop.permute.xlu0 %4949
        %4953 = vset.pattern.permute.xlu0 0
        %4954 = vperm.xlu0 %4953, %v4864
        %v4955 = vpop.permute.xlu0 %4954
        %4958 = vset.pattern.permute.xlu0 0
        %4959 = vperm.xlu0 %4958, %v4865
        %v4960 = vpop.permute.xlu0 %4959
        %4963 = vset.pattern.permute.xlu0 0
        %4964 = vperm.xlu0 %4963, %v4866
        %v4965 = vpop.permute.xlu0 %4964
        %4968 = vset.pattern.permute.xlu0 0
        %4969 = vperm.xlu0 %4968, %v4867
        %v4970 = vpop.permute.xlu0 %4969
        %4973 = vset.pattern.permute.xlu0 0
        %4974 = vperm.xlu0 %4973, %v4868
        %v4975 = vpop.permute.xlu0 %4974
        %4978 = vset.pattern.permute.xlu0 0
        %4979 = vperm.xlu0 %4978, %v4869
        %v4980 = vpop.permute.xlu0 %4979
        %4983 = vset.pattern.permute.xlu0 0
        %4984 = vperm.xlu0 %4983, %v4870
        %v4985 = vpop.permute.xlu0 %4984
        %4988 = vset.pattern.permute.xlu0 0
        %4989 = vperm.xlu0 %4988, %v4871
        %v4990 = vpop.permute.xlu0 %4989
        %v4992 = vmul.f32 %v4200, %v4875
        %v4993 = vmul.f32 %v4201, %v4875
        %v4994 = vmul.f32 %v4202, %v4875
        %v4995 = vmul.f32 %v4203, %v4875
        %v4996 = vmul.f32 %v4204, %v4875
        %v4997 = vmul.f32 %v4205, %v4875
        %v4998 = vmul.f32 %v4206, %v4875
        %v4999 = vmul.f32 %v4207, %v4880
        %v5000 = vmul.f32 %v4208, %v4880
        %v5001 = vmul.f32 %v4209, %v4880
        %v5002 = vmul.f32 %v4210, %v4880
        %v5003 = vmul.f32 %v4211, %v4880
        %v5004 = vmul.f32 %v4212, %v4880
        %v5005 = vmul.f32 %v4213, %v4880
        %v5006 = vmul.f32 %v4214, %v4885
        %v5007 = vmul.f32 %v4215, %v4885
        %v5008 = vmul.f32 %v4216, %v4885
        %v5009 = vmul.f32 %v4217, %v4885
        %v5010 = vmul.f32 %v4218, %v4885
        %v5011 = vmul.f32 %v4219, %v4885
        %v5012 = vmul.f32 %v4220, %v4885
        %v5013 = vmul.f32 %v4221, %v4890
        %v5014 = vmul.f32 %v4222, %v4890
        %v5015 = vmul.f32 %v4223, %v4890
        %v5016 = vmul.f32 %v4224, %v4890
        %v5017 = vmul.f32 %v4225, %v4890
        %v5018 = vmul.f32 %v4226, %v4890
        %v5019 = vmul.f32 %v4227, %v4890
        %v5020 = vmul.f32 %v4228, %v4895
        %v5021 = vmul.f32 %v4229, %v4895
        %v5022 = vmul.f32 %v4230, %v4895
        %v5023 = vmul.f32 %v4231, %v4895
        %v5024 = vmul.f32 %v4232, %v4895
        %v5025 = vmul.f32 %v4233, %v4895
        %v5026 = vmul.f32 %v4234, %v4895
        %v5027 = vmul.f32 %v4235, %v4900
        %v5028 = vmul.f32 %v4236, %v4900
        %v5029 = vmul.f32 %v4237, %v4900
        %v5030 = vmul.f32 %v4238, %v4900
        %v5031 = vmul.f32 %v4239, %v4900
        %v5032 = vmul.f32 %v4240, %v4900
        %v5033 = vmul.f32 %v4241, %v4900
        %v5034 = vmul.f32 %v4242, %v4905
        %v5035 = vmul.f32 %v4243, %v4905
        %v5036 = vmul.f32 %v4244, %v4905
        %v5037 = vmul.f32 %v4245, %v4905
        %v5038 = vmul.f32 %v4246, %v4905
        %v5039 = vmul.f32 %v4247, %v4905
        %v5040 = vmul.f32 %v4248, %v4905
        %v5041 = vmul.f32 %v4249, %v4910
        %v5042 = vmul.f32 %v4250, %v4910
        %v5043 = vmul.f32 %v4251, %v4910
        %v5044 = vmul.f32 %v4252, %v4910
        %v5045 = vmul.f32 %v4253, %v4910
        %v5046 = vmul.f32 %v4254, %v4910
        %v5047 = vmul.f32 %v4255, %v4910
        %v5048 = vmul.f32 %v4256, %v4915
        %v5049 = vmul.f32 %v4257, %v4915
        %v5050 = vmul.f32 %v4258, %v4915
        %v5051 = vmul.f32 %v4259, %v4915
        %v5052 = vmul.f32 %v4260, %v4915
        %v5053 = vmul.f32 %v4261, %v4915
        %v5054 = vmul.f32 %v4262, %v4915
        %v5055 = vmul.f32 %v4263, %v4920
        %v5056 = vmul.f32 %v4264, %v4920
        %v5057 = vmul.f32 %v4265, %v4920
        %v5058 = vmul.f32 %v4266, %v4920
        %v5059 = vmul.f32 %v4267, %v4920
        %v5060 = vmul.f32 %v4268, %v4920
        %v5061 = vmul.f32 %v4269, %v4920
        %v5062 = vmul.f32 %v4270, %v4925
        %v5063 = vmul.f32 %v4271, %v4925
        %v5064 = vmul.f32 %v4272, %v4925
        %v5065 = vmul.f32 %v4273, %v4925
        %v5066 = vmul.f32 %v4274, %v4925
        %v5067 = vmul.f32 %v4275, %v4925
        %v5068 = vmul.f32 %v4276, %v4925
        %v5069 = vmul.f32 %v4277, %v4930
        %v5070 = vmul.f32 %v4278, %v4930
        %v5071 = vmul.f32 %v4279, %v4930
        %v5072 = vmul.f32 %v4280, %v4930
        %v5073 = vmul.f32 %v4281, %v4930
        %v5074 = vmul.f32 %v4282, %v4930
        %v5075 = vmul.f32 %v4283, %v4930
        %v5076 = vmul.f32 %v4284, %v4935
        %v5077 = vmul.f32 %v4285, %v4935
        %v5078 = vmul.f32 %v4286, %v4935
        %v5079 = vmul.f32 %v4287, %v4935
        %v5080 = vmul.f32 %v4288, %v4935
        %v5081 = vmul.f32 %v4289, %v4935
        %v5082 = vmul.f32 %v4290, %v4935
        %v5083 = vmul.f32 %v4291, %v4940
        %v5084 = vmul.f32 %v4292, %v4940
        %v5085 = vmul.f32 %v4293, %v4940
        %v5086 = vmul.f32 %v4294, %v4940
        %v5087 = vmul.f32 %v4295, %v4940
        %v5088 = vmul.f32 %v4296, %v4940
        %v5089 = vmul.f32 %v4297, %v4940
        %v5090 = vmul.f32 %v4298, %v4945
        %v5091 = vmul.f32 %v4299, %v4945
        %v5092 = vmul.f32 %v4300, %v4945
        %v5093 = vmul.f32 %v4301, %v4945
        %v5094 = vmul.f32 %v4302, %v4945
        %v5095 = vmul.f32 %v4303, %v4945
        %v5096 = vmul.f32 %v4304, %v4945
        %v5097 = vmul.f32 %v4305, %v4950
        %v5098 = vmul.f32 %v4306, %v4950
        %v5099 = vmul.f32 %v4307, %v4950
        %v5100 = vmul.f32 %v4308, %v4950
        %v5101 = vmul.f32 %v4309, %v4950
        %v5102 = vmul.f32 %v4310, %v4950
        %v5103 = vmul.f32 %v4311, %v4950
        %v5104 = vmul.f32 %v4312, %v4955
        %v5105 = vmul.f32 %v4313, %v4955
        %v5106 = vmul.f32 %v4314, %v4955
        %v5107 = vmul.f32 %v4315, %v4955
        %v5108 = vmul.f32 %v4316, %v4955
        %v5109 = vmul.f32 %v4317, %v4955
        %v5110 = vmul.f32 %v4318, %v4955
        %v5111 = vmul.f32 %v4319, %v4960
        %v5112 = vmul.f32 %v4320, %v4960
        %v5113 = vmul.f32 %v4321, %v4960
        %v5114 = vmul.f32 %v4322, %v4960
        %v5115 = vmul.f32 %v4323, %v4960
        %v5116 = vmul.f32 %v4324, %v4960
        %v5117 = vmul.f32 %v4325, %v4960
        %v5118 = vmul.f32 %v4326, %v4965
        %v5119 = vmul.f32 %v4327, %v4965
        %v5120 = vmul.f32 %v4328, %v4965
        %v5121 = vmul.f32 %v4329, %v4965
        %v5122 = vmul.f32 %v4330, %v4965
        %v5123 = vmul.f32 %v4331, %v4965
        %v5124 = vmul.f32 %v4332, %v4965
        %v5125 = vmul.f32 %v4333, %v4970
        %v5126 = vmul.f32 %v4334, %v4970
        %v5127 = vmul.f32 %v4335, %v4970
        %v5128 = vmul.f32 %v4336, %v4970
        %v5129 = vmul.f32 %v4337, %v4970
        %v5130 = vmul.f32 %v4338, %v4970
        %v5131 = vmul.f32 %v4339, %v4970
        %v5132 = vmul.f32 %v4340, %v4975
        %v5133 = vmul.f32 %v4341, %v4975
        %v5134 = vmul.f32 %v4342, %v4975
        %v5135 = vmul.f32 %v4343, %v4975
        %v5136 = vmul.f32 %v4344, %v4975
        %v5137 = vmul.f32 %v4345, %v4975
        %v5138 = vmul.f32 %v4346, %v4975
        %v5139 = vmul.f32 %v4347, %v4980
        %v5140 = vmul.f32 %v4348, %v4980
        %v5141 = vmul.f32 %v4349, %v4980
        %v5142 = vmul.f32 %v4350, %v4980
        %v5143 = vmul.f32 %v4351, %v4980
        %v5144 = vmul.f32 %v4352, %v4980
        %v5145 = vmul.f32 %v4353, %v4980
        %v5146 = vmul.f32 %v4354, %v4985
        %v5147 = vmul.f32 %v4355, %v4985
        %v5148 = vmul.f32 %v4356, %v4985
        %v5149 = vmul.f32 %v4357, %v4985
        %v5150 = vmul.f32 %v4358, %v4985
        %v5151 = vmul.f32 %v4359, %v4985
        %v5152 = vmul.f32 %v4360, %v4985
        %v5153 = vmul.f32 %v4361, %v4990
        %v5154 = vmul.f32 %v4362, %v4990
        %v5155 = vmul.f32 %v4363, %v4990
        %v5156 = vmul.f32 %v4364, %v4990
        %v5157 = vmul.f32 %v4365, %v4990
        %v5158 = vmul.f32 %v4366, %v4990
        %v5159 = vmul.f32 %v4367, %v4990
        %5161 = vset.pattern.permute.xlu0 1
        %5162 = vperm.xlu0 %5161, %v4776
        %v5163 = vpop.permute.xlu0 %5162
        %5166 = vset.pattern.permute.xlu0 1
        %5167 = vperm.xlu0 %5166, %v4777
        %v5168 = vpop.permute.xlu0 %5167
        %5171 = vset.pattern.permute.xlu0 1
        %5172 = vperm.xlu0 %5171, %v4778
        %v5173 = vpop.permute.xlu0 %5172
        %5176 = vset.pattern.permute.xlu0 1
        %5177 = vperm.xlu0 %5176, %v4779
        %v5178 = vpop.permute.xlu0 %5177
        %5181 = vset.pattern.permute.xlu0 1
        %5182 = vperm.xlu0 %5181, %v4780
        %v5183 = vpop.permute.xlu0 %5182
        %5186 = vset.pattern.permute.xlu0 1
        %5187 = vperm.xlu0 %5186, %v4781
        %v5188 = vpop.permute.xlu0 %5187
        %5191 = vset.pattern.permute.xlu0 1
        %5192 = vperm.xlu0 %5191, %v4782
        %v5193 = vpop.permute.xlu0 %5192
        %5196 = vset.pattern.permute.xlu0 1
        %5197 = vperm.xlu0 %5196, %v4783
        %v5198 = vpop.permute.xlu0 %5197
        %5201 = vset.pattern.permute.xlu0 1
        %5202 = vperm.xlu0 %5201, %v4784
        %v5203 = vpop.permute.xlu0 %5202
        %5206 = vset.pattern.permute.xlu0 1
        %5207 = vperm.xlu0 %5206, %v4785
        %v5208 = vpop.permute.xlu0 %5207
        %5211 = vset.pattern.permute.xlu0 1
        %5212 = vperm.xlu0 %5211, %v4786
        %v5213 = vpop.permute.xlu0 %5212
        %5216 = vset.pattern.permute.xlu0 1
        %5217 = vperm.xlu0 %5216, %v4787
        %v5218 = vpop.permute.xlu0 %5217
        %5221 = vset.pattern.permute.xlu0 1
        %5222 = vperm.xlu0 %5221, %v4788
        %v5223 = vpop.permute.xlu0 %5222
        %5226 = vset.pattern.permute.xlu0 1
        %5227 = vperm.xlu0 %5226, %v4789
        %v5228 = vpop.permute.xlu0 %5227
        %5231 = vset.pattern.permute.xlu0 1
        %5232 = vperm.xlu0 %5231, %v4790
        %v5233 = vpop.permute.xlu0 %5232
        %5236 = vset.pattern.permute.xlu0 1
        %5237 = vperm.xlu0 %5236, %v4791
        %v5238 = vpop.permute.xlu0 %5237
        %5241 = vset.pattern.permute.xlu0 1
        %5242 = vperm.xlu0 %5241, %v4792
        %v5243 = vpop.permute.xlu0 %5242
        %5246 = vset.pattern.permute.xlu0 1
        %5247 = vperm.xlu0 %5246, %v4793
        %v5248 = vpop.permute.xlu0 %5247
        %5251 = vset.pattern.permute.xlu0 1
        %5252 = vperm.xlu0 %5251, %v4794
        %v5253 = vpop.permute.xlu0 %5252
        %5256 = vset.pattern.permute.xlu0 1
        %5257 = vperm.xlu0 %5256, %v4795
        %v5258 = vpop.permute.xlu0 %5257
        %5261 = vset.pattern.permute.xlu0 1
        %5262 = vperm.xlu0 %5261, %v4796
        %v5263 = vpop.permute.xlu0 %5262
        %5266 = vset.pattern.permute.xlu0 1
        %5267 = vperm.xlu0 %5266, %v4797
        %v5268 = vpop.permute.xlu0 %5267
        %5271 = vset.pattern.permute.xlu0 1
        %5272 = vperm.xlu0 %5271, %v4798
        %v5273 = vpop.permute.xlu0 %5272
        %5276 = vset.pattern.permute.xlu0 1
        %5277 = vperm.xlu0 %5276, %v4799
        %v5278 = vpop.permute.xlu0 %5277
        %v5280 = vadd.f32 %v4992, %v5163
        %v5281 = vadd.f32 %v4993, %v5163
        %v5282 = vadd.f32 %v4994, %v5163
        %v5283 = vadd.f32 %v4995, %v5163
        %v5284 = vadd.f32 %v4996, %v5163
        %v5285 = vadd.f32 %v4997, %v5163
        %v5286 = vadd.f32 %v4998, %v5163
        %v5287 = vadd.f32 %v4999, %v5168
        %v5288 = vadd.f32 %v5000, %v5168
        %v5289 = vadd.f32 %v5001, %v5168
        %v5290 = vadd.f32 %v5002, %v5168
        %v5291 = vadd.f32 %v5003, %v5168
        %v5292 = vadd.f32 %v5004, %v5168
        %v5293 = vadd.f32 %v5005, %v5168
        %v5294 = vadd.f32 %v5006, %v5173
        %v5295 = vadd.f32 %v5007, %v5173
        %v5296 = vadd.f32 %v5008, %v5173
        %v5297 = vadd.f32 %v5009, %v5173
        %v5298 = vadd.f32 %v5010, %v5173
        %v5299 = vadd.f32 %v5011, %v5173
        %v5300 = vadd.f32 %v5012, %v5173
        %v5301 = vadd.f32 %v5013, %v5178
        %v5302 = vadd.f32 %v5014, %v5178
        %v5303 = vadd.f32 %v5015, %v5178
        %v5304 = vadd.f32 %v5016, %v5178
        %v5305 = vadd.f32 %v5017, %v5178
        %v5306 = vadd.f32 %v5018, %v5178
        %v5307 = vadd.f32 %v5019, %v5178
        %v5308 = vadd.f32 %v5020, %v5183
        %v5309 = vadd.f32 %v5021, %v5183
        %v5310 = vadd.f32 %v5022, %v5183
        %v5311 = vadd.f32 %v5023, %v5183
        %v5312 = vadd.f32 %v5024, %v5183
        %v5313 = vadd.f32 %v5025, %v5183
        %v5314 = vadd.f32 %v5026, %v5183
        %v5315 = vadd.f32 %v5027, %v5188
        %v5316 = vadd.f32 %v5028, %v5188
        %v5317 = vadd.f32 %v5029, %v5188
        %v5318 = vadd.f32 %v5030, %v5188
        %v5319 = vadd.f32 %v5031, %v5188
        %v5320 = vadd.f32 %v5032, %v5188
        %v5321 = vadd.f32 %v5033, %v5188
        %v5322 = vadd.f32 %v5034, %v5193
        %v5323 = vadd.f32 %v5035, %v5193
        %v5324 = vadd.f32 %v5036, %v5193
        %v5325 = vadd.f32 %v5037, %v5193
        %v5326 = vadd.f32 %v5038, %v5193
        %v5327 = vadd.f32 %v5039, %v5193
        %v5328 = vadd.f32 %v5040, %v5193
        %v5329 = vadd.f32 %v5041, %v5198
        %v5330 = vadd.f32 %v5042, %v5198
        %v5331 = vadd.f32 %v5043, %v5198
        %v5332 = vadd.f32 %v5044, %v5198
        %v5333 = vadd.f32 %v5045, %v5198
        %v5334 = vadd.f32 %v5046, %v5198
        %v5335 = vadd.f32 %v5047, %v5198
        %v5336 = vadd.f32 %v5048, %v5203
        %v5337 = vadd.f32 %v5049, %v5203
        %v5338 = vadd.f32 %v5050, %v5203
        %v5339 = vadd.f32 %v5051, %v5203
        %v5340 = vadd.f32 %v5052, %v5203
        %v5341 = vadd.f32 %v5053, %v5203
        %v5342 = vadd.f32 %v5054, %v5203
        %v5343 = vadd.f32 %v5055, %v5208
        %v5344 = vadd.f32 %v5056, %v5208
        %v5345 = vadd.f32 %v5057, %v5208
        %v5346 = vadd.f32 %v5058, %v5208
        %v5347 = vadd.f32 %v5059, %v5208
        %v5348 = vadd.f32 %v5060, %v5208
        %v5349 = vadd.f32 %v5061, %v5208
        %v5350 = vadd.f32 %v5062, %v5213
        %v5351 = vadd.f32 %v5063, %v5213
        %v5352 = vadd.f32 %v5064, %v5213
        %v5353 = vadd.f32 %v5065, %v5213
        %v5354 = vadd.f32 %v5066, %v5213
        %v5355 = vadd.f32 %v5067, %v5213
        %v5356 = vadd.f32 %v5068, %v5213
        %v5357 = vadd.f32 %v5069, %v5218
        %v5358 = vadd.f32 %v5070, %v5218
        %v5359 = vadd.f32 %v5071, %v5218
        %v5360 = vadd.f32 %v5072, %v5218
        %v5361 = vadd.f32 %v5073, %v5218
        %v5362 = vadd.f32 %v5074, %v5218
        %v5363 = vadd.f32 %v5075, %v5218
        %v5364 = vadd.f32 %v5076, %v5223
        %v5365 = vadd.f32 %v5077, %v5223
        %v5366 = vadd.f32 %v5078, %v5223
        %v5367 = vadd.f32 %v5079, %v5223
        %v5368 = vadd.f32 %v5080, %v5223
        %v5369 = vadd.f32 %v5081, %v5223
        %v5370 = vadd.f32 %v5082, %v5223
        %v5371 = vadd.f32 %v5083, %v5228
        %v5372 = vadd.f32 %v5084, %v5228
        %v5373 = vadd.f32 %v5085, %v5228
        %v5374 = vadd.f32 %v5086, %v5228
        %v5375 = vadd.f32 %v5087, %v5228
        %v5376 = vadd.f32 %v5088, %v5228
        %v5377 = vadd.f32 %v5089, %v5228
        %v5378 = vadd.f32 %v5090, %v5233
        %v5379 = vadd.f32 %v5091, %v5233
        %v5380 = vadd.f32 %v5092, %v5233
        %v5381 = vadd.f32 %v5093, %v5233
        %v5382 = vadd.f32 %v5094, %v5233
        %v5383 = vadd.f32 %v5095, %v5233
        %v5384 = vadd.f32 %v5096, %v5233
        %v5385 = vadd.f32 %v5097, %v5238
        %v5386 = vadd.f32 %v5098, %v5238
        %v5387 = vadd.f32 %v5099, %v5238
        %v5388 = vadd.f32 %v5100, %v5238
        %v5389 = vadd.f32 %v5101, %v5238
        %v5390 = vadd.f32 %v5102, %v5238
        %v5391 = vadd.f32 %v5103, %v5238
        %v5392 = vadd.f32 %v5104, %v5243
        %v5393 = vadd.f32 %v5105, %v5243
        %v5394 = vadd.f32 %v5106, %v5243
        %v5395 = vadd.f32 %v5107, %v5243
        %v5396 = vadd.f32 %v5108, %v5243
        %v5397 = vadd.f32 %v5109, %v5243
        %v5398 = vadd.f32 %v5110, %v5243
        %v5399 = vadd.f32 %v5111, %v5248
        %v5400 = vadd.f32 %v5112, %v5248
        %v5401 = vadd.f32 %v5113, %v5248
        %v5402 = vadd.f32 %v5114, %v5248
        %v5403 = vadd.f32 %v5115, %v5248
        %v5404 = vadd.f32 %v5116, %v5248
        %v5405 = vadd.f32 %v5117, %v5248
        %v5406 = vadd.f32 %v5118, %v5253
        %v5407 = vadd.f32 %v5119, %v5253
        %v5408 = vadd.f32 %v5120, %v5253
        %v5409 = vadd.f32 %v5121, %v5253
        %v5410 = vadd.f32 %v5122, %v5253
        %v5411 = vadd.f32 %v5123, %v5253
        %v5412 = vadd.f32 %v5124, %v5253
        %v5413 = vadd.f32 %v5125, %v5258
        %v5414 = vadd.f32 %v5126, %v5258
        %v5415 = vadd.f32 %v5127, %v5258
        %v5416 = vadd.f32 %v5128, %v5258
        %v5417 = vadd.f32 %v5129, %v5258
        %v5418 = vadd.f32 %v5130, %v5258
        %v5419 = vadd.f32 %v5131, %v5258
        %v5420 = vadd.f32 %v5132, %v5263
        %v5421 = vadd.f32 %v5133, %v5263
        %v5422 = vadd.f32 %v5134, %v5263
        %v5423 = vadd.f32 %v5135, %v5263
        %v5424 = vadd.f32 %v5136, %v5263
        %v5425 = vadd.f32 %v5137, %v5263
        %v5426 = vadd.f32 %v5138, %v5263
        %v5427 = vadd.f32 %v5139, %v5268
        %v5428 = vadd.f32 %v5140, %v5268
        %v5429 = vadd.f32 %v5141, %v5268
        %v5430 = vadd.f32 %v5142, %v5268
        %v5431 = vadd.f32 %v5143, %v5268
        %v5432 = vadd.f32 %v5144, %v5268
        %v5433 = vadd.f32 %v5145, %v5268
        %v5434 = vadd.f32 %v5146, %v5273
        %v5435 = vadd.f32 %v5147, %v5273
        %v5436 = vadd.f32 %v5148, %v5273
        %v5437 = vadd.f32 %v5149, %v5273
        %v5438 = vadd.f32 %v5150, %v5273
        %v5439 = vadd.f32 %v5151, %v5273
        %v5440 = vadd.f32 %v5152, %v5273
        %v5441 = vadd.f32 %v5153, %v5278
        %v5442 = vadd.f32 %v5154, %v5278
        %v5443 = vadd.f32 %v5155, %v5278
        %v5444 = vadd.f32 %v5156, %v5278
        %v5445 = vadd.f32 %v5157, %v5278
        %v5446 = vadd.f32 %v5158, %v5278
        %v5447 = vadd.f32 %v5159, %v5278
        %v5448 = vmax.f32 %v5280, 0.0
        %v5449 = vmax.f32 %v5281, 0.0
        %v5450 = vmax.f32 %v5282, 0.0
        %v5451 = vmax.f32 %v5283, 0.0
        %v5452 = vmax.f32 %v5284, 0.0
        %v5453 = vmax.f32 %v5285, 0.0
        %v5454 = vmax.f32 %v5286, 0.0
        %v5455 = vmax.f32 %v5287, 0.0
        %v5456 = vmax.f32 %v5288, 0.0
        %v5457 = vmax.f32 %v5289, 0.0
        %v5458 = vmax.f32 %v5290, 0.0
        %v5459 = vmax.f32 %v5291, 0.0
        %v5460 = vmax.f32 %v5292, 0.0
        %v5461 = vmax.f32 %v5293, 0.0
        %v5462 = vmax.f32 %v5294, 0.0
        %v5463 = vmax.f32 %v5295, 0.0
        %v5464 = vmax.f32 %v5296, 0.0
        %v5465 = vmax.f32 %v5297, 0.0
        %v5466 = vmax.f32 %v5298, 0.0
        %v5467 = vmax.f32 %v5299, 0.0
        %v5468 = vmax.f32 %v5300, 0.0
        %v5469 = vmax.f32 %v5301, 0.0
        %v5470 = vmax.f32 %v5302, 0.0
        %v5471 = vmax.f32 %v5303, 0.0
        %v5472 = vmax.f32 %v5304, 0.0
        %v5473 = vmax.f32 %v5305, 0.0
        %v5474 = vmax.f32 %v5306, 0.0
        %v5475 = vmax.f32 %v5307, 0.0
        %v5476 = vmax.f32 %v5308, 0.0
        %v5477 = vmax.f32 %v5309, 0.0
        %v5478 = vmax.f32 %v5310, 0.0
        %v5479 = vmax.f32 %v5311, 0.0
        %v5480 = vmax.f32 %v5312, 0.0
        %v5481 = vmax.f32 %v5313, 0.0
        %v5482 = vmax.f32 %v5314, 0.0
        %v5483 = vmax.f32 %v5315, 0.0
        %v5484 = vmax.f32 %v5316, 0.0
        %v5485 = vmax.f32 %v5317, 0.0
        %v5486 = vmax.f32 %v5318, 0.0
        %v5487 = vmax.f32 %v5319, 0.0
        %v5488 = vmax.f32 %v5320, 0.0
        %v5489 = vmax.f32 %v5321, 0.0
        %v5490 = vmax.f32 %v5322, 0.0
        %v5491 = vmax.f32 %v5323, 0.0
        %v5492 = vmax.f32 %v5324, 0.0
        %v5493 = vmax.f32 %v5325, 0.0
        %v5494 = vmax.f32 %v5326, 0.0
        %v5495 = vmax.f32 %v5327, 0.0
        %v5496 = vmax.f32 %v5328, 0.0
        %v5497 = vmax.f32 %v5329, 0.0
        %v5498 = vmax.f32 %v5330, 0.0
        %v5499 = vmax.f32 %v5331, 0.0
        %v5500 = vmax.f32 %v5332, 0.0
        %v5501 = vmax.f32 %v5333, 0.0
        %v5502 = vmax.f32 %v5334, 0.0
        %v5503 = vmax.f32 %v5335, 0.0
        %v5504 = vmax.f32 %v5336, 0.0
        %v5505 = vmax.f32 %v5337, 0.0
        %v5506 = vmax.f32 %v5338, 0.0
        %v5507 = vmax.f32 %v5339, 0.0
        %v5508 = vmax.f32 %v5340, 0.0
        %v5509 = vmax.f32 %v5341, 0.0
        %v5510 = vmax.f32 %v5342, 0.0
        %v5511 = vmax.f32 %v5343, 0.0
        %v5512 = vmax.f32 %v5344, 0.0
        %v5513 = vmax.f32 %v5345, 0.0
        %v5514 = vmax.f32 %v5346, 0.0
        %v5515 = vmax.f32 %v5347, 0.0
        %v5516 = vmax.f32 %v5348, 0.0
        %v5517 = vmax.f32 %v5349, 0.0
        %v5518 = vmax.f32 %v5350, 0.0
        %v5519 = vmax.f32 %v5351, 0.0
        %v5520 = vmax.f32 %v5352, 0.0
        %v5521 = vmax.f32 %v5353, 0.0
        %v5522 = vmax.f32 %v5354, 0.0
        %v5523 = vmax.f32 %v5355, 0.0
        %v5524 = vmax.f32 %v5356, 0.0
        %v5525 = vmax.f32 %v5357, 0.0
        %v5526 = vmax.f32 %v5358, 0.0
        %v5527 = vmax.f32 %v5359, 0.0
        %v5528 = vmax.f32 %v5360, 0.0
        %v5529 = vmax.f32 %v5361, 0.0
        %v5530 = vmax.f32 %v5362, 0.0
        %v5531 = vmax.f32 %v5363, 0.0
        %v5532 = vmax.f32 %v5364, 0.0
        %v5533 = vmax.f32 %v5365, 0.0
        %v5534 = vmax.f32 %v5366, 0.0
        %v5535 = vmax.f32 %v5367, 0.0
        %v5536 = vmax.f32 %v5368, 0.0
        %v5537 = vmax.f32 %v5369, 0.0
        %v5538 = vmax.f32 %v5370, 0.0
        %v5539 = vmax.f32 %v5371, 0.0
        %v5540 = vmax.f32 %v5372, 0.0
        %v5541 = vmax.f32 %v5373, 0.0
        %v5542 = vmax.f32 %v5374, 0.0
        %v5543 = vmax.f32 %v5375, 0.0
        %v5544 = vmax.f32 %v5376, 0.0
        %v5545 = vmax.f32 %v5377, 0.0
        %v5546 = vmax.f32 %v5378, 0.0
        %v5547 = vmax.f32 %v5379, 0.0
        %v5548 = vmax.f32 %v5380, 0.0
        %v5549 = vmax.f32 %v5381, 0.0
        %v5550 = vmax.f32 %v5382, 0.0
        %v5551 = vmax.f32 %v5383, 0.0
        %v5552 = vmax.f32 %v5384, 0.0
        %v5553 = vmax.f32 %v5385, 0.0
        %v5554 = vmax.f32 %v5386, 0.0
        %v5555 = vmax.f32 %v5387, 0.0
        %v5556 = vmax.f32 %v5388, 0.0
        %v5557 = vmax.f32 %v5389, 0.0
        %v5558 = vmax.f32 %v5390, 0.0
        %v5559 = vmax.f32 %v5391, 0.0
        %v5560 = vmax.f32 %v5392, 0.0
        %v5561 = vmax.f32 %v5393, 0.0
        %v5562 = vmax.f32 %v5394, 0.0
        %v5563 = vmax.f32 %v5395, 0.0
        %v5564 = vmax.f32 %v5396, 0.0
        %v5565 = vmax.f32 %v5397, 0.0
        %v5566 = vmax.f32 %v5398, 0.0
        %v5567 = vmax.f32 %v5399, 0.0
        %v5568 = vmax.f32 %v5400, 0.0
        %v5569 = vmax.f32 %v5401, 0.0
        %v5570 = vmax.f32 %v5402, 0.0
        %v5571 = vmax.f32 %v5403, 0.0
        %v5572 = vmax.f32 %v5404, 0.0
        %v5573 = vmax.f32 %v5405, 0.0
        %v5574 = vmax.f32 %v5406, 0.0
        %v5575 = vmax.f32 %v5407, 0.0
        %v5576 = vmax.f32 %v5408, 0.0
        %v5577 = vmax.f32 %v5409, 0.0
        %v5578 = vmax.f32 %v5410, 0.0
        %v5579 = vmax.f32 %v5411, 0.0
        %v5580 = vmax.f32 %v5412, 0.0
        %v5581 = vmax.f32 %v5413, 0.0
        %v5582 = vmax.f32 %v5414, 0.0
        %v5583 = vmax.f32 %v5415, 0.0
        %v5584 = vmax.f32 %v5416, 0.0
        %v5585 = vmax.f32 %v5417, 0.0
        %v5586 = vmax.f32 %v5418, 0.0
        %v5587 = vmax.f32 %v5419, 0.0
        %v5588 = vmax.f32 %v5420, 0.0
        %v5589 = vmax.f32 %v5421, 0.0
        %v5590 = vmax.f32 %v5422, 0.0
        %v5591 = vmax.f32 %v5423, 0.0
        %v5592 = vmax.f32 %v5424, 0.0
        %v5593 = vmax.f32 %v5425, 0.0
        %v5594 = vmax.f32 %v5426, 0.0
        %v5595 = vmax.f32 %v5427, 0.0
        %v5596 = vmax.f32 %v5428, 0.0
        %v5597 = vmax.f32 %v5429, 0.0
        %v5598 = vmax.f32 %v5430, 0.0
        %v5599 = vmax.f32 %v5431, 0.0
        %v5600 = vmax.f32 %v5432, 0.0
        %v5601 = vmax.f32 %v5433, 0.0
        %v5602 = vmax.f32 %v5434, 0.0
        %v5603 = vmax.f32 %v5435, 0.0
        %v5604 = vmax.f32 %v5436, 0.0
        %v5605 = vmax.f32 %v5437, 0.0
        %v5606 = vmax.f32 %v5438, 0.0
        %v5607 = vmax.f32 %v5439, 0.0
        %v5608 = vmax.f32 %v5440, 0.0
        %v5609 = vmax.f32 %v5441, 0.0
        %v5610 = vmax.f32 %v5442, 0.0
        %v5611 = vmax.f32 %v5443, 0.0
        %v5612 = vmax.f32 %v5444, 0.0
        %v5613 = vmax.f32 %v5445, 0.0
        %v5614 = vmax.f32 %v5446, 0.0
        %v5615 = vmax.f32 %v5447, 0.0
        %5616 = vst [vmem:[%s4] sm:$0xff] %v5448
        %5617 = vst [vmem:[%s4 + $0x8] sm:$0xff] %v5449
        %5618 = vst [vmem:[%s4 + $0x10] sm:$0xff] %v5450
        %5619 = vst [vmem:[%s4 + $0x18] sm:$0xff] %v5451
        %5620 = vst [vmem:[%s4 + $0x20] sm:$0xff] %v5452
        %5621 = vst [vmem:[%s4 + $0x28] sm:$0xff] %v5453
        %5622 = vst.msk [vmem:[%s4 + $0x30] sm:$0xff] %vm418, %v5454
        %5623 = vst [vmem:[%s4 + $0x38] sm:$0xff] %v5455
        %5624 = vst [vmem:[%s4 + $0x40] sm:$0xff] %v5456
        %5625 = vst [vmem:[%s4 + $0x48] sm:$0xff] %v5457
        %5626 = vst [vmem:[%s4 + $0x50] sm:$0xff] %v5458
        %5627 = vst [vmem:[%s4 + $0x58] sm:$0xff] %v5459
        %5628 = vst [vmem:[%s4 + $0x60] sm:$0xff] %v5460
        %5629 = vst.msk [vmem:[%s4 + $0x68] sm:$0xff] %vm418, %v5461
        %5630 = vst [vmem:[%s4 + $0x70] sm:$0xff] %v5462
        %5631 = vst [vmem:[%s4 + $0x78] sm:$0xff] %v5463
        %5632 = vst [vmem:[%s4 + $0x80] sm:$0xff] %v5464
        %5633 = vst [vmem:[%s4 + $0x88] sm:$0xff] %v5465
        %5634 = vst [vmem:[%s4 + $0x90] sm:$0xff] %v5466
        %5635 = vst [vmem:[%s4 + $0x98] sm:$0xff] %v5467
        %5636 = vst.msk [vmem:[%s4 + $0xa0] sm:$0xff] %vm418, %v5468
        %5637 = vst [vmem:[%s4 + $0xa8] sm:$0xff] %v5469
        %5638 = vst [vmem:[%s4 + $0xb0] sm:$0xff] %v5470
        %5639 = vst [vmem:[%s4 + $0xb8] sm:$0xff] %v5471
        %5640 = vst [vmem:[%s4 + $0xc0] sm:$0xff] %v5472
        %5641 = vst [vmem:[%s4 + $0xc8] sm:$0xff] %v5473
        %5642 = vst [vmem:[%s4 + $0xd0] sm:$0xff] %v5474
        %5643 = vst.msk [vmem:[%s4 + $0xd8] sm:$0xff] %vm418, %v5475
        %5644 = vst [vmem:[%s4 + $0xe0] sm:$0xff] %v5476
        %5645 = vst [vmem:[%s4 + $0xe8] sm:$0xff] %v5477
        %5646 = vst [vmem:[%s4 + $0xf0] sm:$0xff] %v5478
        %5647 = vst [vmem:[%s4 + $0xf8] sm:$0xff] %v5479
        %5648 = vst [vmem:[%s4 + $0x100] sm:$0xff] %v5480
        %5649 = vst [vmem:[%s4 + $0x108] sm:$0xff] %v5481
        %5650 = vst.msk [vmem:[%s4 + $0x110] sm:$0xff] %vm418, %v5482
        %5651 = vst [vmem:[%s4 + $0x118] sm:$0xff] %v5483
        %5652 = vst [vmem:[%s4 + $0x120] sm:$0xff] %v5484
        %5653 = vst [vmem:[%s4 + $0x128] sm:$0xff] %v5485
        %5654 = vst [vmem:[%s4 + $0x130] sm:$0xff] %v5486
        %5655 = vst [vmem:[%s4 + $0x138] sm:$0xff] %v5487
        %5656 = vst [vmem:[%s4 + $0x140] sm:$0xff] %v5488
        %5657 = vst.msk [vmem:[%s4 + $0x148] sm:$0xff] %vm418, %v5489
        %5658 = vst [vmem:[%s4 + $0x150] sm:$0xff] %v5490
        %5659 = vst [vmem:[%s4 + $0x158] sm:$0xff] %v5491
        %5660 = vst [vmem:[%s4 + $0x160] sm:$0xff] %v5492
        %5661 = vst [vmem:[%s4 + $0x168] sm:$0xff] %v5493
        %5662 = vst [vmem:[%s4 + $0x170] sm:$0xff] %v5494
        %5663 = vst [vmem:[%s4 + $0x178] sm:$0xff] %v5495
        %5664 = vst.msk [vmem:[%s4 + $0x180] sm:$0xff] %vm418, %v5496
        %5665 = vst [vmem:[%s4 + $0x188] sm:$0xff] %v5497
        %5666 = vst [vmem:[%s4 + $0x190] sm:$0xff] %v5498
        %5667 = vst [vmem:[%s4 + $0x198] sm:$0xff] %v5499
        %5668 = vst [vmem:[%s4 + $0x1a0] sm:$0xff] %v5500
        %5669 = vst [vmem:[%s4 + $0x1a8] sm:$0xff] %v5501
        %5670 = vst [vmem:[%s4 + $0x1b0] sm:$0xff] %v5502
        %5671 = vst.msk [vmem:[%s4 + $0x1b8] sm:$0xff] %vm418, %v5503
        %5672 = vst [vmem:[%s4 + $0x1c0] sm:$0xff] %v5504
        %5673 = vst [vmem:[%s4 + $0x1c8] sm:$0xff] %v5505
        %5674 = vst [vmem:[%s4 + $0x1d0] sm:$0xff] %v5506
        %5675 = vst [vmem:[%s4 + $0x1d8] sm:$0xff] %v5507
        %5676 = vst [vmem:[%s4 + $0x1e0] sm:$0xff] %v5508
        %5677 = vst [vmem:[%s4 + $0x1e8] sm:$0xff] %v5509
        %5678 = vst.msk [vmem:[%s4 + $0x1f0] sm:$0xff] %vm418, %v5510
        %5679 = vst [vmem:[%s4 + $0x1f8] sm:$0xff] %v5511
        %5680 = vst [vmem:[%s4 + $0x200] sm:$0xff] %v5512
        %5681 = vst [vmem:[%s4 + $0x208] sm:$0xff] %v5513
        %5682 = vst [vmem:[%s4 + $0x210] sm:$0xff] %v5514
        %5683 = vst [vmem:[%s4 + $0x218] sm:$0xff] %v5515
        %5684 = vst [vmem:[%s4 + $0x220] sm:$0xff] %v5516
        %5685 = vst.msk [vmem:[%s4 + $0x228] sm:$0xff] %vm418, %v5517
        %5686 = vst [vmem:[%s4 + $0x230] sm:$0xff] %v5518
        %5687 = vst [vmem:[%s4 + $0x238] sm:$0xff] %v5519
        %5688 = vst [vmem:[%s4 + $0x240] sm:$0xff] %v5520
        %5689 = vst [vmem:[%s4 + $0x248] sm:$0xff] %v5521
        %5690 = vst [vmem:[%s4 + $0x250] sm:$0xff] %v5522
        %5691 = vst [vmem:[%s4 + $0x258] sm:$0xff] %v5523
        %5692 = vst.msk [vmem:[%s4 + $0x260] sm:$0xff] %vm418, %v5524
        %5693 = vst [vmem:[%s4 + $0x268] sm:$0xff] %v5525
        %5694 = vst [vmem:[%s4 + $0x270] sm:$0xff] %v5526
        %5695 = vst [vmem:[%s4 + $0x278] sm:$0xff] %v5527
        %5696 = vst [vmem:[%s4 + $0x280] sm:$0xff] %v5528
        %5697 = vst [vmem:[%s4 + $0x288] sm:$0xff] %v5529
        %5698 = vst [vmem:[%s4 + $0x290] sm:$0xff] %v5530
        %5699 = vst.msk [vmem:[%s4 + $0x298] sm:$0xff] %vm418, %v5531
        %5700 = vst [vmem:[%s4 + $0x2a0] sm:$0xff] %v5532
        %5701 = vst [vmem:[%s4 + $0x2a8] sm:$0xff] %v5533
        %5702 = vst [vmem:[%s4 + $0x2b0] sm:$0xff] %v5534
        %5703 = vst [vmem:[%s4 + $0x2b8] sm:$0xff] %v5535
        %5704 = vst [vmem:[%s4 + $0x2c0] sm:$0xff] %v5536
        %5705 = vst [vmem:[%s4 + $0x2c8] sm:$0xff] %v5537
        %5706 = vst.msk [vmem:[%s4 + $0x2d0] sm:$0xff] %vm418, %v5538
        %5707 = vst [vmem:[%s4 + $0x2d8] sm:$0xff] %v5539
        %5708 = vst [vmem:[%s4 + $0x2e0] sm:$0xff] %v5540
        %5709 = vst [vmem:[%s4 + $0x2e8] sm:$0xff] %v5541
        %5710 = vst [vmem:[%s4 + $0x2f0] sm:$0xff] %v5542
        %5711 = vst [vmem:[%s4 + $0x2f8] sm:$0xff] %v5543
        %5712 = vst [vmem:[%s4 + $0x300] sm:$0xff] %v5544
        %5713 = vst.msk [vmem:[%s4 + $0x308] sm:$0xff] %vm418, %v5545
        %5714 = vst [vmem:[%s4 + $0x310] sm:$0xff] %v5546
        %5715 = vst [vmem:[%s4 + $0x318] sm:$0xff] %v5547
        %5716 = vst [vmem:[%s4 + $0x320] sm:$0xff] %v5548
        %5717 = vst [vmem:[%s4 + $0x328] sm:$0xff] %v5549
        %5718 = vst [vmem:[%s4 + $0x330] sm:$0xff] %v5550
        %5719 = vst [vmem:[%s4 + $0x338] sm:$0xff] %v5551
        %5720 = vst.msk [vmem:[%s4 + $0x340] sm:$0xff] %vm418, %v5552
        %5721 = vst [vmem:[%s4 + $0x348] sm:$0xff] %v5553
        %5722 = vst [vmem:[%s4 + $0x350] sm:$0xff] %v5554
        %5723 = vst [vmem:[%s4 + $0x358] sm:$0xff] %v5555
        %5724 = vst [vmem:[%s4 + $0x360] sm:$0xff] %v5556
        %5725 = vst [vmem:[%s4 + $0x368] sm:$0xff] %v5557
        %5726 = vst [vmem:[%s4 + $0x370] sm:$0xff] %v5558
        %5727 = vst.msk [vmem:[%s4 + $0x378] sm:$0xff] %vm418, %v5559
        %5728 = vst [vmem:[%s4 + $0x380] sm:$0xff] %v5560
        %5729 = vst [vmem:[%s4 + $0x388] sm:$0xff] %v5561
        %5730 = vst [vmem:[%s4 + $0x390] sm:$0xff] %v5562
        %5731 = vst [vmem:[%s4 + $0x398] sm:$0xff] %v5563
        %5732 = vst [vmem:[%s4 + $0x3a0] sm:$0xff] %v5564
        %5733 = vst [vmem:[%s4 + $0x3a8] sm:$0xff] %v5565
        %5734 = vst.msk [vmem:[%s4 + $0x3b0] sm:$0xff] %vm418, %v5566
        %5735 = vst [vmem:[%s4 + $0x3b8] sm:$0xff] %v5567
        %5736 = vst [vmem:[%s4 + $0x3c0] sm:$0xff] %v5568
        %5737 = vst [vmem:[%s4 + $0x3c8] sm:$0xff] %v5569
        %5738 = vst [vmem:[%s4 + $0x3d0] sm:$0xff] %v5570
        %5739 = vst [vmem:[%s4 + $0x3d8] sm:$0xff] %v5571
        %5740 = vst [vmem:[%s4 + $0x3e0] sm:$0xff] %v5572
        %5741 = vst.msk [vmem:[%s4 + $0x3e8] sm:$0xff] %vm418, %v5573
        %5742 = vst [vmem:[%s4 + $0x3f0] sm:$0xff] %v5574
        %5743 = vst [vmem:[%s4 + $0x3f8] sm:$0xff] %v5575
        %5744 = vst [vmem:[%s4 + $0x400] sm:$0xff] %v5576
        %5745 = vst [vmem:[%s4 + $0x408] sm:$0xff] %v5577
        %5746 = vst [vmem:[%s4 + $0x410] sm:$0xff] %v5578
        %5747 = vst [vmem:[%s4 + $0x418] sm:$0xff] %v5579
        %5748 = vst.msk [vmem:[%s4 + $0x420] sm:$0xff] %vm418, %v5580
        %5749 = vst [vmem:[%s4 + $0x428] sm:$0xff] %v5581
        %5750 = vst [vmem:[%s4 + $0x430] sm:$0xff] %v5582
        %5751 = vst [vmem:[%s4 + $0x438] sm:$0xff] %v5583
        %5752 = vst [vmem:[%s4 + $0x440] sm:$0xff] %v5584
        %5753 = vst [vmem:[%s4 + $0x448] sm:$0xff] %v5585
        %5754 = vst [vmem:[%s4 + $0x450] sm:$0xff] %v5586
        %5755 = vst.msk [vmem:[%s4 + $0x458] sm:$0xff] %vm418, %v5587
        %5756 = vst [vmem:[%s4 + $0x460] sm:$0xff] %v5588
        %5757 = vst [vmem:[%s4 + $0x468] sm:$0xff] %v5589
        %5758 = vst [vmem:[%s4 + $0x470] sm:$0xff] %v5590
        %5759 = vst [vmem:[%s4 + $0x478] sm:$0xff] %v5591
        %5760 = vst [vmem:[%s4 + $0x480] sm:$0xff] %v5592
        %5761 = vst [vmem:[%s4 + $0x488] sm:$0xff] %v5593
        %5762 = vst.msk [vmem:[%s4 + $0x490] sm:$0xff] %vm418, %v5594
        %5763 = vst [vmem:[%s4 + $0x498] sm:$0xff] %v5595
        %5764 = vst [vmem:[%s4 + $0x4a0] sm:$0xff] %v5596
        %5765 = vst [vmem:[%s4 + $0x4a8] sm:$0xff] %v5597
        %5766 = vst [vmem:[%s4 + $0x4b0] sm:$0xff] %v5598
        %5767 = vst [vmem:[%s4 + $0x4b8] sm:$0xff] %v5599
        %5768 = vst [vmem:[%s4 + $0x4c0] sm:$0xff] %v5600
        %5769 = vst.msk [vmem:[%s4 + $0x4c8] sm:$0xff] %vm418, %v5601
        %5770 = vst [vmem:[%s4 + $0x4d0] sm:$0xff] %v5602
        %5771 = vst [vmem:[%s4 + $0x4d8] sm:$0xff] %v5603
        %5772 = vst [vmem:[%s4 + $0x4e0] sm:$0xff] %v5604
        %5773 = vst [vmem:[%s4 + $0x4e8] sm:$0xff] %v5605
        %5774 = vst [vmem:[%s4 + $0x4f0] sm:$0xff] %v5606
        %5775 = vst [vmem:[%s4 + $0x4f8] sm:$0xff] %v5607
        %5776 = vst.msk [vmem:[%s4 + $0x500] sm:$0xff] %vm418, %v5608
        %5777 = vst [vmem:[%s4 + $0x508] sm:$0xff] %v5609
        %5778 = vst [vmem:[%s4 + $0x510] sm:$0xff] %v5610
        %5779 = vst [vmem:[%s4 + $0x518] sm:$0xff] %v5611
        %5780 = vst [vmem:[%s4 + $0x520] sm:$0xff] %v5612
        %5781 = vst [vmem:[%s4 + $0x528] sm:$0xff] %v5613
        %5782 = vst [vmem:[%s4 + $0x530] sm:$0xff] %v5614
        %5783 = vst.msk [vmem:[%s4 + $0x538] sm:$0xff] %vm418, %v5615
      $region48: #{fused_module.1} parent=35 // pred_fallthru
        _
      // Predicated region
      $region49: #{fused_module.1} parent=35 // pred_check
        %p5784 = pneg %p127
      $region50: #{fused_module.1} parent=35 // pred_check_branch
        %5786 = sbr.rel (%p5784) target = $region52
      $region51: #{fused_module.1} parent=35 // pred_region
        _
      $region52: #{fused_module.1} parent=35 // pred_fallthru
        _
      // Predicated region
      $region53: #{fused_module.1} parent=35 // pred_check
        %p5787 = pneg %p127
      $region54: #{fused_module.1} parent=35 // pred_check_branch
        %5789 = sbr.rel (%p5787) target = $region56
      $region55: #{fused_module.1} parent=35 // pred_region
        _
      $region56: #{fused_module.1} parent=35 // pred_fallthru
        _
    $region36: #{fused_module.1} parent=5 // pred_fallthru
      _
    %p5790 = scmp.le.s32.totalorder 2, %s10
    // Predicated region
    $region57: #{fused_module.1} parent=5 // pred_check
      %p5791 = pneg %p5790
    $region58: #{fused_module.1} parent=5 // pred_check_branch
      %5793 = sbr.rel (%p5791) target = $region60
    $region59: #{fused_module.1} parent=5 // pred_region
      %s5794 = ssub.s32 %s10, 2
    $region60: #{fused_module.1} parent=5 // pred_fallthru
      _
  $region6: #{fused_module.1} parent=0 // loop_footer
    %s14 = sadd.s32 1, %s10
  $region7: #{fused_module.1} parent=0 // loop_footer_branch
    %9 = sbr.rel target = $region3
  $region8: #{fused_module.1} parent=0 // loop_exit
    _

</llo_original>
